<compile_context>
chip_gen: v6e
topology: v6e:2x2x1
jax: 0.10.0
libtpu: 0.0.40
codegen_flags: <defaults>
</compile_context>

<pallas_src>
import functools
import math

import jax
import jax.numpy as jnp
from jax.experimental import pallas as pl
from jax.experimental.pallas import tpu as pltpu


# ----------------------------- Pallas kernel ---------------------------------


def _repvgg_layer_kernel(x_ref, w_ref, b_ref, m_ref, o_ref, *, H, Wp, Cin, K):
    """One re-parameterized RepVGG block (3x3 conv, stride 1, pad 1 + bias + ReLU).

    Operates on one image's zero-halo padded slab and one Cout tile.

    x_ref: (1, Cin, S)       padded input slab (S = Hp*Wp; data at rows 1..H, cols 1..W), bf16
    w_ref: (Ct, K*K*Cin)     fused conv weight, columns ordered (di, dj, cin), bf16
    b_ref: (Ct, 1)           fused bias, f32
    m_ref: (1, H*Wp)         1.0 on data columns, 0.0 on halo columns, f32
    o_ref: (1, Ct, S)        output slab in the same padded layout, bf16
    """
    L = H * Wp
    S = o_ref.shape[2]
    ct = o_ref.shape[1]

    # Nine accumulated MXU dots; each tap is a flat lane shift of the padded slab by
    # di*Wp + dj (no (9*Cin, L) im2col temporary is ever materialized).
    acc = None
    for t in range(K * K):
        di, dj = divmod(t, K)
        off = di * Wp + dj
        xs = x_ref[0, :, off:off + L]                  # (Cin, L)  lane-shifted tap view
        wt = w_ref[:, t * Cin:(t + 1) * Cin]           # (Ct, Cin)
        d = jax.lax.dot_general(
            wt, xs,
            dimension_numbers=(((1,), (0,)), ((), ())),
            preferred_element_type=jnp.float32)        # (Ct, L) f32
        acc = d if acc is None else acc + d

    # f32 epilogue: bias + ReLU, then zero every halo column so the next layer can read
    # this slab directly as its padded input.
    y = jnp.maximum(acc + b_ref[...], 0.0) * m_ref[...]

    o_ref[0, :, 0:Wp + 1] = jnp.zeros((ct, Wp + 1), o_ref.dtype)          # top halo row
    o_ref[0, :, Wp + 1:Wp + 1 + L] = y.astype(o_ref.dtype)                # data rows
    o_ref[0, :, Wp + 1 + L:S] = jnp.zeros((ct, S - (Wp + 1 + L)), o_ref.dtype)  # bottom halo


# ------------------------------ layer wrapper ---------------------------------


def _pick_row_pitch(H, W):
    """Padded row pitch Wp >= W+2, preferring H*Wp % 128 == 0 (lane-dense dot/store width)."""
    base = W + 2
    step = 128 // math.gcd(H, 128)
    wp = ((base + step - 1) // step) * step
    if wp > base + 32:                       # don't trash lane occupancy for awkward H
        wp = ((base + 7) // 8) * 8
    return wp


def _pick_cout_tile(cout, cin, S, L, budget_bytes):
    """Largest Cout tile (dividing cout) whose per-grid-step VMEM footprint fits the budget."""
    cands = []
    for t in (cout, 512, 256, 128, 64, 32, 16, 8):
        if t <= cout and cout % t == 0 and t not in cands:
            cands.append(t)
    for t in cands:
        per_step = (
            2 * cin * S * 2          # x slab (double buffered, bf16)
            + 2 * t * 9 * cin * 2    # weight tile (double buffered, bf16)
            + 2 * t * S * 2          # output slab (double buffered, bf16)
            + t * L * 4              # f32 accumulator
            + 2 * cin * L * 2        # lane-shifted tap temporaries
            + 2 * L * 4 + 2 * t * 4  # mask + bias
        )
        if per_step <= budget_bytes:
            return t
    return cands[-1]


def _fused_repvgg_layer(x_slab, w_flat, b_col, mask, *, H, W, Hp, Wp,
                        vmem_budget_bytes=16 << 20):
    """One fused RepVGG layer on padded slabs: (N, Cin, S) bf16 -> (N, Cout, S) bf16."""
    N, Cin, S = x_slab.shape
    Cout = w_flat.shape[0]
    K = 3
    L = H * Wp
    ct = _pick_cout_tile(Cout, Cin, S, L, vmem_budget_bytes)

    kernel = functools.partial(_repvgg_layer_kernel, H=H, Wp=Wp, Cin=Cin, K=K)
    return pl.pallas_call(
        kernel,
        out_shape=jax.ShapeDtypeStruct((N, Cout, S), jnp.bfloat16),
        grid_spec=pltpu.PrefetchScalarGridSpec(
            num_scalar_prefetch=0,
            grid=(N, Cout // ct),
            in_specs=[
                pl.BlockSpec((1, Cin, S), lambda n, c: (n, 0, 0)),
                pl.BlockSpec((ct, K * K * Cin), lambda n, c: (c, 0)),
                pl.BlockSpec((ct, 1), lambda n, c: (c, 0)),
                pl.BlockSpec((1, L), lambda n, c: (0, 0)),
            ],
            out_specs=pl.BlockSpec((1, ct, S), lambda n, c: (n, c, 0)),
        ),
        compiler_params=pltpu.CompilerParams(
            dimension_semantics=("parallel", "parallel"),
            vmem_limit_bytes=32 * 1024 * 1024,
        ),
    )(x_slab, w_flat, b_col, mask)


# --------------------- RepVGG / RepBlock parameter folding -------------------


def _fuse_conv_bn(w, bn, eps):
    gamma, beta, mean, var = bn
    scale = gamma / jnp.sqrt(var + eps)
    return w * scale.reshape(-1, 1, 1, 1), beta - mean * scale


def repvgg_equivalent_weight_bias(p, eps=1e-5):
    """Fold the 3x3, 1x1 and identity-BN branches into one 3x3 weight + bias
    (same math as RepVGGBlock.get_equivalent_kernel_bias)."""
    k3, b3 = _fuse_conv_bn(p["w3"], p["bn3"], eps)
    k1, b1 = _fuse_conv_bn(p["w1"], p["bn1"], eps)
    k = k3 + jnp.pad(k1, ((0, 0), (0, 0), (1, 1), (1, 1)))
    b = b3 + b1
    if p["bnid"] is not None:
        cout, cin = p["w3"].shape[:2]          # cin == cout when the identity branch exists
        id_k = jnp.zeros((cout, cin, 3, 3), jnp.float32)
        id_k = id_k.at[jnp.arange(cout), jnp.arange(cout), 1, 1].set(1.0)
        kid, bid = _fuse_conv_bn(id_k, p["bnid"], eps)
        k = k + kid
        b = b + bid
    return k, b


def rep_block_forward(x_nchw, layer_params, eps=1e-5):
    """RepBlock forward: chain of re-parameterized RepVGG blocks (one pallas_call each),
    with activations kept in the padded bf16 slab layout across the whole chain."""
    N, _, H, W = x_nchw.shape
    Wp = _pick_row_pitch(H, W)
    Hp = H + 3                       # 1 top halo row, H data rows, 2 bottom halo rows
    S = Hp * Wp

    # One pad + flatten for the whole chain (data lives at rows 1..H, cols 1..W of each slab).
    x = jnp.pad(x_nchw, ((0, 0), (0, 0), (1, Hp - H - 1), (1, Wp - W - 1)))
    x = x.reshape(N, x.shape[1], S).astype(jnp.bfloat16)
    mask = (jnp.arange(H * Wp, dtype=jnp.int32) % Wp < W
            ).astype(jnp.float32).reshape(1, H * Wp)

    for p in layer_params:
        w_eq, b_eq = repvgg_equivalent_weight_bias(p, eps)
        cout, cin = w_eq.shape[:2]
        # (O, I, Kh, Kw) -> (O, Kh, Kw, I) -> (O, 9*I); column order matches the kernel taps.
        w_flat = jnp.transpose(w_eq, (0, 2, 3, 1)).reshape(cout, 9 * cin).astype(jnp.bfloat16)
        b_col = b_eq.reshape(cout, 1).astype(jnp.float32)
        x = _fused_repvgg_layer(x, w_flat, b_col, mask, H=H, W=W, Hp=Hp, Wp=Wp)

    # One slice back to compact NCHW at the end of the chain.
    y = x.reshape(N, -1, Hp, Wp)[:, :, 1:H + 1, 1:W + 1]
    return y.astype(jnp.float32)


# ------------------------- pure-JAX reference (unfused) ----------------------


def _bn_inference(y, bn, eps):
    gamma, beta, mean, var = bn
    scale = gamma / jnp.sqrt(var + eps)
    shift = beta - mean * scale
    return y * scale.reshape(1, -1, 1, 1) + shift.reshape(1, -1, 1, 1)


def _repvgg_reference(x, p, eps=1e-5):
    def conv(x, w, pad):
        return jax.lax.conv_general_dilated(
            x, w, window_strides=(1, 1), padding=[(pad, pad), (pad, pad)],
            dimension_numbers=("NCHW", "OIHW", "NCHW"))
    y = _bn_inference(conv(x, p["w3"], 1), p["bn3"], eps)
    y = y + _bn_inference(conv(x, p["w1"], 0), p["bn1"], eps)
    if p["bnid"] is not None:
        y = y + _bn_inference(x, p["bnid"], eps)
    return jnp.maximum(y, 0.0)


def rep_block_reference(x, layer_params, eps=1e-5):
    for p in layer_params:
        x = _repvgg_reference(x, p, eps)
    return x


# ----------------------------------- demo ------------------------------------


def _make_bn(key, c):
    k1, k2, k3, k4 = jax.random.split(key, 4)
    gamma = 1.0 + 0.1 * jax.random.normal(k1, (c,), jnp.float32)
    beta = 0.1 * jax.random.normal(k2, (c,), jnp.float32)
    mean = 0.1 * jax.random.normal(k3, (c,), jnp.float32)
    var = jnp.abs(1.0 + 0.1 * jax.random.normal(k4, (c,), jnp.float32))
    return (gamma, beta, mean, var)


def make_repvgg_params(key, cin, cout, stride=1):
    k_w3, k_w1, k_bn3, k_bn1, k_bnid = jax.random.split(key, 5)
    return {
        "w3": 0.1 * jax.random.normal(k_w3, (cout, cin, 3, 3), jnp.float32),
        "bn3": _make_bn(k_bn3, cout),
        "w1": 0.1 * jax.random.normal(k_w1, (cout, cin, 1, 1), jnp.float32),
        "bn1": _make_bn(k_bn1, cout),
        # rbr_identity exists only when out_channels == in_channels and stride == 1
        "bnid": _make_bn(k_bnid, cin) if (cin == cout and stride == 1) else None,
    }


if __name__ == "__main__":
    key = jax.random.PRNGKey(0)
    N, Cin, H, W = 2, 4, 16, 16
    Cout = 8
    n_layers = 2   # RepBlock(4, 8, n=2): RepVGG(4->8) then RepVGG(8->8, with identity BN)

    k_x, k_p = jax.random.split(key)
    x = jax.random.normal(k_x, (N, Cin, H, W), dtype=jnp.float32)

    layer_keys = jax.random.split(k_p, n_layers)
    channels = [Cin] + [Cout] * n_layers
    params = [make_repvgg_params(layer_keys[i], channels[i], channels[i + 1])
              for i in range(n_layers)]

    out = jax.jit(rep_block_forward)(x, params)
    out = jax.block_until_ready(out)

    ref = rep_block_reference(x, params)
    assert out.shape == (N, Cout, H, W)
    max_err = float(jnp.max(jnp.abs(out - ref)))
    # bf16 activations/weights through the MXU -> looser tolerance than pure-f32.
    assert jnp.allclose(out, ref, atol=7.5e-2, rtol=5e-2), f"mismatch vs reference: {max_err}"
    print("KERNEL_OK")
</pallas_src>

<mosaic_0001>
module attributes {stable_mosaic.version = 11 : i64} {
  func.func @_repvgg_layer_kernel(%arg0: i32, %arg1: i32, %arg2: memref<1x4x456xbf16, #tpu.memory_space<vmem>>, %arg3: memref<8x36xbf16, #tpu.memory_space<vmem>>, %arg4: memref<8x1xf32, #tpu.memory_space<vmem>>, %arg5: memref<1x384xf32, #tpu.memory_space<vmem>>, %arg6: memref<1x8x456xbf16, #tpu.memory_space<vmem>>) attributes {dimension_semantics = [#tpu.dimension_semantics<parallel>, #tpu.dimension_semantics<parallel>], iteration_bounds = array<i64: 2, 1>, scalar_prefetch = 0 : i64, scratch_operands = 0 : i64, tpu.core_type = #tpu.core_type<tc>, window_params = [{transform_indices = @transform_0, window_bounds = array<i64: 1, 4, 456>}, {transform_indices = @transform_1, window_bounds = array<i64: 8, 36>}, {transform_indices = @transform_2, window_bounds = array<i64: 8, 1>}, {pipeline_mode = #tpu.pipeline_mode<synchronous>, transform_indices = @transform_3, window_bounds = array<i64: 1, 384>}, {transform_indices = @transform_4, window_bounds = array<i64: 1, 8, 456>}]} {
    %c0 = arith.constant 0 : index
    %c0_0 = arith.constant 0 : index
    %c0_1 = arith.constant 0 : index
    %0 = vector.load %arg2[%c0, %c0_0, %c0_1] : memref<1x4x456xbf16, #tpu.memory_space<vmem>>, vector<1x4x384xbf16>
    %1 = vector.shape_cast %0 : vector<1x4x384xbf16> to vector<4x384xbf16>
    %c0_2 = arith.constant 0 : index
    %c0_3 = arith.constant 0 : index
    %2 = vector.load %arg3[%c0_2, %c0_3] : memref<8x36xbf16, #tpu.memory_space<vmem>>, vector<8x4xbf16>
    %cst = arith.constant dense<0.000000e+00> : vector<8x384xf32>
    %3 = tpu.matmul %2, %1, %cst {dimension_numbers = #tpu.dot_dimension_numbers<[1], [0], [0], [1], [0, 0, 1, 1], [], []>} : vector<8x4xbf16>, vector<4x384xbf16>, vector<8x384xf32> -> vector<8x384xf32>
    %c0_4 = arith.constant 0 : index
    %c0_5 = arith.constant 0 : index
    %c1 = arith.constant 1 : index
    %4 = vector.load %arg2[%c0_4, %c0_5, %c1] : memref<1x4x456xbf16, #tpu.memory_space<vmem>>, vector<1x4x384xbf16>
    %5 = vector.shape_cast %4 : vector<1x4x384xbf16> to vector<4x384xbf16>
    %c0_6 = arith.constant 0 : index
    %c4 = arith.constant 4 : index
    %6 = vector.load %arg3[%c0_6, %c4] : memref<8x36xbf16, #tpu.memory_space<vmem>>, vector<8x4xbf16>
    %cst_7 = arith.constant dense<0.000000e+00> : vector<8x384xf32>
    %7 = tpu.matmul %6, %5, %cst_7 {dimension_numbers = #tpu.dot_dimension_numbers<[1], [0], [0], [1], [0, 0, 1, 1], [], []>} : vector<8x4xbf16>, vector<4x384xbf16>, vector<8x384xf32> -> vector<8x384xf32>
    %8 = arith.addf %3, %7 : vector<8x384xf32>
    %c0_8 = arith.constant 0 : index
    %c0_9 = arith.constant 0 : index
    %c2 = arith.constant 2 : index
    %9 = vector.load %arg2[%c0_8, %c0_9, %c2] : memref<1x4x456xbf16, #tpu.memory_space<vmem>>, vector<1x4x384xbf16>
    %10 = vector.shape_cast %9 : vector<1x4x384xbf16> to vector<4x384xbf16>
    %c0_10 = arith.constant 0 : index
    %c8 = arith.constant 8 : index
    %11 = vector.load %arg3[%c0_10, %c8] : memref<8x36xbf16, #tpu.memory_space<vmem>>, vector<8x4xbf16>
    %cst_11 = arith.constant dense<0.000000e+00> : vector<8x384xf32>
    %12 = tpu.matmul %11, %10, %cst_11 {dimension_numbers = #tpu.dot_dimension_numbers<[1], [0], [0], [1], [0, 0, 1, 1], [], []>} : vector<8x4xbf16>, vector<4x384xbf16>, vector<8x384xf32> -> vector<8x384xf32>
    %13 = arith.addf %8, %12 : vector<8x384xf32>
    %c0_12 = arith.constant 0 : index
    %c0_13 = arith.constant 0 : index
    %c24 = arith.constant 24 : index
    %14 = vector.load %arg2[%c0_12, %c0_13, %c24] : memref<1x4x456xbf16, #tpu.memory_space<vmem>>, vector<1x4x384xbf16>
    %15 = vector.shape_cast %14 : vector<1x4x384xbf16> to vector<4x384xbf16>
    %c0_14 = arith.constant 0 : index
    %c12 = arith.constant 12 : index
    %16 = vector.load %arg3[%c0_14, %c12] : memref<8x36xbf16, #tpu.memory_space<vmem>>, vector<8x4xbf16>
    %cst_15 = arith.constant dense<0.000000e+00> : vector<8x384xf32>
    %17 = tpu.matmul %16, %15, %cst_15 {dimension_numbers = #tpu.dot_dimension_numbers<[1], [0], [0], [1], [0, 0, 1, 1], [], []>} : vector<8x4xbf16>, vector<4x384xbf16>, vector<8x384xf32> -> vector<8x384xf32>
    %18 = arith.addf %13, %17 : vector<8x384xf32>
    %c0_16 = arith.constant 0 : index
    %c0_17 = arith.constant 0 : index
    %c25 = arith.constant 25 : index
    %19 = vector.load %arg2[%c0_16, %c0_17, %c25] : memref<1x4x456xbf16, #tpu.memory_space<vmem>>, vector<1x4x384xbf16>
    %20 = vector.shape_cast %19 : vector<1x4x384xbf16> to vector<4x384xbf16>
    %c0_18 = arith.constant 0 : index
    %c16 = arith.constant 16 : index
    %21 = vector.load %arg3[%c0_18, %c16] : memref<8x36xbf16, #tpu.memory_space<vmem>>, vector<8x4xbf16>
    %cst_19 = arith.constant dense<0.000000e+00> : vector<8x384xf32>
    %22 = tpu.matmul %21, %20, %cst_19 {dimension_numbers = #tpu.dot_dimension_numbers<[1], [0], [0], [1], [0, 0, 1, 1], [], []>} : vector<8x4xbf16>, vector<4x384xbf16>, vector<8x384xf32> -> vector<8x384xf32>
    %23 = arith.addf %18, %22 : vector<8x384xf32>
    %c0_20 = arith.constant 0 : index
    %c0_21 = arith.constant 0 : index
    %c26 = arith.constant 26 : index
    %24 = vector.load %arg2[%c0_20, %c0_21, %c26] : memref<1x4x456xbf16, #tpu.memory_space<vmem>>, vector<1x4x384xbf16>
    %25 = vector.shape_cast %24 : vector<1x4x384xbf16> to vector<4x384xbf16>
    %c0_22 = arith.constant 0 : index
    %c20 = arith.constant 20 : index
    %26 = vector.load %arg3[%c0_22, %c20] : memref<8x36xbf16, #tpu.memory_space<vmem>>, vector<8x4xbf16>
    %cst_23 = arith.constant dense<0.000000e+00> : vector<8x384xf32>
    %27 = tpu.matmul %26, %25, %cst_23 {dimension_numbers = #tpu.dot_dimension_numbers<[1], [0], [0], [1], [0, 0, 1, 1], [], []>} : vector<8x4xbf16>, vector<4x384xbf16>, vector<8x384xf32> -> vector<8x384xf32>
    %28 = arith.addf %23, %27 : vector<8x384xf32>
    %c0_24 = arith.constant 0 : index
    %c0_25 = arith.constant 0 : index
    %c48 = arith.constant 48 : index
    %29 = vector.load %arg2[%c0_24, %c0_25, %c48] : memref<1x4x456xbf16, #tpu.memory_space<vmem>>, vector<1x4x384xbf16>
    %30 = vector.shape_cast %29 : vector<1x4x384xbf16> to vector<4x384xbf16>
    %c0_26 = arith.constant 0 : index
    %c24_27 = arith.constant 24 : index
    %31 = vector.load %arg3[%c0_26, %c24_27] : memref<8x36xbf16, #tpu.memory_space<vmem>>, vector<8x4xbf16>
    %cst_28 = arith.constant dense<0.000000e+00> : vector<8x384xf32>
    %32 = tpu.matmul %31, %30, %cst_28 {dimension_numbers = #tpu.dot_dimension_numbers<[1], [0], [0], [1], [0, 0, 1, 1], [], []>} : vector<8x4xbf16>, vector<4x384xbf16>, vector<8x384xf32> -> vector<8x384xf32>
    %33 = arith.addf %28, %32 : vector<8x384xf32>
    %c0_29 = arith.constant 0 : index
    %c0_30 = arith.constant 0 : index
    %c49 = arith.constant 49 : index
    %34 = vector.load %arg2[%c0_29, %c0_30, %c49] : memref<1x4x456xbf16, #tpu.memory_space<vmem>>, vector<1x4x384xbf16>
    %35 = vector.shape_cast %34 : vector<1x4x384xbf16> to vector<4x384xbf16>
    %c0_31 = arith.constant 0 : index
    %c28 = arith.constant 28 : index
    %36 = vector.load %arg3[%c0_31, %c28] : memref<8x36xbf16, #tpu.memory_space<vmem>>, vector<8x4xbf16>
    %cst_32 = arith.constant dense<0.000000e+00> : vector<8x384xf32>
    %37 = tpu.matmul %36, %35, %cst_32 {dimension_numbers = #tpu.dot_dimension_numbers<[1], [0], [0], [1], [0, 0, 1, 1], [], []>} : vector<8x4xbf16>, vector<4x384xbf16>, vector<8x384xf32> -> vector<8x384xf32>
    %38 = arith.addf %33, %37 : vector<8x384xf32>
    %c0_33 = arith.constant 0 : index
    %c0_34 = arith.constant 0 : index
    %c50 = arith.constant 50 : index
    %39 = vector.load %arg2[%c0_33, %c0_34, %c50] : memref<1x4x456xbf16, #tpu.memory_space<vmem>>, vector<1x4x384xbf16>
    %40 = vector.shape_cast %39 : vector<1x4x384xbf16> to vector<4x384xbf16>
    %c0_35 = arith.constant 0 : index
    %c32 = arith.constant 32 : index
    %41 = vector.load %arg3[%c0_35, %c32] : memref<8x36xbf16, #tpu.memory_space<vmem>>, vector<8x4xbf16>
    %cst_36 = arith.constant dense<0.000000e+00> : vector<8x384xf32>
    %42 = tpu.matmul %41, %40, %cst_36 {dimension_numbers = #tpu.dot_dimension_numbers<[1], [0], [0], [1], [0, 0, 1, 1], [], []>} : vector<8x4xbf16>, vector<4x384xbf16>, vector<8x384xf32> -> vector<8x384xf32>
    %43 = arith.addf %38, %42 : vector<8x384xf32>
    %c0_37 = arith.constant 0 : index
    %c0_38 = arith.constant 0 : index
    %44 = vector.load %arg4[%c0_37, %c0_38] : memref<8x1xf32, #tpu.memory_space<vmem>>, vector<8x1xf32>
    %45 = vector.broadcast %44 : vector<8x1xf32> to vector<8x384xf32>
    %46 = arith.addf %43, %45 : vector<8x384xf32>
    %cst_39 = arith.constant 0.000000e+00 : f32
    %47 = vector.broadcast %cst_39 : f32 to vector<8x384xf32>
    %48 = arith.maximumf %46, %47 : vector<8x384xf32>
    %c0_40 = arith.constant 0 : index
    %c0_41 = arith.constant 0 : index
    %49 = vector.load %arg5[%c0_40, %c0_41] : memref<1x384xf32, #tpu.memory_space<vmem>>, vector<1x384xf32>
    %50 = vector.broadcast %49 : vector<1x384xf32> to vector<8x384xf32>
    %51 = arith.mulf %48, %50 : vector<8x384xf32>
    %cst_42 = arith.constant 0.000000e+00 : bf16
    %52 = vector.broadcast %cst_42 : bf16 to vector<8x25xbf16>
    %c0_43 = arith.constant 0 : index
    %c0_44 = arith.constant 0 : index
    %c0_45 = arith.constant 0 : index
    %53 = vector.load %arg6[%c0_43, %c0_44, %c0_45] : memref<1x8x456xbf16, #tpu.memory_space<vmem>>, vector<1x8x25xbf16>
    %54 = vector.shape_cast %53 : vector<1x8x25xbf16> to vector<8x25xbf16>
    %55 = vector.shape_cast %52 : vector<8x25xbf16> to vector<1x8x25xbf16>
    tpu.vector_store %arg6[%c0_43, %c0_44, %c0_45], %55 {strides = array<i32>} : memref<1x8x456xbf16, #tpu.memory_space<vmem>>, vector<1x8x25xbf16>,
    %56 = arith.truncf %51 : vector<8x384xf32> to vector<8x384xbf16>
    %c0_46 = arith.constant 0 : index
    %c0_47 = arith.constant 0 : index
    %c25_48 = arith.constant 25 : index
    %57 = vector.load %arg6[%c0_46, %c0_47, %c25_48] : memref<1x8x456xbf16, #tpu.memory_space<vmem>>, vector<1x8x384xbf16>
    %58 = vector.shape_cast %57 : vector<1x8x384xbf16> to vector<8x384xbf16>
    %59 = vector.shape_cast %56 : vector<8x384xbf16> to vector<1x8x384xbf16>
    tpu.vector_store %arg6[%c0_46, %c0_47, %c25_48], %59 {strides = array<i32>} : memref<1x8x456xbf16, #tpu.memory_space<vmem>>, vector<1x8x384xbf16>,
    %cst_49 = arith.constant 0.000000e+00 : bf16
    %60 = vector.broadcast %cst_49 : bf16 to vector<8x47xbf16>
    %c0_50 = arith.constant 0 : index
    %c0_51 = arith.constant 0 : index
    %c409 = arith.constant 409 : index
    %61 = vector.load %arg6[%c0_50, %c0_51, %c409] : memref<1x8x456xbf16, #tpu.memory_space<vmem>>, vector<1x8x47xbf16>
    %62 = vector.shape_cast %61 : vector<1x8x47xbf16> to vector<8x47xbf16>
    %63 = vector.shape_cast %60 : vector<8x47xbf16> to vector<1x8x47xbf16>
    tpu.vector_store %arg6[%c0_50, %c0_51, %c409], %63 {strides = array<i32>} : memref<1x8x456xbf16, #tpu.memory_space<vmem>>, vector<1x8x47xbf16>,
    return
  }
  func.func @transform_0(%arg0: i32, %arg1: i32) -> (i32, i32, i32) {
    %c0_i32 = arith.constant 0 : i32
    %c0_i32_0 = arith.constant 0 : i32
    %c0_i32_1 = arith.constant 0 : i32
    return %arg0, %c0_i32, %c0_i32_0 : i32, i32, i32
  }
  func.func @transform_1(%arg0: i32, %arg1: i32) -> (i32, i32) {
    %c0_i32 = arith.constant 0 : i32
    %c0_i32_0 = arith.constant 0 : i32
    return %arg1, %c0_i32 : i32, i32
  }
  func.func @transform_2(%arg0: i32, %arg1: i32) -> (i32, i32) {
    %c0_i32 = arith.constant 0 : i32
    %c0_i32_0 = arith.constant 0 : i32
    return %arg1, %c0_i32 : i32, i32
  }
  func.func @transform_3(%arg0: i32, %arg1: i32) -> (i32, i32) {
    %c0_i32 = arith.constant 0 : i32
    %c0_i32_0 = arith.constant 0 : i32
    %c0_i32_1 = arith.constant 0 : i32
    return %c0_i32, %c0_i32_0 : i32, i32
  }
  func.func @transform_4(%arg0: i32, %arg1: i32) -> (i32, i32, i32) {
    %c0_i32 = arith.constant 0 : i32
    %c0_i32_0 = arith.constant 0 : i32
    return %arg0, %arg1, %c0_i32 : i32, i32, i32
  }
}

module attributes {stable_mosaic.version = 11 : i64} {
  func.func @_repvgg_layer_kernel(%arg0: i32, %arg1: i32, %arg2: memref<1x8x456xbf16, #tpu.memory_space<vmem>>, %arg3: memref<8x72xbf16, #tpu.memory_space<vmem>>, %arg4: memref<8x1xf32, #tpu.memory_space<vmem>>, %arg5: memref<1x384xf32, #tpu.memory_space<vmem>>, %arg6: memref<1x8x456xbf16, #tpu.memory_space<vmem>>) attributes {dimension_semantics = [#tpu.dimension_semantics<parallel>, #tpu.dimension_semantics<parallel>], iteration_bounds = array<i64: 2, 1>, scalar_prefetch = 0 : i64, scratch_operands = 0 : i64, tpu.core_type = #tpu.core_type<tc>, window_params = [{transform_indices = @transform_0, window_bounds = array<i64: 1, 8, 456>}, {transform_indices = @transform_1, window_bounds = array<i64: 8, 72>}, {transform_indices = @transform_2, window_bounds = array<i64: 8, 1>}, {pipeline_mode = #tpu.pipeline_mode<synchronous>, transform_indices = @transform_3, window_bounds = array<i64: 1, 384>}, {transform_indices = @transform_4, window_bounds = array<i64: 1, 8, 456>}]} {
    %c0 = arith.constant 0 : index
    %c0_0 = arith.constant 0 : index
    %c0_1 = arith.constant 0 : index
    %0 = vector.load %arg2[%c0, %c0_0, %c0_1] : memref<1x8x456xbf16, #tpu.memory_space<vmem>>, vector<1x8x384xbf16>
    %1 = vector.shape_cast %0 : vector<1x8x384xbf16> to vector<8x384xbf16>
    %c0_2 = arith.constant 0 : index
    %c0_3 = arith.constant 0 : index
    %2 = vector.load %arg3[%c0_2, %c0_3] : memref<8x72xbf16, #tpu.memory_space<vmem>>, vector<8x8xbf16>
    %cst = arith.constant dense<0.000000e+00> : vector<8x384xf32>
    %3 = tpu.matmul %2, %1, %cst {dimension_numbers = #tpu.dot_dimension_numbers<[1], [0], [0], [1], [0, 0, 1, 1], [], []>} : vector<8x8xbf16>, vector<8x384xbf16>, vector<8x384xf32> -> vector<8x384xf32>
    %c0_4 = arith.constant 0 : index
    %c0_5 = arith.constant 0 : index
    %c1 = arith.constant 1 : index
    %4 = vector.load %arg2[%c0_4, %c0_5, %c1] : memref<1x8x456xbf16, #tpu.memory_space<vmem>>, vector<1x8x384xbf16>
    %5 = vector.shape_cast %4 : vector<1x8x384xbf16> to vector<8x384xbf16>
    %c0_6 = arith.constant 0 : index
    %c8 = arith.constant 8 : index
    %6 = vector.load %arg3[%c0_6, %c8] : memref<8x72xbf16, #tpu.memory_space<vmem>>, vector<8x8xbf16>
    %cst_7 = arith.constant dense<0.000000e+00> : vector<8x384xf32>
    %7 = tpu.matmul %6, %5, %cst_7 {dimension_numbers = #tpu.dot_dimension_numbers<[1], [0], [0], [1], [0, 0, 1, 1], [], []>} : vector<8x8xbf16>, vector<8x384xbf16>, vector<8x384xf32> -> vector<8x384xf32>
    %8 = arith.addf %3, %7 : vector<8x384xf32>
    %c0_8 = arith.constant 0 : index
    %c0_9 = arith.constant 0 : index
    %c2 = arith.constant 2 : index
    %9 = vector.load %arg2[%c0_8, %c0_9, %c2] : memref<1x8x456xbf16, #tpu.memory_space<vmem>>, vector<1x8x384xbf16>
    %10 = vector.shape_cast %9 : vector<1x8x384xbf16> to vector<8x384xbf16>
    %c0_10 = arith.constant 0 : index
    %c16 = arith.constant 16 : index
    %11 = vector.load %arg3[%c0_10, %c16] : memref<8x72xbf16, #tpu.memory_space<vmem>>, vector<8x8xbf16>
    %cst_11 = arith.constant dense<0.000000e+00> : vector<8x384xf32>
    %12 = tpu.matmul %11, %10, %cst_11 {dimension_numbers = #tpu.dot_dimension_numbers<[1], [0], [0], [1], [0, 0, 1, 1], [], []>} : vector<8x8xbf16>, vector<8x384xbf16>, vector<8x384xf32> -> vector<8x384xf32>
    %13 = arith.addf %8, %12 : vector<8x384xf32>
    %c0_12 = arith.constant 0 : index
    %c0_13 = arith.constant 0 : index
    %c24 = arith.constant 24 : index
    %14 = vector.load %arg2[%c0_12, %c0_13, %c24] : memref<1x8x456xbf16, #tpu.memory_space<vmem>>, vector<1x8x384xbf16>
    %15 = vector.shape_cast %14 : vector<1x8x384xbf16> to vector<8x384xbf16>
    %c0_14 = arith.constant 0 : index
    %c24_15 = arith.constant 24 : index
    %16 = vector.load %arg3[%c0_14, %c24_15] : memref<8x72xbf16, #tpu.memory_space<vmem>>, vector<8x8xbf16>
    %cst_16 = arith.constant dense<0.000000e+00> : vector<8x384xf32>
    %17 = tpu.matmul %16, %15, %cst_16 {dimension_numbers = #tpu.dot_dimension_numbers<[1], [0], [0], [1], [0, 0, 1, 1], [], []>} : vector<8x8xbf16>, vector<8x384xbf16>, vector<8x384xf32> -> vector<8x384xf32>
    %18 = arith.addf %13, %17 : vector<8x384xf32>
    %c0_17 = arith.constant 0 : index
    %c0_18 = arith.constant 0 : index
    %c25 = arith.constant 25 : index
    %19 = vector.load %arg2[%c0_17, %c0_18, %c25] : memref<1x8x456xbf16, #tpu.memory_space<vmem>>, vector<1x8x384xbf16>
    %20 = vector.shape_cast %19 : vector<1x8x384xbf16> to vector<8x384xbf16>
    %c0_19 = arith.constant 0 : index
    %c32 = arith.constant 32 : index
    %21 = vector.load %arg3[%c0_19, %c32] : memref<8x72xbf16, #tpu.memory_space<vmem>>, vector<8x8xbf16>
    %cst_20 = arith.constant dense<0.000000e+00> : vector<8x384xf32>
    %22 = tpu.matmul %21, %20, %cst_20 {dimension_numbers = #tpu.dot_dimension_numbers<[1], [0], [0], [1], [0, 0, 1, 1], [], []>} : vector<8x8xbf16>, vector<8x384xbf16>, vector<8x384xf32> -> vector<8x384xf32>
    %23 = arith.addf %18, %22 : vector<8x384xf32>
    %c0_21 = arith.constant 0 : index
    %c0_22 = arith.constant 0 : index
    %c26 = arith.constant 26 : index
    %24 = vector.load %arg2[%c0_21, %c0_22, %c26] : memref<1x8x456xbf16, #tpu.memory_space<vmem>>, vector<1x8x384xbf16>
    %25 = vector.shape_cast %24 : vector<1x8x384xbf16> to vector<8x384xbf16>
    %c0_23 = arith.constant 0 : index
    %c40 = arith.constant 40 : index
    %26 = vector.load %arg3[%c0_23, %c40] : memref<8x72xbf16, #tpu.memory_space<vmem>>, vector<8x8xbf16>
    %cst_24 = arith.constant dense<0.000000e+00> : vector<8x384xf32>
    %27 = tpu.matmul %26, %25, %cst_24 {dimension_numbers = #tpu.dot_dimension_numbers<[1], [0], [0], [1], [0, 0, 1, 1], [], []>} : vector<8x8xbf16>, vector<8x384xbf16>, vector<8x384xf32> -> vector<8x384xf32>
    %28 = arith.addf %23, %27 : vector<8x384xf32>
    %c0_25 = arith.constant 0 : index
    %c0_26 = arith.constant 0 : index
    %c48 = arith.constant 48 : index
    %29 = vector.load %arg2[%c0_25, %c0_26, %c48] : memref<1x8x456xbf16, #tpu.memory_space<vmem>>, vector<1x8x384xbf16>
    %30 = vector.shape_cast %29 : vector<1x8x384xbf16> to vector<8x384xbf16>
    %c0_27 = arith.constant 0 : index
    %c48_28 = arith.constant 48 : index
    %31 = vector.load %arg3[%c0_27, %c48_28] : memref<8x72xbf16, #tpu.memory_space<vmem>>, vector<8x8xbf16>
    %cst_29 = arith.constant dense<0.000000e+00> : vector<8x384xf32>
    %32 = tpu.matmul %31, %30, %cst_29 {dimension_numbers = #tpu.dot_dimension_numbers<[1], [0], [0], [1], [0, 0, 1, 1], [], []>} : vector<8x8xbf16>, vector<8x384xbf16>, vector<8x384xf32> -> vector<8x384xf32>
    %33 = arith.addf %28, %32 : vector<8x384xf32>
    %c0_30 = arith.constant 0 : index
    %c0_31 = arith.constant 0 : index
    %c49 = arith.constant 49 : index
    %34 = vector.load %arg2[%c0_30, %c0_31, %c49] : memref<1x8x456xbf16, #tpu.memory_space<vmem>>, vector<1x8x384xbf16>
    %35 = vector.shape_cast %34 : vector<1x8x384xbf16> to vector<8x384xbf16>
    %c0_32 = arith.constant 0 : index
    %c56 = arith.constant 56 : index
    %36 = vector.load %arg3[%c0_32, %c56] : memref<8x72xbf16, #tpu.memory_space<vmem>>, vector<8x8xbf16>
    %cst_33 = arith.constant dense<0.000000e+00> : vector<8x384xf32>
    %37 = tpu.matmul %36, %35, %cst_33 {dimension_numbers = #tpu.dot_dimension_numbers<[1], [0], [0], [1], [0, 0, 1, 1], [], []>} : vector<8x8xbf16>, vector<8x384xbf16>, vector<8x384xf32> -> vector<8x384xf32>
    %38 = arith.addf %33, %37 : vector<8x384xf32>
    %c0_34 = arith.constant 0 : index
    %c0_35 = arith.constant 0 : index
    %c50 = arith.constant 50 : index
    %39 = vector.load %arg2[%c0_34, %c0_35, %c50] : memref<1x8x456xbf16, #tpu.memory_space<vmem>>, vector<1x8x384xbf16>
    %40 = vector.shape_cast %39 : vector<1x8x384xbf16> to vector<8x384xbf16>
    %c0_36 = arith.constant 0 : index
    %c64 = arith.constant 64 : index
    %41 = vector.load %arg3[%c0_36, %c64] : memref<8x72xbf16, #tpu.memory_space<vmem>>, vector<8x8xbf16>
    %cst_37 = arith.constant dense<0.000000e+00> : vector<8x384xf32>
    %42 = tpu.matmul %41, %40, %cst_37 {dimension_numbers = #tpu.dot_dimension_numbers<[1], [0], [0], [1], [0, 0, 1, 1], [], []>} : vector<8x8xbf16>, vector<8x384xbf16>, vector<8x384xf32> -> vector<8x384xf32>
    %43 = arith.addf %38, %42 : vector<8x384xf32>
    %c0_38 = arith.constant 0 : index
    %c0_39 = arith.constant 0 : index
    %44 = vector.load %arg4[%c0_38, %c0_39] : memref<8x1xf32, #tpu.memory_space<vmem>>, vector<8x1xf32>
    %45 = vector.broadcast %44 : vector<8x1xf32> to vector<8x384xf32>
    %46 = arith.addf %43, %45 : vector<8x384xf32>
    %cst_40 = arith.constant 0.000000e+00 : f32
    %47 = vector.broadcast %cst_40 : f32 to vector<8x384xf32>
    %48 = arith.maximumf %46, %47 : vector<8x384xf32>
    %c0_41 = arith.constant 0 : index
    %c0_42 = arith.constant 0 : index
    %49 = vector.load %arg5[%c0_41, %c0_42] : memref<1x384xf32, #tpu.memory_space<vmem>>, vector<1x384xf32>
    %50 = vector.broadcast %49 : vector<1x384xf32> to vector<8x384xf32>
    %51 = arith.mulf %48, %50 : vector<8x384xf32>
    %cst_43 = arith.constant 0.000000e+00 : bf16
    %52 = vector.broadcast %cst_43 : bf16 to vector<8x25xbf16>
    %c0_44 = arith.constant 0 : index
    %c0_45 = arith.constant 0 : index
    %c0_46 = arith.constant 0 : index
    %53 = vector.load %arg6[%c0_44, %c0_45, %c0_46] : memref<1x8x456xbf16, #tpu.memory_space<vmem>>, vector<1x8x25xbf16>
    %54 = vector.shape_cast %53 : vector<1x8x25xbf16> to vector<8x25xbf16>
    %55 = vector.shape_cast %52 : vector<8x25xbf16> to vector<1x8x25xbf16>
    tpu.vector_store %arg6[%c0_44, %c0_45, %c0_46], %55 {strides = array<i32>} : memref<1x8x456xbf16, #tpu.memory_space<vmem>>, vector<1x8x25xbf16>,
    %56 = arith.truncf %51 : vector<8x384xf32> to vector<8x384xbf16>
    %c0_47 = arith.constant 0 : index
    %c0_48 = arith.constant 0 : index
    %c25_49 = arith.constant 25 : index
    %57 = vector.load %arg6[%c0_47, %c0_48, %c25_49] : memref<1x8x456xbf16, #tpu.memory_space<vmem>>, vector<1x8x384xbf16>
    %58 = vector.shape_cast %57 : vector<1x8x384xbf16> to vector<8x384xbf16>
    %59 = vector.shape_cast %56 : vector<8x384xbf16> to vector<1x8x384xbf16>
    tpu.vector_store %arg6[%c0_47, %c0_48, %c25_49], %59 {strides = array<i32>} : memref<1x8x456xbf16, #tpu.memory_space<vmem>>, vector<1x8x384xbf16>,
    %cst_50 = arith.constant 0.000000e+00 : bf16
    %60 = vector.broadcast %cst_50 : bf16 to vector<8x47xbf16>
    %c0_51 = arith.constant 0 : index
    %c0_52 = arith.constant 0 : index
    %c409 = arith.constant 409 : index
    %61 = vector.load %arg6[%c0_51, %c0_52, %c409] : memref<1x8x456xbf16, #tpu.memory_space<vmem>>, vector<1x8x47xbf16>
    %62 = vector.shape_cast %61 : vector<1x8x47xbf16> to vector<8x47xbf16>
    %63 = vector.shape_cast %60 : vector<8x47xbf16> to vector<1x8x47xbf16>
    tpu.vector_store %arg6[%c0_51, %c0_52, %c409], %63 {strides = array<i32>} : memref<1x8x456xbf16, #tpu.memory_space<vmem>>, vector<1x8x47xbf16>,
    return
  }
  func.func @transform_0(%arg0: i32, %arg1: i32) -> (i32, i32, i32) {
    %c0_i32 = arith.constant 0 : i32
    %c0_i32_0 = arith.constant 0 : i32
    %c0_i32_1 = arith.constant 0 : i32
    return %arg0, %c0_i32, %c0_i32_0 : i32, i32, i32
  }
  func.func @transform_1(%arg0: i32, %arg1: i32) -> (i32, i32) {
    %c0_i32 = arith.constant 0 : i32
    %c0_i32_0 = arith.constant 0 : i32
    return %arg1, %c0_i32 : i32, i32
  }
  func.func @transform_2(%arg0: i32, %arg1: i32) -> (i32, i32) {
    %c0_i32 = arith.constant 0 : i32
    %c0_i32_0 = arith.constant 0 : i32
    return %arg1, %c0_i32 : i32, i32
  }
  func.func @transform_3(%arg0: i32, %arg1: i32) -> (i32, i32) {
    %c0_i32 = arith.constant 0 : i32
    %c0_i32_0 = arith.constant 0 : i32
    %c0_i32_1 = arith.constant 0 : i32
    return %c0_i32, %c0_i32_0 : i32, i32
  }
  func.func @transform_4(%arg0: i32, %arg1: i32) -> (i32, i32, i32) {
    %c0_i32 = arith.constant 0 : i32
    %c0_i32_0 = arith.constant 0 : i32
    return %arg0, %arg1, %c0_i32 : i32, i32, i32
  }
}

</mosaic_0001>

<llo_original>
// kernel: rep_block_forward.3
$region0: #{rep_block_forward.3}
  #allocation0 [shape = 'u32[]', space=smem, size = 0x4, offset = 0x4, fixed_abs, tag = 'smem constant byte address 0x4 - core index']
  #allocation1 [shape = 'u32[144,128]{1,0:T(1,128)}', space=vmem, size = 0x12000, scoped, tag = 'internal scratch']
  %s0 = inlined_call_operand.vmem [shape: bf16[2,8,456], index: 0, kind: input, shape index: {}]
  %s1 = inlined_call_operand.vmem [shape: bf16[8,72], index: 1, kind: input, shape index: {}]
  %s2 = inlined_call_operand.vmem [shape: f32[8,1], index: 2, kind: input, shape index: {}]
  %s3 = inlined_call_operand.vmem [shape: f32[1,384], index: 3, kind: input, shape index: {}]
  %s4 = inlined_call_operand.vmem [shape: bf16[2,8,456], index: 4, kind: output, shape index: {}]
  %s5 = sld [smem:[#allocation0]]
  $region49: #{rep_block_forward.3} parent=0
    _
  %s7 = ssub.s32 1, %s5
  %s8 = scalar_select 0, %s7, %s5
  loop: start=0, step=1, limit=4
  $region2: #{rep_block_forward.3} parent=0 // loop_pre_header
    _
  $region3: #{rep_block_forward.3} parent=0 // loop_header
    %s10 = sphi 0, %s14
    %p11 = scmp.ge.s32.totalorder %s10, 4
    %s17 = sphi 0, %s29
    %s18 = sphi 0, %s25
    %s19 = sphi 0, %s17
    %s20 = sphi 0, %s18
    %s21 = sphi 0, %s19
    %s22 = sphi 0, %s20
    %s32 = sphi 0, %s34
    %s35 = sphi 0, %s32
    %s36 = sphi 0, %s35
    %s52 = sphi 0, %s36
    %s58 = sphi 0, %s60
    %s61 = sphi 0, %s58
    %s62 = sphi 0, %s61
    %s78 = sphi 0, %s62
    %s84 = sphi 0, %s86
    %s87 = sphi 0, %s84
    %s88 = sphi 0, %s87
    %s104 = sphi 0, %s88
    %s108 = sphi 0, %s108
    %s110 = sphi 0, %s108
    %s111 = sphi 0, %s110
    %s125 = sphi 0, %s111
    %s133 = sphi 0, %s135
    %s136 = sphi 0, %s133
    %s137 = sphi 0, %s136
    %s153 = sphi 0, %s137
  $region4: #{rep_block_forward.3} parent=0 // loop_header_branch
    %13 = sbr.rel (%p11) target = $region8
  $region5: #{rep_block_forward.3} parent=0 // loop_body
    %s15 = ssub.s32 %s10, 1
    %s16 = ssub.s32 %s10, 2
    %s23 = sadd.s32 1, %s18
    %p24 = scmp.ge.s32.totalorder %s23, 1
    %s25 = scalar_select %p24, 0, %s23
    %s26 = sadd.s32 1, %s17
    %s27 = scalar_select %p24, %s26, %s17
    %p28 = scmp.ge.s32.totalorder %s27, 2
    %s29 = scalar_select %p28, 0, %s27
    %s30 = ssub.s32 %s17, %s29
    %p31 = scmp.eq.s32.totalorder %s30, 0
    %s33 = sadd.s32 %s32, 1
    %s34 = scalar_select %p31, %s32, %s33
    %p37 = pneg %p31
    %p38 = scmp.eq.s32.totalorder %s10, 1
    %p39 = por %p37, %p38
    %p40 = scmp.ne.s32.totalorder %s32, %s35
    %p41 = scmp.eq.s32.totalorder %s10, 0
    %p42 = por %p40, %p41
    %p43 = scmp.ne.s32.totalorder %s32, %s35
    %p44 = scmp.eq.s32.totalorder %s15, 1
    %p45 = por %p43, %p44
    %p46 = scmp.ne.s32.totalorder %s35, %s36
    %p47 = scmp.eq.s32.totalorder %s15, 0
    %p48 = por %p46, %p47
    %p49 = scmp.ne.s32.totalorder %s35, %s36
    %p50 = scmp.eq.s32.totalorder %s16, 1
    %p51 = por %p49, %p50
    %p53 = scmp.ne.s32.totalorder %s36, %s52
    %p54 = scmp.eq.s32.totalorder %s16, 0
    %p55 = por %p53, %p54
    %s56 = ssub.s32 %s18, %s25
    %p57 = scmp.eq.s32.totalorder %s56, 0
    %s59 = sadd.s32 %s58, 1
    %s60 = scalar_select %p57, %s58, %s59
    %p63 = pneg %p57
    %p64 = scmp.eq.s32.totalorder %s10, 1
    %p65 = por %p63, %p64
    %p66 = scmp.ne.s32.totalorder %s58, %s61
    %p67 = scmp.eq.s32.totalorder %s10, 0
    %p68 = por %p66, %p67
    %p69 = scmp.ne.s32.totalorder %s58, %s61
    %p70 = scmp.eq.s32.totalorder %s15, 1
    %p71 = por %p69, %p70
    %p72 = scmp.ne.s32.totalorder %s61, %s62
    %p73 = scmp.eq.s32.totalorder %s15, 0
    %p74 = por %p72, %p73
    %p75 = scmp.ne.s32.totalorder %s61, %s62
    %p76 = scmp.eq.s32.totalorder %s16, 1
    %p77 = por %p75, %p76
    %p79 = scmp.ne.s32.totalorder %s62, %s78
    %p80 = scmp.eq.s32.totalorder %s16, 0
    %p81 = por %p79, %p80
    %s82 = ssub.s32 %s18, %s25
    %p83 = scmp.eq.s32.totalorder %s82, 0
    %s85 = sadd.s32 %s84, 1
    %s86 = scalar_select %p83, %s84, %s85
    %p89 = pneg %p83
    %p90 = scmp.eq.s32.totalorder %s10, 1
    %p91 = por %p89, %p90
    %p92 = scmp.ne.s32.totalorder %s84, %s87
    %p93 = scmp.eq.s32.totalorder %s10, 0
    %p94 = por %p92, %p93
    %p95 = scmp.ne.s32.totalorder %s84, %s87
    %p96 = scmp.eq.s32.totalorder %s15, 1
    %p97 = por %p95, %p96
    %p98 = scmp.ne.s32.totalorder %s87, %s88
    %p99 = scmp.eq.s32.totalorder %s15, 0
    %p100 = por %p98, %p99
    %p101 = scmp.ne.s32.totalorder %s87, %s88
    %p102 = scmp.eq.s32.totalorder %s16, 1
    %p103 = por %p101, %p102
    %p105 = scmp.ne.s32.totalorder %s88, %s104
    %p106 = scmp.eq.s32.totalorder %s16, 0
    %p107 = por %p105, %p106
    %s109 = sadd.s32 %s108, 1
    %p112 = scmp.eq.s32.totalorder %s10, 1
    %p113 = scmp.ne.s32.totalorder %s108, %s110
    %p114 = scmp.eq.s32.totalorder %s10, 0
    %p115 = por %p113, %p114
    %p116 = scmp.ne.s32.totalorder %s108, %s110
    %p117 = scmp.eq.s32.totalorder %s15, 1
    %p118 = por %p116, %p117
    %p119 = scmp.ne.s32.totalorder %s110, %s111
    %p120 = scmp.eq.s32.totalorder %s15, 0
    %p121 = por %p119, %p120
    %p122 = scmp.ne.s32.totalorder %s110, %s111
    %p123 = scmp.eq.s32.totalorder %s16, 1
    %p124 = por %p122, %p123
    %p126 = scmp.ne.s32.totalorder %s111, %s125
    %p127 = scmp.eq.s32.totalorder %s16, 0
    %p128 = por %p126, %p127
    %s129 = ssub.s32 %s17, %s29
    %s130 = ssub.s32 %s18, %s25
    %s131 = sor.u32 %s129, %s130
    %p132 = scmp.eq.s32.totalorder %s131, 0
    %s134 = sadd.s32 %s133, 1
    %s135 = scalar_select %p132, %s133, %s134
    %p138 = pneg %p132
    %p139 = scmp.eq.s32.totalorder %s10, 1
    %p140 = por %p138, %p139
    %p141 = scmp.ne.s32.totalorder %s133, %s136
    %p142 = scmp.eq.s32.totalorder %s10, 0
    %p143 = por %p141, %p142
    %p144 = scmp.ne.s32.totalorder %s133, %s136
    %p145 = scmp.eq.s32.totalorder %s15, 1
    %p146 = por %p144, %p145
    %p147 = scmp.ne.s32.totalorder %s136, %s137
    %p148 = scmp.eq.s32.totalorder %s15, 0
    %p149 = por %p147, %p148
    %p150 = scmp.ne.s32.totalorder %s136, %s137
    %p151 = scmp.eq.s32.totalorder %s16, 1
    %p152 = por %p150, %p151
    %p154 = scmp.ne.s32.totalorder %s137, %s153
    %p155 = scmp.eq.s32.totalorder %s16, 0
    %p156 = por %p154, %p155
    %p157 = scmp.le.s32.totalorder 1, %s10
    %p158 = scmp.lt.s32.totalorder %s10, 3
    %p159 = pnand %p157, %p158
    %p160 = pneg %p159
    // Predicated region
    $region9: #{rep_block_forward.3} parent=5 // pred_check
      _
    $region10: #{rep_block_forward.3} parent=5 // pred_check_branch
      %162 = sbr.rel (%p159) target = $region12
    $region11: #{rep_block_forward.3} parent=5 // pred_region
      %s163 = ssub.s32 %s10, 1
      // Predicated region
      $region13: #{rep_block_forward.3} parent=11 // pred_check
        %p164 = pneg %p74
      $region14: #{rep_block_forward.3} parent=11 // pred_check_branch
        %166 = sbr.rel (%p164) target = $region16
      $region15: #{rep_block_forward.3} parent=11 // pred_region
        %p167 = scmp.lt.s32.totalorder %s20, 0
        %s168 = scalar_select %p167, %s20, 0
        %s169 = smul.addr %s168, 4
        %s170 = scalar_lea.vmem %s1, %s169
      $region16: #{rep_block_forward.3} parent=11 // pred_fallthru
        _
      // Predicated region
      $region17: #{rep_block_forward.3} parent=11 // pred_check
        %p171 = pneg %p100
      $region18: #{rep_block_forward.3} parent=11 // pred_check_branch
        %173 = sbr.rel (%p171) target = $region20
      $region19: #{rep_block_forward.3} parent=11 // pred_region
        %p174 = scmp.lt.s32.totalorder %s20, 0
        %s175 = scalar_select %p174, %s20, 0
        %s176 = smul.addr %s175, 8
        %s177 = scalar_lea.vmem %s2, %s176
      $region20: #{rep_block_forward.3} parent=11 // pred_fallthru
        _
      // Predicated region
      $region21: #{rep_block_forward.3} parent=11 // pred_check
        %p178 = pneg %p121
      $region22: #{rep_block_forward.3} parent=11 // pred_check_branch
        %180 = sbr.rel (%p178) target = $region24
      $region23: #{rep_block_forward.3} parent=11 // pred_region
        _
      $region24: #{rep_block_forward.3} parent=11 // pred_fallthru
        _
    $region12: #{rep_block_forward.3} parent=5 // pred_fallthru
      _
    %p181 = scmp.lt.s32.totalorder %s10, 2
    // Predicated region
    $region25: #{rep_block_forward.3} parent=5 // pred_check
      %p182 = pneg %p181
    $region26: #{rep_block_forward.3} parent=5 // pred_check_branch
      %184 = sbr.rel (%p182) target = $region28
    $region27: #{rep_block_forward.3} parent=5 // pred_region
      // Predicated region
      $region29: #{rep_block_forward.3} parent=27 // pred_check
        %p185 = pneg %p42
      $region30: #{rep_block_forward.3} parent=27 // pred_check_branch
        %187 = sbr.rel (%p185) target = $region32
      $region31: #{rep_block_forward.3} parent=27 // pred_region
        %p188 = scmp.lt.s32.totalorder %s17, 1
        %s189 = scalar_select %p188, %s17, 1
        %s190 = smul.addr %s189, 4
        %s191 = smul.addr %s190, 4
        %s192 = scalar_lea.vmem %s0, %s191
      $region32: #{rep_block_forward.3} parent=27 // pred_fallthru
        _
    $region28: #{rep_block_forward.3} parent=5 // pred_fallthru
      _
    %p193 = scmp.le.s32.totalorder 1, %s10
    %p194 = scmp.lt.s32.totalorder %s10, 3
    %p195 = pnand %p193, %p194
    %p196 = pneg %p195
    // Predicated region
    $region33: #{rep_block_forward.3} parent=5 // pred_check
      _
    $region34: #{rep_block_forward.3} parent=5 // pred_check_branch
      %198 = sbr.rel (%p195) target = $region36
    $region35: #{rep_block_forward.3} parent=5 // pred_region
      %s199 = ssub.s32 %s10, 1
      %p200 = scmp.lt.s32.totalorder %s19, 1
      %s201 = scalar_select %p200, %s19, 1
      %s202 = smul.addr %s201, 4
      %s203 = smul.addr %s202, 4
      %s204 = scalar_lea.vmem %s0, %s203
      %p205 = pneg %p48
      %p206 = pneg %p45
      %p207 = scmp.lt.s32.totalorder %s20, 0
      %s208 = scalar_select %p207, %s20, 0
      %s209 = smul.addr %s208, 4
      %s210 = scalar_lea.vmem %s1, %s209
      %p211 = pneg %p74
      %p212 = pneg %p71
      %p213 = scmp.lt.s32.totalorder %s20, 0
      %s214 = scalar_select %p213, %s20, 0
      %s215 = smul.addr %s214, 8
      %s216 = scalar_lea.vmem %s2, %s215
      %p217 = pneg %p100
      %p218 = pneg %p97
      %p219 = pneg %p121
      %p220 = pneg %p118
      %p221 = pneg %p149
      %p222 = pneg %p146
      %p223 = scmp.lt.s32.totalorder %s19, 1
      %s224 = scalar_select %p223, %s19, 1
      %p225 = scmp.lt.s32.totalorder %s20, 0
      %s226 = scalar_select %p225, %s20, 0
      %s227 = smul.addr %s226, 4
      %s228 = smul.addr %s224, 4
      %s229 = sadd.s32 %s227, %s228
      %s230 = smul.addr %s229, 4
      %s231 = scalar_lea.vmem %s4, %s230
      %p232 = scmp.lt.s32.totalorder %s19, 1
      %s233 = scalar_select %p232, %s19, 1
      %s234 = smul.addr %s233, 4
      %s235 = smul.addr %s234, 4
      %s236 = scalar_lea.vmem %s0, %s235
      %p237 = scmp.lt.s32.totalorder %s20, 0
      %s238 = scalar_select %p237, %s20, 0
      %s239 = smul.addr %s238, 4
      %s240 = scalar_lea.vmem %s1, %s239
      %p241 = scmp.lt.s32.totalorder %s20, 0
      %s242 = scalar_select %p241, %s20, 0
      %s243 = smul.addr %s242, 8
      %s244 = scalar_lea.vmem %s2, %s243
      %p245 = scmp.lt.s32.totalorder %s19, 1
      %s246 = scalar_select %p245, %s19, 1
      %p247 = scmp.lt.s32.totalorder %s20, 0
      %s248 = scalar_select %p247, %s20, 0
      %s249 = smul.addr %s248, 4
      %s250 = smul.addr %s246, 4
      %s251 = sadd.s32 %s249, %s250
      %s252 = smul.addr %s251, 4
      %s253 = scalar_lea.vmem %s4, %s252
      %v255 = vld [vmem:[%s236] sm:$0xff]
      %v256 = vld [vmem:[%s236 + $0x8] sm:$0xf]
      %v257 = vld [vmem:[%s240] sm:$0xf]
      %v258 = vld [vmem:[%s236 + $0x8] sm:$0xff]
      %v260 = vunpack.c.l.b16 %v257
      %v261 = vpack.c.b16 %v260, %v260
      %262 = vrot.lane.b32.xlu0 %v261, 120
      %v263 = vpop.permute.xlu0 %262
      %v266 = vunpack.c.l.b16 %v255
      %v267 = vunpack.c.h.b16 %v255
      %v268 = vunpack.c.l.b16 %v258
      %v269 = vunpack.c.h.b16 %v258
      %v270 = vpack.c.b16 %v266, %v266
      %v271 = vpack.c.b16 %v267, %v267
      %v272 = vpack.c.b16 %v268, %v268
      %v273 = vpack.c.b16 %v269, %v269
      %274 = vrot.lane.b32.xlu0 %v270, 127
      %v275 = vpop.permute.xlu0 %274
      %276 = vrot.lane.b32.xlu0 %v271, 127
      %v277 = vpop.permute.xlu0 %276
      %278 = vrot.lane.b32.xlu0 %v272, 127
      %v279 = vpop.permute.xlu0 %278
      %280 = vrot.lane.b32.xlu0 %v273, 127
      %v281 = vpop.permute.xlu0 %280
      %vm282 = vcmask 1039360
      %v283 = vsel %vm282, %v275, %v277
      %v284 = vsel %vm282, %v277, %v279
      %v285 = vsel %vm282, %v279, %v281
      %vm286 = vcmask 64512
      %v288 = vsel %vm286, %v263, 0
      %vm290 = vcmask 1043456
      %v292 = vsel %vm290, %v283, 0
      %v295 = vsel %vm290, %v284, 0
      %v298 = vsel %vm290, %v285, 0
      %300 = vmatprep.subr.bf16.mxu0 0
      %301 = vmatpush1.bf16.msra.mxu0 0
      %302 = vmatprep.subr.bf16.mxu0 0
      %303 = vmatpush1.bf16.msra.mxu0 0
      %304 = vmatprep.subr.bf16.mxu0 0
      %305 = vmatpush1.bf16.msra.mxu0 0
      %306 = vmatprep.subr.bf16.mxu0 0
      %307 = vmatpush1.bf16.msra.mxu0 0
      %308 = vmatprep.subr.bf16.mxu0 0
      %309 = vmatpush1.bf16.msra.mxu0 0
      %310 = vmatprep.subr.bf16.mxu0 0
      %311 = vmatpush1.bf16.msra.mxu0 0
      %312 = vmatprep.subr.bf16.mxu0 0
      %313 = vmatpush1.bf16.msra.mxu0 0
      %314 = vmatprep.subr.bf16.mxu0 %v295
      %315 = vmatpush1.bf16.msra.mxu0 %v292
      %316 = vmatprep.subr.bf16.mxu0 0
      %317 = vmatpush2.bf16.msra.mxu0 0
      %318 = vmatprep.subr.bf16.mxu0 0
      %319 = vmatpush2.bf16.msra.mxu0 0
      %320 = vmatprep.subr.bf16.mxu0 0
      %321 = vmatpush2.bf16.msra.mxu0 0
      %322 = vmatprep.subr.bf16.mxu0 0
      %323 = vmatpush2.bf16.msra.mxu0 0
      %324 = vmatprep.subr.bf16.mxu0 0
      %325 = vmatpush2.bf16.msra.mxu0 0
      %326 = vmatprep.subr.bf16.mxu0 0
      %327 = vmatpush2.bf16.msra.mxu0 0
      %328 = vmatprep.subr.bf16.mxu0 0
      %329 = vmatpush2.bf16.msra.mxu0 0
      %330 = vmatprep.subr.bf16.mxu0 0
      %331 = vmatpush2.bf16.msra.mxu0 0
      %332 = vmatprep.mubr.bf16.mxu0 0
      %333 = vmatmul.mubr.bf16.gmra.mxu0 %v288
      %v334 = vpop.f32.mrf.mxu0
      %v335 = vadd.f32 0.0, %v334
      %v336 = vpop.f32.mrf.mxu0
      %v337 = vadd.f32 0.0, %v336
      %v338 = vpop.f32.mrf.mxu0
      %v339 = vpop.f32.mrf.mxu0
      %340 = vdwg.mxu0
      %341 = vmatprep.subr.bf16.mxu0 0
      %342 = vmatpush1.bf16.msra.mxu0 0
      %343 = vmatprep.subr.bf16.mxu0 0
      %344 = vmatpush1.bf16.msra.mxu0 0
      %345 = vmatprep.subr.bf16.mxu0 0
      %346 = vmatpush1.bf16.msra.mxu0 0
      %347 = vmatprep.subr.bf16.mxu0 0
      %348 = vmatpush1.bf16.msra.mxu0 0
      %349 = vmatprep.subr.bf16.mxu0 0
      %350 = vmatpush1.bf16.msra.mxu0 0
      %351 = vmatprep.subr.bf16.mxu0 0
      %352 = vmatpush1.bf16.msra.mxu0 0
      %353 = vmatprep.subr.bf16.mxu0 0
      %354 = vmatpush1.bf16.msra.mxu0 0
      %355 = vmatprep.subr.bf16.mxu0 0
      %356 = vmatpush1.bf16.msra.mxu0 %v298
      %357 = vmatprep.subr.bf16.mxu0 0
      %358 = vmatpush2.bf16.msra.mxu0 0
      %359 = vmatprep.subr.bf16.mxu0 0
      %360 = vmatpush2.bf16.msra.mxu0 0
      %361 = vmatprep.subr.bf16.mxu0 0
      %362 = vmatpush2.bf16.msra.mxu0 0
      %363 = vmatprep.subr.bf16.mxu0 0
      %364 = vmatpush2.bf16.msra.mxu0 0
      %365 = vmatprep.subr.bf16.mxu0 0
      %366 = vmatpush2.bf16.msra.mxu0 0
      %367 = vmatprep.subr.bf16.mxu0 0
      %368 = vmatpush2.bf16.msra.mxu0 0
      %369 = vmatprep.subr.bf16.mxu0 0
      %370 = vmatpush2.bf16.msra.mxu0 0
      %371 = vmatprep.subr.bf16.mxu0 0
      %372 = vmatpush2.bf16.msra.mxu0 0
      %373 = vmatprep.mubr.bf16.mxu0 0
      %374 = vmatmul.mubr.bf16.gmra.mxu0 %v288
      %v375 = vpop.f32.mrf.mxu0
      %v376 = vadd.f32 0.0, %v375
      %v377 = vpop.f32.mrf.mxu0
      %v378 = vpop.f32.mrf.mxu0
      %v379 = vpop.f32.mrf.mxu0
      %380 = vdwg.mxu0
      %v382 = vunpack.c.l.b16 %v256
      %v383 = vpack.c.b16 %v382, %v382
      %v385 = vsel %vm286, %v257, 0
      %v388 = vsel %vm290, %v270, 0
      %v391 = vsel %vm290, %v271, 0
      %v394 = vsel %vm290, %v383, 0
      %396 = vmatprep.subr.bf16.mxu0 0
      %397 = vmatpush1.bf16.msra.mxu0 0
      %398 = vmatprep.subr.bf16.mxu0 0
      %399 = vmatpush1.bf16.msra.mxu0 0
      %400 = vmatprep.subr.bf16.mxu0 0
      %401 = vmatpush1.bf16.msra.mxu0 0
      %402 = vmatprep.subr.bf16.mxu0 0
      %403 = vmatpush1.bf16.msra.mxu0 0
      %404 = vmatprep.subr.bf16.mxu0 0
      %405 = vmatpush1.bf16.msra.mxu0 0
      %406 = vmatprep.subr.bf16.mxu0 0
      %407 = vmatpush1.bf16.msra.mxu0 0
      %408 = vmatprep.subr.bf16.mxu0 0
      %409 = vmatpush1.bf16.msra.mxu0 0
      %410 = vmatprep.subr.bf16.mxu0 %v391
      %411 = vmatpush1.bf16.msra.mxu0 %v388
      %412 = vmatprep.subr.bf16.mxu0 0
      %413 = vmatpush2.bf16.msra.mxu0 0
      %414 = vmatprep.subr.bf16.mxu0 0
      %415 = vmatpush2.bf16.msra.mxu0 0
      %416 = vmatprep.subr.bf16.mxu0 0
      %417 = vmatpush2.bf16.msra.mxu0 0
      %418 = vmatprep.subr.bf16.mxu0 0
      %419 = vmatpush2.bf16.msra.mxu0 0
      %420 = vmatprep.subr.bf16.mxu0 0
      %421 = vmatpush2.bf16.msra.mxu0 0
      %422 = vmatprep.subr.bf16.mxu0 0
      %423 = vmatpush2.bf16.msra.mxu0 0
      %424 = vmatprep.subr.bf16.mxu0 0
      %425 = vmatpush2.bf16.msra.mxu0 0
      %426 = vmatprep.subr.bf16.mxu0 0
      %427 = vmatpush2.bf16.msra.mxu0 0
      %428 = vmatprep.mubr.bf16.mxu0 0
      %429 = vmatmul.mubr.bf16.gmra.mxu0 %v385
      %v430 = vpop.f32.mrf.mxu0
      %v431 = vadd.f32 %v335, %v430
      %v432 = vpop.f32.mrf.mxu0
      %v433 = vadd.f32 %v337, %v432
      %v434 = vpop.f32.mrf.mxu0
      %v435 = vpop.f32.mrf.mxu0
      %436 = vdwg.mxu0
      %437 = vmatprep.subr.bf16.mxu0 0
      %438 = vmatpush1.bf16.msra.mxu0 0
      %439 = vmatprep.subr.bf16.mxu0 0
      %440 = vmatpush1.bf16.msra.mxu0 0
      %441 = vmatprep.subr.bf16.mxu0 0
      %442 = vmatpush1.bf16.msra.mxu0 0
      %443 = vmatprep.subr.bf16.mxu0 0
      %444 = vmatpush1.bf16.msra.mxu0 0
      %445 = vmatprep.subr.bf16.mxu0 0
      %446 = vmatpush1.bf16.msra.mxu0 0
      %447 = vmatprep.subr.bf16.mxu0 0
      %448 = vmatpush1.bf16.msra.mxu0 0
      %449 = vmatprep.subr.bf16.mxu0 0
      %450 = vmatpush1.bf16.msra.mxu0 0
      %451 = vmatprep.subr.bf16.mxu0 0
      %452 = vmatpush1.bf16.msra.mxu0 %v394
      %453 = vmatprep.subr.bf16.mxu0 0
      %454 = vmatpush2.bf16.msra.mxu0 0
      %455 = vmatprep.subr.bf16.mxu0 0
      %456 = vmatpush2.bf16.msra.mxu0 0
      %457 = vmatprep.subr.bf16.mxu0 0
      %458 = vmatpush2.bf16.msra.mxu0 0
      %459 = vmatprep.subr.bf16.mxu0 0
      %460 = vmatpush2.bf16.msra.mxu0 0
      %461 = vmatprep.subr.bf16.mxu0 0
      %462 = vmatpush2.bf16.msra.mxu0 0
      %463 = vmatprep.subr.bf16.mxu0 0
      %464 = vmatpush2.bf16.msra.mxu0 0
      %465 = vmatprep.subr.bf16.mxu0 0
      %466 = vmatpush2.bf16.msra.mxu0 0
      %467 = vmatprep.subr.bf16.mxu0 0
      %468 = vmatpush2.bf16.msra.mxu0 0
      %469 = vmatprep.mubr.bf16.mxu0 0
      %470 = vmatmul.mubr.bf16.gmra.mxu0 %v385
      %v471 = vpop.f32.mrf.mxu0
      %v472 = vadd.f32 %v376, %v471
      %v473 = vpop.f32.mrf.mxu0
      %v474 = vpop.f32.mrf.mxu0
      %v475 = vpop.f32.mrf.mxu0
      %476 = vdwg.mxu0
      %477 = vrot.lane.b32.xlu0 %v261, 112
      %v478 = vpop.permute.xlu0 %477
      %479 = vrot.lane.b32.xlu0 %v270, 126
      %v480 = vpop.permute.xlu0 %479
      %481 = vrot.lane.b32.xlu0 %v271, 126
      %v482 = vpop.permute.xlu0 %481
      %483 = vrot.lane.b32.xlu0 %v272, 126
      %v484 = vpop.permute.xlu0 %483
      %485 = vrot.lane.b32.xlu0 %v273, 126
      %v486 = vpop.permute.xlu0 %485
      %vm487 = vcmask 1031168
      %v488 = vsel %vm487, %v480, %v482
      %v489 = vsel %vm487, %v482, %v484
      %v490 = vsel %vm487, %v484, %v486
      %v492 = vsel %vm286, %v478, 0
      %v495 = vsel %vm290, %v488, 0
      %v498 = vsel %vm290, %v489, 0
      %v501 = vsel %vm290, %v490, 0
      %503 = vmatprep.subr.bf16.mxu0 0
      %504 = vmatpush1.bf16.msra.mxu0 0
      %505 = vmatprep.subr.bf16.mxu0 0
      %506 = vmatpush1.bf16.msra.mxu0 0
      %507 = vmatprep.subr.bf16.mxu0 0
      %508 = vmatpush1.bf16.msra.mxu0 0
      %509 = vmatprep.subr.bf16.mxu0 0
      %510 = vmatpush1.bf16.msra.mxu0 0
      %511 = vmatprep.subr.bf16.mxu0 0
      %512 = vmatpush1.bf16.msra.mxu0 0
      %513 = vmatprep.subr.bf16.mxu0 0
      %514 = vmatpush1.bf16.msra.mxu0 0
      %515 = vmatprep.subr.bf16.mxu0 0
      %516 = vmatpush1.bf16.msra.mxu0 0
      %517 = vmatprep.subr.bf16.mxu0 %v498
      %518 = vmatpush1.bf16.msra.mxu0 %v495
      %519 = vmatprep.subr.bf16.mxu0 0
      %520 = vmatpush2.bf16.msra.mxu0 0
      %521 = vmatprep.subr.bf16.mxu0 0
      %522 = vmatpush2.bf16.msra.mxu0 0
      %523 = vmatprep.subr.bf16.mxu0 0
      %524 = vmatpush2.bf16.msra.mxu0 0
      %525 = vmatprep.subr.bf16.mxu0 0
      %526 = vmatpush2.bf16.msra.mxu0 0
      %527 = vmatprep.subr.bf16.mxu0 0
      %528 = vmatpush2.bf16.msra.mxu0 0
      %529 = vmatprep.subr.bf16.mxu0 0
      %530 = vmatpush2.bf16.msra.mxu0 0
      %531 = vmatprep.subr.bf16.mxu0 0
      %532 = vmatpush2.bf16.msra.mxu0 0
      %533 = vmatprep.subr.bf16.mxu0 0
      %534 = vmatpush2.bf16.msra.mxu0 0
      %535 = vmatprep.mubr.bf16.mxu0 0
      %536 = vmatmul.mubr.bf16.gmra.mxu0 %v492
      %v537 = vpop.f32.mrf.mxu0
      %v538 = vadd.f32 0.0, %v537
      %v539 = vpop.f32.mrf.mxu0
      %v540 = vadd.f32 0.0, %v539
      %v541 = vpop.f32.mrf.mxu0
      %v542 = vpop.f32.mrf.mxu0
      %543 = vdwg.mxu0
      %544 = vmatprep.subr.bf16.mxu0 0
      %545 = vmatpush1.bf16.msra.mxu0 0
      %546 = vmatprep.subr.bf16.mxu0 0
      %547 = vmatpush1.bf16.msra.mxu0 0
      %548 = vmatprep.subr.bf16.mxu0 0
      %549 = vmatpush1.bf16.msra.mxu0 0
      %550 = vmatprep.subr.bf16.mxu0 0
      %551 = vmatpush1.bf16.msra.mxu0 0
      %552 = vmatprep.subr.bf16.mxu0 0
      %553 = vmatpush1.bf16.msra.mxu0 0
      %554 = vmatprep.subr.bf16.mxu0 0
      %555 = vmatpush1.bf16.msra.mxu0 0
      %556 = vmatprep.subr.bf16.mxu0 0
      %557 = vmatpush1.bf16.msra.mxu0 0
      %558 = vmatprep.subr.bf16.mxu0 0
      %559 = vmatpush1.bf16.msra.mxu0 %v501
      %560 = vmatprep.subr.bf16.mxu0 0
      %561 = vmatpush2.bf16.msra.mxu0 0
      %562 = vmatprep.subr.bf16.mxu0 0
      %563 = vmatpush2.bf16.msra.mxu0 0
      %564 = vmatprep.subr.bf16.mxu0 0
      %565 = vmatpush2.bf16.msra.mxu0 0
      %566 = vmatprep.subr.bf16.mxu0 0
      %567 = vmatpush2.bf16.msra.mxu0 0
      %568 = vmatprep.subr.bf16.mxu0 0
      %569 = vmatpush2.bf16.msra.mxu0 0
      %570 = vmatprep.subr.bf16.mxu0 0
      %571 = vmatpush2.bf16.msra.mxu0 0
      %572 = vmatprep.subr.bf16.mxu0 0
      %573 = vmatpush2.bf16.msra.mxu0 0
      %574 = vmatprep.subr.bf16.mxu0 0
      %575 = vmatpush2.bf16.msra.mxu0 0
      %576 = vmatprep.mubr.bf16.mxu0 0
      %577 = vmatmul.mubr.bf16.gmra.mxu0 %v492
      %v578 = vpop.f32.mrf.mxu0
      %v579 = vadd.f32 0.0, %v578
      %v580 = vpop.f32.mrf.mxu0
      %v581 = vpop.f32.mrf.mxu0
      %v582 = vpop.f32.mrf.mxu0
      %583 = vdwg.mxu0
      %v584 = vadd.f32 %v431, %v538
      %v585 = vadd.f32 %v433, %v540
      %v586 = vadd.f32 %v472, %v579
      %587 = vrot.lane.b32.xlu0 %v261, 104
      %v588 = vpop.permute.xlu0 %587
      %589 = vrot.lane.b32.xlu0 %v270, 104
      %v590 = vpop.permute.xlu0 %589
      %591 = vrot.lane.b32.xlu0 %v271, 104
      %v592 = vpop.permute.xlu0 %591
      %593 = vrot.lane.b32.xlu0 %v272, 104
      %v594 = vpop.permute.xlu0 %593
      %595 = vrot.lane.b32.xlu0 %v273, 104
      %v596 = vpop.permute.xlu0 %595
      %vm597 = vcmask 850944
      %v598 = vsel %vm597, %v590, %v592
      %v599 = vsel %vm597, %v592, %v594
      %v600 = vsel %vm597, %v594, %v596
      %v602 = vsel %vm286, %v588, 0
      %v605 = vsel %vm290, %v598, 0
      %v608 = vsel %vm290, %v599, 0
      %v611 = vsel %vm290, %v600, 0
      %613 = vmatprep.subr.bf16.mxu0 0
      %614 = vmatpush1.bf16.msra.mxu0 0
      %615 = vmatprep.subr.bf16.mxu0 0
      %616 = vmatpush1.bf16.msra.mxu0 0
      %617 = vmatprep.subr.bf16.mxu0 0
      %618 = vmatpush1.bf16.msra.mxu0 0
      %619 = vmatprep.subr.bf16.mxu0 0
      %620 = vmatpush1.bf16.msra.mxu0 0
      %621 = vmatprep.subr.bf16.mxu0 0
      %622 = vmatpush1.bf16.msra.mxu0 0
      %623 = vmatprep.subr.bf16.mxu0 0
      %624 = vmatpush1.bf16.msra.mxu0 0
      %625 = vmatprep.subr.bf16.mxu0 0
      %626 = vmatpush1.bf16.msra.mxu0 0
      %627 = vmatprep.subr.bf16.mxu0 %v608
      %628 = vmatpush1.bf16.msra.mxu0 %v605
      %629 = vmatprep.subr.bf16.mxu0 0
      %630 = vmatpush2.bf16.msra.mxu0 0
      %631 = vmatprep.subr.bf16.mxu0 0
      %632 = vmatpush2.bf16.msra.mxu0 0
      %633 = vmatprep.subr.bf16.mxu0 0
      %634 = vmatpush2.bf16.msra.mxu0 0
      %635 = vmatprep.subr.bf16.mxu0 0
      %636 = vmatpush2.bf16.msra.mxu0 0
      %637 = vmatprep.subr.bf16.mxu0 0
      %638 = vmatpush2.bf16.msra.mxu0 0
      %639 = vmatprep.subr.bf16.mxu0 0
      %640 = vmatpush2.bf16.msra.mxu0 0
      %641 = vmatprep.subr.bf16.mxu0 0
      %642 = vmatpush2.bf16.msra.mxu0 0
      %643 = vmatprep.subr.bf16.mxu0 0
      %644 = vmatpush2.bf16.msra.mxu0 0
      %645 = vmatprep.mubr.bf16.mxu0 0
      %646 = vmatmul.mubr.bf16.gmra.mxu0 %v602
      %v647 = vpop.f32.mrf.mxu0
      %v648 = vadd.f32 0.0, %v647
      %v649 = vpop.f32.mrf.mxu0
      %v650 = vadd.f32 0.0, %v649
      %v651 = vpop.f32.mrf.mxu0
      %v652 = vpop.f32.mrf.mxu0
      %653 = vdwg.mxu0
      %654 = vmatprep.subr.bf16.mxu0 0
      %655 = vmatpush1.bf16.msra.mxu0 0
      %656 = vmatprep.subr.bf16.mxu0 0
      %657 = vmatpush1.bf16.msra.mxu0 0
      %658 = vmatprep.subr.bf16.mxu0 0
      %659 = vmatpush1.bf16.msra.mxu0 0
      %660 = vmatprep.subr.bf16.mxu0 0
      %661 = vmatpush1.bf16.msra.mxu0 0
      %662 = vmatprep.subr.bf16.mxu0 0
      %663 = vmatpush1.bf16.msra.mxu0 0
      %664 = vmatprep.subr.bf16.mxu0 0
      %665 = vmatpush1.bf16.msra.mxu0 0
      %666 = vmatprep.subr.bf16.mxu0 0
      %667 = vmatpush1.bf16.msra.mxu0 0
      %668 = vmatprep.subr.bf16.mxu0 0
      %669 = vmatpush1.bf16.msra.mxu0 %v611
      %670 = vmatprep.subr.bf16.mxu0 0
      %671 = vmatpush2.bf16.msra.mxu0 0
      %672 = vmatprep.subr.bf16.mxu0 0
      %673 = vmatpush2.bf16.msra.mxu0 0
      %674 = vmatprep.subr.bf16.mxu0 0
      %675 = vmatpush2.bf16.msra.mxu0 0
      %676 = vmatprep.subr.bf16.mxu0 0
      %677 = vmatpush2.bf16.msra.mxu0 0
      %678 = vmatprep.subr.bf16.mxu0 0
      %679 = vmatpush2.bf16.msra.mxu0 0
      %680 = vmatprep.subr.bf16.mxu0 0
      %681 = vmatpush2.bf16.msra.mxu0 0
      %682 = vmatprep.subr.bf16.mxu0 0
      %683 = vmatpush2.bf16.msra.mxu0 0
      %684 = vmatprep.subr.bf16.mxu0 0
      %685 = vmatpush2.bf16.msra.mxu0 0
      %686 = vmatprep.mubr.bf16.mxu0 0
      %687 = vmatmul.mubr.bf16.gmra.mxu0 %v602
      %v688 = vpop.f32.mrf.mxu0
      %v689 = vadd.f32 0.0, %v688
      %v690 = vpop.f32.mrf.mxu0
      %v691 = vpop.f32.mrf.mxu0
      %v692 = vpop.f32.mrf.mxu0
      %693 = vdwg.mxu0
      %v694 = vadd.f32 %v584, %v648
      %v695 = vadd.f32 %v585, %v650
      %v696 = vadd.f32 %v586, %v689
      %697 = vrot.lane.b32.xlu0 %v261, 96
      %v698 = vpop.permute.xlu0 %697
      %699 = vrot.lane.b32.xlu0 %v270, 103
      %v700 = vpop.permute.xlu0 %699
      %701 = vrot.lane.b32.xlu0 %v271, 103
      %v702 = vpop.permute.xlu0 %701
      %703 = vrot.lane.b32.xlu0 %v272, 103
      %v704 = vpop.permute.xlu0 %703
      %705 = vrot.lane.b32.xlu0 %v273, 103
      %v706 = vpop.permute.xlu0 %705
      %vm707 = vcmask 842752
      %v708 = vsel %vm707, %v700, %v702
      %v709 = vsel %vm707, %v702, %v704
      %v710 = vsel %vm707, %v704, %v706
      %v712 = vsel %vm286, %v698, 0
      %v715 = vsel %vm290, %v708, 0
      %v718 = vsel %vm290, %v709, 0
      %v721 = vsel %vm290, %v710, 0
      %723 = vmatprep.subr.bf16.mxu0 0
      %724 = vmatpush1.bf16.msra.mxu0 0
      %725 = vmatprep.subr.bf16.mxu0 0
      %726 = vmatpush1.bf16.msra.mxu0 0
      %727 = vmatprep.subr.bf16.mxu0 0
      %728 = vmatpush1.bf16.msra.mxu0 0
      %729 = vmatprep.subr.bf16.mxu0 0
      %730 = vmatpush1.bf16.msra.mxu0 0
      %731 = vmatprep.subr.bf16.mxu0 0
      %732 = vmatpush1.bf16.msra.mxu0 0
      %733 = vmatprep.subr.bf16.mxu0 0
      %734 = vmatpush1.bf16.msra.mxu0 0
      %735 = vmatprep.subr.bf16.mxu0 0
      %736 = vmatpush1.bf16.msra.mxu0 0
      %737 = vmatprep.subr.bf16.mxu0 %v718
      %738 = vmatpush1.bf16.msra.mxu0 %v715
      %739 = vmatprep.subr.bf16.mxu0 0
      %740 = vmatpush2.bf16.msra.mxu0 0
      %741 = vmatprep.subr.bf16.mxu0 0
      %742 = vmatpush2.bf16.msra.mxu0 0
      %743 = vmatprep.subr.bf16.mxu0 0
      %744 = vmatpush2.bf16.msra.mxu0 0
      %745 = vmatprep.subr.bf16.mxu0 0
      %746 = vmatpush2.bf16.msra.mxu0 0
      %747 = vmatprep.subr.bf16.mxu0 0
      %748 = vmatpush2.bf16.msra.mxu0 0
      %749 = vmatprep.subr.bf16.mxu0 0
      %750 = vmatpush2.bf16.msra.mxu0 0
      %751 = vmatprep.subr.bf16.mxu0 0
      %752 = vmatpush2.bf16.msra.mxu0 0
      %753 = vmatprep.subr.bf16.mxu0 0
      %754 = vmatpush2.bf16.msra.mxu0 0
      %755 = vmatprep.mubr.bf16.mxu0 0
      %756 = vmatmul.mubr.bf16.gmra.mxu0 %v712
      %v757 = vpop.f32.mrf.mxu0
      %v758 = vadd.f32 0.0, %v757
      %v759 = vpop.f32.mrf.mxu0
      %v760 = vadd.f32 0.0, %v759
      %v761 = vpop.f32.mrf.mxu0
      %v762 = vpop.f32.mrf.mxu0
      %763 = vdwg.mxu0
      %764 = vmatprep.subr.bf16.mxu0 0
      %765 = vmatpush1.bf16.msra.mxu0 0
      %766 = vmatprep.subr.bf16.mxu0 0
      %767 = vmatpush1.bf16.msra.mxu0 0
      %768 = vmatprep.subr.bf16.mxu0 0
      %769 = vmatpush1.bf16.msra.mxu0 0
      %770 = vmatprep.subr.bf16.mxu0 0
      %771 = vmatpush1.bf16.msra.mxu0 0
      %772 = vmatprep.subr.bf16.mxu0 0
      %773 = vmatpush1.bf16.msra.mxu0 0
      %774 = vmatprep.subr.bf16.mxu0 0
      %775 = vmatpush1.bf16.msra.mxu0 0
      %776 = vmatprep.subr.bf16.mxu0 0
      %777 = vmatpush1.bf16.msra.mxu0 0
      %778 = vmatprep.subr.bf16.mxu0 0
      %779 = vmatpush1.bf16.msra.mxu0 %v721
      %780 = vmatprep.subr.bf16.mxu0 0
      %781 = vmatpush2.bf16.msra.mxu0 0
      %782 = vmatprep.subr.bf16.mxu0 0
      %783 = vmatpush2.bf16.msra.mxu0 0
      %784 = vmatprep.subr.bf16.mxu0 0
      %785 = vmatpush2.bf16.msra.mxu0 0
      %786 = vmatprep.subr.bf16.mxu0 0
      %787 = vmatpush2.bf16.msra.mxu0 0
      %788 = vmatprep.subr.bf16.mxu0 0
      %789 = vmatpush2.bf16.msra.mxu0 0
      %790 = vmatprep.subr.bf16.mxu0 0
      %791 = vmatpush2.bf16.msra.mxu0 0
      %792 = vmatprep.subr.bf16.mxu0 0
      %793 = vmatpush2.bf16.msra.mxu0 0
      %794 = vmatprep.subr.bf16.mxu0 0
      %795 = vmatpush2.bf16.msra.mxu0 0
      %796 = vmatprep.mubr.bf16.mxu0 0
      %797 = vmatmul.mubr.bf16.gmra.mxu0 %v712
      %v798 = vpop.f32.mrf.mxu0
      %v799 = vadd.f32 0.0, %v798
      %v800 = vpop.f32.mrf.mxu0
      %v801 = vpop.f32.mrf.mxu0
      %v802 = vpop.f32.mrf.mxu0
      %803 = vdwg.mxu0
      %v804 = vadd.f32 %v694, %v758
      %v805 = vadd.f32 %v695, %v760
      %v806 = vadd.f32 %v696, %v799
      %807 = vrot.lane.b32.xlu0 %v261, 88
      %v808 = vpop.permute.xlu0 %807
      %809 = vrot.lane.b32.xlu0 %v270, 102
      %v810 = vpop.permute.xlu0 %809
      %811 = vrot.lane.b32.xlu0 %v271, 102
      %v812 = vpop.permute.xlu0 %811
      %813 = vrot.lane.b32.xlu0 %v272, 102
      %v814 = vpop.permute.xlu0 %813
      %815 = vrot.lane.b32.xlu0 %v273, 102
      %v816 = vpop.permute.xlu0 %815
      %vm817 = vcmask 834560
      %v818 = vsel %vm817, %v810, %v812
      %v819 = vsel %vm817, %v812, %v814
      %v820 = vsel %vm817, %v814, %v816
      %v822 = vsel %vm286, %v808, 0
      %v825 = vsel %vm290, %v818, 0
      %v828 = vsel %vm290, %v819, 0
      %v831 = vsel %vm290, %v820, 0
      %833 = vmatprep.subr.bf16.mxu0 0
      %834 = vmatpush1.bf16.msra.mxu0 0
      %835 = vmatprep.subr.bf16.mxu0 0
      %836 = vmatpush1.bf16.msra.mxu0 0
      %837 = vmatprep.subr.bf16.mxu0 0
      %838 = vmatpush1.bf16.msra.mxu0 0
      %839 = vmatprep.subr.bf16.mxu0 0
      %840 = vmatpush1.bf16.msra.mxu0 0
      %841 = vmatprep.subr.bf16.mxu0 0
      %842 = vmatpush1.bf16.msra.mxu0 0
      %843 = vmatprep.subr.bf16.mxu0 0
      %844 = vmatpush1.bf16.msra.mxu0 0
      %845 = vmatprep.subr.bf16.mxu0 0
      %846 = vmatpush1.bf16.msra.mxu0 0
      %847 = vmatprep.subr.bf16.mxu0 %v828
      %848 = vmatpush1.bf16.msra.mxu0 %v825
      %849 = vmatprep.subr.bf16.mxu0 0
      %850 = vmatpush2.bf16.msra.mxu0 0
      %851 = vmatprep.subr.bf16.mxu0 0
      %852 = vmatpush2.bf16.msra.mxu0 0
      %853 = vmatprep.subr.bf16.mxu0 0
      %854 = vmatpush2.bf16.msra.mxu0 0
      %855 = vmatprep.subr.bf16.mxu0 0
      %856 = vmatpush2.bf16.msra.mxu0 0
      %857 = vmatprep.subr.bf16.mxu0 0
      %858 = vmatpush2.bf16.msra.mxu0 0
      %859 = vmatprep.subr.bf16.mxu0 0
      %860 = vmatpush2.bf16.msra.mxu0 0
      %861 = vmatprep.subr.bf16.mxu0 0
      %862 = vmatpush2.bf16.msra.mxu0 0
      %863 = vmatprep.subr.bf16.mxu0 0
      %864 = vmatpush2.bf16.msra.mxu0 0
      %865 = vmatprep.mubr.bf16.mxu0 0
      %866 = vmatmul.mubr.bf16.gmra.mxu0 %v822
      %v867 = vpop.f32.mrf.mxu0
      %v868 = vadd.f32 0.0, %v867
      %v869 = vpop.f32.mrf.mxu0
      %v870 = vadd.f32 0.0, %v869
      %v871 = vpop.f32.mrf.mxu0
      %v872 = vpop.f32.mrf.mxu0
      %873 = vdwg.mxu0
      %874 = vmatprep.subr.bf16.mxu0 0
      %875 = vmatpush1.bf16.msra.mxu0 0
      %876 = vmatprep.subr.bf16.mxu0 0
      %877 = vmatpush1.bf16.msra.mxu0 0
      %878 = vmatprep.subr.bf16.mxu0 0
      %879 = vmatpush1.bf16.msra.mxu0 0
      %880 = vmatprep.subr.bf16.mxu0 0
      %881 = vmatpush1.bf16.msra.mxu0 0
      %882 = vmatprep.subr.bf16.mxu0 0
      %883 = vmatpush1.bf16.msra.mxu0 0
      %884 = vmatprep.subr.bf16.mxu0 0
      %885 = vmatpush1.bf16.msra.mxu0 0
      %886 = vmatprep.subr.bf16.mxu0 0
      %887 = vmatpush1.bf16.msra.mxu0 0
      %888 = vmatprep.subr.bf16.mxu0 0
      %889 = vmatpush1.bf16.msra.mxu0 %v831
      %890 = vmatprep.subr.bf16.mxu0 0
      %891 = vmatpush2.bf16.msra.mxu0 0
      %892 = vmatprep.subr.bf16.mxu0 0
      %893 = vmatpush2.bf16.msra.mxu0 0
      %894 = vmatprep.subr.bf16.mxu0 0
      %895 = vmatpush2.bf16.msra.mxu0 0
      %896 = vmatprep.subr.bf16.mxu0 0
      %897 = vmatpush2.bf16.msra.mxu0 0
      %898 = vmatprep.subr.bf16.mxu0 0
      %899 = vmatpush2.bf16.msra.mxu0 0
      %900 = vmatprep.subr.bf16.mxu0 0
      %901 = vmatpush2.bf16.msra.mxu0 0
      %902 = vmatprep.subr.bf16.mxu0 0
      %903 = vmatpush2.bf16.msra.mxu0 0
      %904 = vmatprep.subr.bf16.mxu0 0
      %905 = vmatpush2.bf16.msra.mxu0 0
      %906 = vmatprep.mubr.bf16.mxu0 0
      %907 = vmatmul.mubr.bf16.gmra.mxu0 %v822
      %v908 = vpop.f32.mrf.mxu0
      %v909 = vadd.f32 0.0, %v908
      %v910 = vpop.f32.mrf.mxu0
      %v911 = vpop.f32.mrf.mxu0
      %v912 = vpop.f32.mrf.mxu0
      %913 = vdwg.mxu0
      %v914 = vadd.f32 %v804, %v868
      %v915 = vadd.f32 %v805, %v870
      %v916 = vadd.f32 %v806, %v909
      %917 = vrot.lane.b32.xlu0 %v261, 80
      %v918 = vpop.permute.xlu0 %917
      %919 = vrot.lane.b32.xlu0 %v270, 80
      %v920 = vpop.permute.xlu0 %919
      %921 = vrot.lane.b32.xlu0 %v271, 80
      %v922 = vpop.permute.xlu0 %921
      %923 = vrot.lane.b32.xlu0 %v272, 80
      %v924 = vpop.permute.xlu0 %923
      %925 = vrot.lane.b32.xlu0 %v273, 80
      %v926 = vpop.permute.xlu0 %925
      %vm927 = vcmask 654336
      %v928 = vsel %vm927, %v920, %v922
      %v929 = vsel %vm927, %v922, %v924
      %v930 = vsel %vm927, %v924, %v926
      %v932 = vsel %vm286, %v918, 0
      %v935 = vsel %vm290, %v928, 0
      %v938 = vsel %vm290, %v929, 0
      %v941 = vsel %vm290, %v930, 0
      %943 = vmatprep.subr.bf16.mxu0 0
      %944 = vmatpush1.bf16.msra.mxu0 0
      %945 = vmatprep.subr.bf16.mxu0 0
      %946 = vmatpush1.bf16.msra.mxu0 0
      %947 = vmatprep.subr.bf16.mxu0 0
      %948 = vmatpush1.bf16.msra.mxu0 0
      %949 = vmatprep.subr.bf16.mxu0 0
      %950 = vmatpush1.bf16.msra.mxu0 0
      %951 = vmatprep.subr.bf16.mxu0 0
      %952 = vmatpush1.bf16.msra.mxu0 0
      %953 = vmatprep.subr.bf16.mxu0 0
      %954 = vmatpush1.bf16.msra.mxu0 0
      %955 = vmatprep.subr.bf16.mxu0 0
      %956 = vmatpush1.bf16.msra.mxu0 0
      %957 = vmatprep.subr.bf16.mxu0 %v938
      %958 = vmatpush1.bf16.msra.mxu0 %v935
      %959 = vmatprep.subr.bf16.mxu0 0
      %960 = vmatpush2.bf16.msra.mxu0 0
      %961 = vmatprep.subr.bf16.mxu0 0
      %962 = vmatpush2.bf16.msra.mxu0 0
      %963 = vmatprep.subr.bf16.mxu0 0
      %964 = vmatpush2.bf16.msra.mxu0 0
      %965 = vmatprep.subr.bf16.mxu0 0
      %966 = vmatpush2.bf16.msra.mxu0 0
      %967 = vmatprep.subr.bf16.mxu0 0
      %968 = vmatpush2.bf16.msra.mxu0 0
      %969 = vmatprep.subr.bf16.mxu0 0
      %970 = vmatpush2.bf16.msra.mxu0 0
      %971 = vmatprep.subr.bf16.mxu0 0
      %972 = vmatpush2.bf16.msra.mxu0 0
      %973 = vmatprep.subr.bf16.mxu0 0
      %974 = vmatpush2.bf16.msra.mxu0 0
      %975 = vmatprep.mubr.bf16.mxu0 0
      %976 = vmatmul.mubr.bf16.gmra.mxu0 %v932
      %v977 = vpop.f32.mrf.mxu0
      %v978 = vadd.f32 0.0, %v977
      %v979 = vpop.f32.mrf.mxu0
      %v980 = vadd.f32 0.0, %v979
      %v981 = vpop.f32.mrf.mxu0
      %v982 = vpop.f32.mrf.mxu0
      %983 = vdwg.mxu0
      %984 = vmatprep.subr.bf16.mxu0 0
      %985 = vmatpush1.bf16.msra.mxu0 0
      %986 = vmatprep.subr.bf16.mxu0 0
      %987 = vmatpush1.bf16.msra.mxu0 0
      %988 = vmatprep.subr.bf16.mxu0 0
      %989 = vmatpush1.bf16.msra.mxu0 0
      %990 = vmatprep.subr.bf16.mxu0 0
      %991 = vmatpush1.bf16.msra.mxu0 0
      %992 = vmatprep.subr.bf16.mxu0 0
      %993 = vmatpush1.bf16.msra.mxu0 0
      %994 = vmatprep.subr.bf16.mxu0 0
      %995 = vmatpush1.bf16.msra.mxu0 0
      %996 = vmatprep.subr.bf16.mxu0 0
      %997 = vmatpush1.bf16.msra.mxu0 0
      %998 = vmatprep.subr.bf16.mxu0 0
      %999 = vmatpush1.bf16.msra.mxu0 %v941
      %1000 = vmatprep.subr.bf16.mxu0 0
      %1001 = vmatpush2.bf16.msra.mxu0 0
      %1002 = vmatprep.subr.bf16.mxu0 0
      %1003 = vmatpush2.bf16.msra.mxu0 0
      %1004 = vmatprep.subr.bf16.mxu0 0
      %1005 = vmatpush2.bf16.msra.mxu0 0
      %1006 = vmatprep.subr.bf16.mxu0 0
      %1007 = vmatpush2.bf16.msra.mxu0 0
      %1008 = vmatprep.subr.bf16.mxu0 0
      %1009 = vmatpush2.bf16.msra.mxu0 0
      %1010 = vmatprep.subr.bf16.mxu0 0
      %1011 = vmatpush2.bf16.msra.mxu0 0
      %1012 = vmatprep.subr.bf16.mxu0 0
      %1013 = vmatpush2.bf16.msra.mxu0 0
      %1014 = vmatprep.subr.bf16.mxu0 0
      %1015 = vmatpush2.bf16.msra.mxu0 0
      %1016 = vmatprep.mubr.bf16.mxu0 0
      %1017 = vmatmul.mubr.bf16.gmra.mxu0 %v932
      %v1018 = vpop.f32.mrf.mxu0
      %v1019 = vadd.f32 0.0, %v1018
      %v1020 = vpop.f32.mrf.mxu0
      %v1021 = vpop.f32.mrf.mxu0
      %v1022 = vpop.f32.mrf.mxu0
      %1023 = vdwg.mxu0
      %v1024 = vadd.f32 %v914, %v978
      %v1025 = vadd.f32 %v915, %v980
      %v1026 = vadd.f32 %v916, %v1019
      %1027 = vrot.lane.b32.xlu0 %v261, 72
      %v1028 = vpop.permute.xlu0 %1027
      %1029 = vrot.lane.b32.xlu0 %v270, 79
      %v1030 = vpop.permute.xlu0 %1029
      %1031 = vrot.lane.b32.xlu0 %v271, 79
      %v1032 = vpop.permute.xlu0 %1031
      %1033 = vrot.lane.b32.xlu0 %v272, 79
      %v1034 = vpop.permute.xlu0 %1033
      %1035 = vrot.lane.b32.xlu0 %v273, 79
      %v1036 = vpop.permute.xlu0 %1035
      %vm1037 = vcmask 646144
      %v1038 = vsel %vm1037, %v1030, %v1032
      %v1039 = vsel %vm1037, %v1032, %v1034
      %v1040 = vsel %vm1037, %v1034, %v1036
      %v1042 = vsel %vm286, %v1028, 0
      %v1045 = vsel %vm290, %v1038, 0
      %v1048 = vsel %vm290, %v1039, 0
      %v1051 = vsel %vm290, %v1040, 0
      %1053 = vmatprep.subr.bf16.mxu0 0
      %1054 = vmatpush1.bf16.msra.mxu0 0
      %1055 = vmatprep.subr.bf16.mxu0 0
      %1056 = vmatpush1.bf16.msra.mxu0 0
      %1057 = vmatprep.subr.bf16.mxu0 0
      %1058 = vmatpush1.bf16.msra.mxu0 0
      %1059 = vmatprep.subr.bf16.mxu0 0
      %1060 = vmatpush1.bf16.msra.mxu0 0
      %1061 = vmatprep.subr.bf16.mxu0 0
      %1062 = vmatpush1.bf16.msra.mxu0 0
      %1063 = vmatprep.subr.bf16.mxu0 0
      %1064 = vmatpush1.bf16.msra.mxu0 0
      %1065 = vmatprep.subr.bf16.mxu0 0
      %1066 = vmatpush1.bf16.msra.mxu0 0
      %1067 = vmatprep.subr.bf16.mxu0 %v1048
      %1068 = vmatpush1.bf16.msra.mxu0 %v1045
      %1069 = vmatprep.subr.bf16.mxu0 0
      %1070 = vmatpush2.bf16.msra.mxu0 0
      %1071 = vmatprep.subr.bf16.mxu0 0
      %1072 = vmatpush2.bf16.msra.mxu0 0
      %1073 = vmatprep.subr.bf16.mxu0 0
      %1074 = vmatpush2.bf16.msra.mxu0 0
      %1075 = vmatprep.subr.bf16.mxu0 0
      %1076 = vmatpush2.bf16.msra.mxu0 0
      %1077 = vmatprep.subr.bf16.mxu0 0
      %1078 = vmatpush2.bf16.msra.mxu0 0
      %1079 = vmatprep.subr.bf16.mxu0 0
      %1080 = vmatpush2.bf16.msra.mxu0 0
      %1081 = vmatprep.subr.bf16.mxu0 0
      %1082 = vmatpush2.bf16.msra.mxu0 0
      %1083 = vmatprep.subr.bf16.mxu0 0
      %1084 = vmatpush2.bf16.msra.mxu0 0
      %1085 = vmatprep.mubr.bf16.mxu0 0
      %1086 = vmatmul.mubr.bf16.gmra.mxu0 %v1042
      %v1087 = vpop.f32.mrf.mxu0
      %v1088 = vadd.f32 0.0, %v1087
      %v1089 = vpop.f32.mrf.mxu0
      %v1090 = vadd.f32 0.0, %v1089
      %v1091 = vpop.f32.mrf.mxu0
      %v1092 = vpop.f32.mrf.mxu0
      %1093 = vdwg.mxu0
      %1094 = vmatprep.subr.bf16.mxu0 0
      %1095 = vmatpush1.bf16.msra.mxu0 0
      %1096 = vmatprep.subr.bf16.mxu0 0
      %1097 = vmatpush1.bf16.msra.mxu0 0
      %1098 = vmatprep.subr.bf16.mxu0 0
      %1099 = vmatpush1.bf16.msra.mxu0 0
      %1100 = vmatprep.subr.bf16.mxu0 0
      %1101 = vmatpush1.bf16.msra.mxu0 0
      %1102 = vmatprep.subr.bf16.mxu0 0
      %1103 = vmatpush1.bf16.msra.mxu0 0
      %1104 = vmatprep.subr.bf16.mxu0 0
      %1105 = vmatpush1.bf16.msra.mxu0 0
      %1106 = vmatprep.subr.bf16.mxu0 0
      %1107 = vmatpush1.bf16.msra.mxu0 0
      %1108 = vmatprep.subr.bf16.mxu0 0
      %1109 = vmatpush1.bf16.msra.mxu0 %v1051
      %1110 = vmatprep.subr.bf16.mxu0 0
      %1111 = vmatpush2.bf16.msra.mxu0 0
      %1112 = vmatprep.subr.bf16.mxu0 0
      %1113 = vmatpush2.bf16.msra.mxu0 0
      %1114 = vmatprep.subr.bf16.mxu0 0
      %1115 = vmatpush2.bf16.msra.mxu0 0
      %1116 = vmatprep.subr.bf16.mxu0 0
      %1117 = vmatpush2.bf16.msra.mxu0 0
      %1118 = vmatprep.subr.bf16.mxu0 0
      %1119 = vmatpush2.bf16.msra.mxu0 0
      %1120 = vmatprep.subr.bf16.mxu0 0
      %1121 = vmatpush2.bf16.msra.mxu0 0
      %1122 = vmatprep.subr.bf16.mxu0 0
      %1123 = vmatpush2.bf16.msra.mxu0 0
      %1124 = vmatprep.subr.bf16.mxu0 0
      %1125 = vmatpush2.bf16.msra.mxu0 0
      %1126 = vmatprep.mubr.bf16.mxu0 0
      %1127 = vmatmul.mubr.bf16.gmra.mxu0 %v1042
      %v1128 = vpop.f32.mrf.mxu0
      %v1129 = vadd.f32 0.0, %v1128
      %v1130 = vpop.f32.mrf.mxu0
      %v1131 = vpop.f32.mrf.mxu0
      %v1132 = vpop.f32.mrf.mxu0
      %1133 = vdwg.mxu0
      %v1134 = vadd.f32 %v1024, %v1088
      %v1135 = vadd.f32 %v1025, %v1090
      %v1136 = vadd.f32 %v1026, %v1129
      %1137 = vrot.lane.b32.xlu0 %v261, 64
      %v1138 = vpop.permute.xlu0 %1137
      %1139 = vrot.lane.b32.xlu0 %v270, 78
      %v1140 = vpop.permute.xlu0 %1139
      %1141 = vrot.lane.b32.xlu0 %v271, 78
      %v1142 = vpop.permute.xlu0 %1141
      %1143 = vrot.lane.b32.xlu0 %v272, 78
      %v1144 = vpop.permute.xlu0 %1143
      %1145 = vrot.lane.b32.xlu0 %v273, 78
      %v1146 = vpop.permute.xlu0 %1145
      %vm1147 = vcmask 637952
      %v1148 = vsel %vm1147, %v1140, %v1142
      %v1149 = vsel %vm1147, %v1142, %v1144
      %v1150 = vsel %vm1147, %v1144, %v1146
      %v1152 = vsel %vm286, %v1138, 0
      %v1155 = vsel %vm290, %v1148, 0
      %v1158 = vsel %vm290, %v1149, 0
      %v1161 = vsel %vm290, %v1150, 0
      %1163 = vmatprep.subr.bf16.mxu0 0
      %1164 = vmatpush1.bf16.msra.mxu0 0
      %1165 = vmatprep.subr.bf16.mxu0 0
      %1166 = vmatpush1.bf16.msra.mxu0 0
      %1167 = vmatprep.subr.bf16.mxu0 0
      %1168 = vmatpush1.bf16.msra.mxu0 0
      %1169 = vmatprep.subr.bf16.mxu0 0
      %1170 = vmatpush1.bf16.msra.mxu0 0
      %1171 = vmatprep.subr.bf16.mxu0 0
      %1172 = vmatpush1.bf16.msra.mxu0 0
      %1173 = vmatprep.subr.bf16.mxu0 0
      %1174 = vmatpush1.bf16.msra.mxu0 0
      %1175 = vmatprep.subr.bf16.mxu0 0
      %1176 = vmatpush1.bf16.msra.mxu0 0
      %1177 = vmatprep.subr.bf16.mxu0 %v1158
      %1178 = vmatpush1.bf16.msra.mxu0 %v1155
      %1179 = vmatprep.subr.bf16.mxu0 0
      %1180 = vmatpush2.bf16.msra.mxu0 0
      %1181 = vmatprep.subr.bf16.mxu0 0
      %1182 = vmatpush2.bf16.msra.mxu0 0
      %1183 = vmatprep.subr.bf16.mxu0 0
      %1184 = vmatpush2.bf16.msra.mxu0 0
      %1185 = vmatprep.subr.bf16.mxu0 0
      %1186 = vmatpush2.bf16.msra.mxu0 0
      %1187 = vmatprep.subr.bf16.mxu0 0
      %1188 = vmatpush2.bf16.msra.mxu0 0
      %1189 = vmatprep.subr.bf16.mxu0 0
      %1190 = vmatpush2.bf16.msra.mxu0 0
      %1191 = vmatprep.subr.bf16.mxu0 0
      %1192 = vmatpush2.bf16.msra.mxu0 0
      %1193 = vmatprep.subr.bf16.mxu0 0
      %1194 = vmatpush2.bf16.msra.mxu0 0
      %1195 = vmatprep.mubr.bf16.mxu0 0
      %1196 = vmatmul.mubr.bf16.gmra.mxu0 %v1152
      %v1197 = vpop.f32.mrf.mxu0
      %v1198 = vadd.f32 0.0, %v1197
      %v1199 = vpop.f32.mrf.mxu0
      %v1200 = vadd.f32 0.0, %v1199
      %v1201 = vpop.f32.mrf.mxu0
      %v1202 = vpop.f32.mrf.mxu0
      %1203 = vdwg.mxu0
      %1204 = vmatprep.subr.bf16.mxu0 0
      %1205 = vmatpush1.bf16.msra.mxu0 0
      %1206 = vmatprep.subr.bf16.mxu0 0
      %1207 = vmatpush1.bf16.msra.mxu0 0
      %1208 = vmatprep.subr.bf16.mxu0 0
      %1209 = vmatpush1.bf16.msra.mxu0 0
      %1210 = vmatprep.subr.bf16.mxu0 0
      %1211 = vmatpush1.bf16.msra.mxu0 0
      %1212 = vmatprep.subr.bf16.mxu0 0
      %1213 = vmatpush1.bf16.msra.mxu0 0
      %1214 = vmatprep.subr.bf16.mxu0 0
      %1215 = vmatpush1.bf16.msra.mxu0 0
      %1216 = vmatprep.subr.bf16.mxu0 0
      %1217 = vmatpush1.bf16.msra.mxu0 0
      %1218 = vmatprep.subr.bf16.mxu0 0
      %1219 = vmatpush1.bf16.msra.mxu0 %v1161
      %1220 = vmatprep.subr.bf16.mxu0 0
      %1221 = vmatpush2.bf16.msra.mxu0 0
      %1222 = vmatprep.subr.bf16.mxu0 0
      %1223 = vmatpush2.bf16.msra.mxu0 0
      %1224 = vmatprep.subr.bf16.mxu0 0
      %1225 = vmatpush2.bf16.msra.mxu0 0
      %1226 = vmatprep.subr.bf16.mxu0 0
      %1227 = vmatpush2.bf16.msra.mxu0 0
      %1228 = vmatprep.subr.bf16.mxu0 0
      %1229 = vmatpush2.bf16.msra.mxu0 0
      %1230 = vmatprep.subr.bf16.mxu0 0
      %1231 = vmatpush2.bf16.msra.mxu0 0
      %1232 = vmatprep.subr.bf16.mxu0 0
      %1233 = vmatpush2.bf16.msra.mxu0 0
      %1234 = vmatprep.subr.bf16.mxu0 0
      %1235 = vmatpush2.bf16.msra.mxu0 0
      %1236 = vmatprep.mubr.bf16.mxu0 0
      %1237 = vmatmul.mubr.bf16.gmra.mxu0 %v1152
      %v1238 = vpop.f32.mrf.mxu0
      %v1239 = vadd.f32 0.0, %v1238
      %v1240 = vpop.f32.mrf.mxu0
      %v1241 = vpop.f32.mrf.mxu0
      %v1242 = vpop.f32.mrf.mxu0
      %1243 = vdwg.mxu0
      %v1244 = vadd.f32 %v1134, %v1198
      %v1245 = vadd.f32 %v1135, %v1200
      %v1246 = vadd.f32 %v1136, %v1239
      %v1247 = vld [vmem:[%s244] sm:$0xff]
      %1249 = vset.pattern.permute.xlu0 0
      %1250 = vperm.xlu0 %1249, %v1247
      %v1251 = vpop.permute.xlu0 %1250
      %v1253 = vadd.f32 %v1244, %v1251
      %v1254 = vadd.f32 %v1245, %v1251
      %v1255 = vadd.f32 %v1246, %v1251
      %v1256 = vmax.f32 %v1253, 0.0
      %v1257 = vmax.f32 %v1254, 0.0
      %v1258 = vmax.f32 %v1255, 0.0
      %v1259 = vld [vmem:[%s3] sm:$0x7]
      %v1261 = vlaneseq
      %v1262 = vshrl.u32 %v1261, 7
      %v1263 = vsub.s32 0, %v1262
      %v1264 = vrot.slane %v1259, %v1263
      %v1265 = vlaneseq
      %v1266 = vshrl.u32 %v1265, 7
      %v1267 = vsub.s32 1, %v1266
      %v1268 = vrot.slane %v1259, %v1267
      %v1269 = vlaneseq
      %v1270 = vshrl.u32 %v1269, 7
      %v1271 = vsub.s32 2, %v1270
      %v1272 = vrot.slane %v1259, %v1271
      %v1276 = vmul.f32 %v1256, %v1264
      %v1277 = vmul.f32 %v1257, %v1268
      %v1278 = vmul.f32 %v1258, %v1272
      %vm1279 = vcmask 199680
      %1280 = vst.msk [vmem:[%s253] sm:$0xf] %vm1279, 0
      %v1281 = vpack.c.bf16 %v1276, %v1276
      %v1282 = vpack.c.bf16 %v1277, %v1277
      %v1283 = vpack.c.bf16 %v1278, %v1278
      %v1287 = vunpack.c.l.b16 %v1281
      %v1288 = vunpack.c.l.b16 %v1282
      %v1289 = vunpack.c.l.b16 %v1283
      %v1290 = vpack.c.b16 %v1288, %v1287
      %v1291 = vpack.c.b16 %v1289, %v1289
      %1292 = vrot.lane.b32.xlu0 %v1290, 25
      %v1293 = vpop.permute.xlu0 %1292
      %1294 = vrot.lane.b32.xlu0 %v1291, 25
      %v1295 = vpop.permute.xlu0 %1294
      %v1296 = vrot.slane %v1293, 4
      %v1297 = vrot.slane %v1295, 4
      %vm1298 = vcmask 203776
      %v1299 = vsel %vm1298, %v1296, %v1293
      %vm1300 = vcmask 1043456
      %v1301 = vsel %vm1300, %v1296, %v1297
      %v1302 = vsel %vm1298, %v1301, %v1295
      %vm1305 = vcmask 1043656
      %vm1306 = vcmask 1047556
      %vm1307 = vmor %vm1306, %vm1305
      %1308 = vst.msk [vmem:[%s253] sm:$0xff] %vm1307, %v1299
      %vm1309 = vcmask 203780
      %vm1310 = vmor %vm1309, %vm290
      %1311 = vst.msk [vmem:[%s253 + $0x8] sm:$0xff] %vm1310, %v1302
      %vm1312 = vcmask 584904
      %1313 = vst.msk [vmem:[%s253 + $0xc] sm:$0xf] %vm1312, 0
      %p1314 = scmp.lt.s32.totalorder %s19, 1
      %s1315 = scalar_select %p1314, %s19, 1
      %p1316 = scmp.lt.s32.totalorder %s20, 0
      %s1317 = scalar_select %p1316, %s20, 0
      %s1318 = smul.addr %s1317, 4
      %s1319 = smul.addr %s1315, 4
      %s1320 = sadd.s32 %s1318, %s1319
      %s1321 = smul.addr %s1320, 4
      %s1322 = scalar_lea.vmem %s4, %s1321
      // Predicated region
      $region37: #{rep_block_forward.3} parent=35 // pred_check
        %p1323 = pneg %p146
      $region38: #{rep_block_forward.3} parent=35 // pred_check_branch
        %1325 = sbr.rel (%p1323) target = $region40
      $region39: #{rep_block_forward.3} parent=35 // pred_region
        _
      $region40: #{rep_block_forward.3} parent=35 // pred_fallthru
        _
    $region36: #{rep_block_forward.3} parent=5 // pred_fallthru
      _
    %p1326 = scmp.le.s32.totalorder 2, %s10
    // Predicated region
    $region41: #{rep_block_forward.3} parent=5 // pred_check
      %p1327 = pneg %p1326
    $region42: #{rep_block_forward.3} parent=5 // pred_check_branch
      %1329 = sbr.rel (%p1327) target = $region44
    $region43: #{rep_block_forward.3} parent=5 // pred_region
      %s1330 = ssub.s32 %s10, 2
      // Predicated region
      $region45: #{rep_block_forward.3} parent=43 // pred_check
        %p1331 = pneg %p152
      $region46: #{rep_block_forward.3} parent=43 // pred_check_branch
        %1333 = sbr.rel (%p1331) target = $region48
      $region47: #{rep_block_forward.3} parent=43 // pred_region
        %p1334 = scmp.lt.s32.totalorder %s21, 1
        %s1335 = scalar_select %p1334, %s21, 1
        %p1336 = scmp.lt.s32.totalorder %s22, 0
        %s1337 = scalar_select %p1336, %s22, 0
        %s1338 = smul.addr %s1337, 4
        %s1339 = smul.addr %s1335, 4
        %s1340 = sadd.s32 %s1338, %s1339
        %s1341 = smul.addr %s1340, 4
        %s1342 = scalar_lea.vmem %s4, %s1341
      $region48: #{rep_block_forward.3} parent=43 // pred_fallthru
        _
    $region44: #{rep_block_forward.3} parent=5 // pred_fallthru
      _
  $region6: #{rep_block_forward.3} parent=0 // loop_footer
    %s14 = sadd.s32 1, %s10
  $region7: #{rep_block_forward.3} parent=0 // loop_footer_branch
    %9 = sbr.rel target = $region3
  $region8: #{rep_block_forward.3} parent=0 // loop_exit
    _

// kernel: rep_block_forward.2
$region0: #{rep_block_forward.2}
  #allocation0 [shape = 'u32[]', space=smem, size = 0x4, offset = 0x4, fixed_abs, tag = 'smem constant byte address 0x4 - core index']
  #allocation1 [shape = 'u32[144,128]{1,0:T(1,128)}', space=vmem, size = 0x12000, scoped, tag = 'internal scratch']
  %s0 = inlined_call_operand.vmem [shape: bf16[2,4,456], index: 0, kind: input, shape index: {}]
  %s1 = inlined_call_operand.vmem [shape: bf16[8,36], index: 1, kind: input, shape index: {}]
  %s2 = inlined_call_operand.vmem [shape: f32[8,1], index: 2, kind: input, shape index: {}]
  %s3 = inlined_call_operand.vmem [shape: f32[1,384], index: 3, kind: input, shape index: {}]
  %s4 = inlined_call_operand.vmem [shape: bf16[2,8,456], index: 4, kind: output, shape index: {}]
  %s5 = sld [smem:[#allocation0]]
  $region49: #{rep_block_forward.2} parent=0
    _
  %s7 = ssub.s32 1, %s5
  %s8 = scalar_select 0, %s7, %s5
  loop: start=0, step=1, limit=4
  $region2: #{rep_block_forward.2} parent=0 // loop_pre_header
    _
  $region3: #{rep_block_forward.2} parent=0 // loop_header
    %s10 = sphi 0, %s14
    %p11 = scmp.ge.s32.totalorder %s10, 4
    %s17 = sphi 0, %s29
    %s18 = sphi 0, %s25
    %s19 = sphi 0, %s17
    %s20 = sphi 0, %s18
    %s21 = sphi 0, %s19
    %s22 = sphi 0, %s20
    %s32 = sphi 0, %s34
    %s35 = sphi 0, %s32
    %s36 = sphi 0, %s35
    %s52 = sphi 0, %s36
    %s58 = sphi 0, %s60
    %s61 = sphi 0, %s58
    %s62 = sphi 0, %s61
    %s78 = sphi 0, %s62
    %s84 = sphi 0, %s86
    %s87 = sphi 0, %s84
    %s88 = sphi 0, %s87
    %s104 = sphi 0, %s88
    %s108 = sphi 0, %s108
    %s110 = sphi 0, %s108
    %s111 = sphi 0, %s110
    %s125 = sphi 0, %s111
    %s133 = sphi 0, %s135
    %s136 = sphi 0, %s133
    %s137 = sphi 0, %s136
    %s153 = sphi 0, %s137
  $region4: #{rep_block_forward.2} parent=0 // loop_header_branch
    %13 = sbr.rel (%p11) target = $region8
  $region5: #{rep_block_forward.2} parent=0 // loop_body
    %s15 = ssub.s32 %s10, 1
    %s16 = ssub.s32 %s10, 2
    %s23 = sadd.s32 1, %s18
    %p24 = scmp.ge.s32.totalorder %s23, 1
    %s25 = scalar_select %p24, 0, %s23
    %s26 = sadd.s32 1, %s17
    %s27 = scalar_select %p24, %s26, %s17
    %p28 = scmp.ge.s32.totalorder %s27, 2
    %s29 = scalar_select %p28, 0, %s27
    %s30 = ssub.s32 %s17, %s29
    %p31 = scmp.eq.s32.totalorder %s30, 0
    %s33 = sadd.s32 %s32, 1
    %s34 = scalar_select %p31, %s32, %s33
    %p37 = pneg %p31
    %p38 = scmp.eq.s32.totalorder %s10, 1
    %p39 = por %p37, %p38
    %p40 = scmp.ne.s32.totalorder %s32, %s35
    %p41 = scmp.eq.s32.totalorder %s10, 0
    %p42 = por %p40, %p41
    %p43 = scmp.ne.s32.totalorder %s32, %s35
    %p44 = scmp.eq.s32.totalorder %s15, 1
    %p45 = por %p43, %p44
    %p46 = scmp.ne.s32.totalorder %s35, %s36
    %p47 = scmp.eq.s32.totalorder %s15, 0
    %p48 = por %p46, %p47
    %p49 = scmp.ne.s32.totalorder %s35, %s36
    %p50 = scmp.eq.s32.totalorder %s16, 1
    %p51 = por %p49, %p50
    %p53 = scmp.ne.s32.totalorder %s36, %s52
    %p54 = scmp.eq.s32.totalorder %s16, 0
    %p55 = por %p53, %p54
    %s56 = ssub.s32 %s18, %s25
    %p57 = scmp.eq.s32.totalorder %s56, 0
    %s59 = sadd.s32 %s58, 1
    %s60 = scalar_select %p57, %s58, %s59
    %p63 = pneg %p57
    %p64 = scmp.eq.s32.totalorder %s10, 1
    %p65 = por %p63, %p64
    %p66 = scmp.ne.s32.totalorder %s58, %s61
    %p67 = scmp.eq.s32.totalorder %s10, 0
    %p68 = por %p66, %p67
    %p69 = scmp.ne.s32.totalorder %s58, %s61
    %p70 = scmp.eq.s32.totalorder %s15, 1
    %p71 = por %p69, %p70
    %p72 = scmp.ne.s32.totalorder %s61, %s62
    %p73 = scmp.eq.s32.totalorder %s15, 0
    %p74 = por %p72, %p73
    %p75 = scmp.ne.s32.totalorder %s61, %s62
    %p76 = scmp.eq.s32.totalorder %s16, 1
    %p77 = por %p75, %p76
    %p79 = scmp.ne.s32.totalorder %s62, %s78
    %p80 = scmp.eq.s32.totalorder %s16, 0
    %p81 = por %p79, %p80
    %s82 = ssub.s32 %s18, %s25
    %p83 = scmp.eq.s32.totalorder %s82, 0
    %s85 = sadd.s32 %s84, 1
    %s86 = scalar_select %p83, %s84, %s85
    %p89 = pneg %p83
    %p90 = scmp.eq.s32.totalorder %s10, 1
    %p91 = por %p89, %p90
    %p92 = scmp.ne.s32.totalorder %s84, %s87
    %p93 = scmp.eq.s32.totalorder %s10, 0
    %p94 = por %p92, %p93
    %p95 = scmp.ne.s32.totalorder %s84, %s87
    %p96 = scmp.eq.s32.totalorder %s15, 1
    %p97 = por %p95, %p96
    %p98 = scmp.ne.s32.totalorder %s87, %s88
    %p99 = scmp.eq.s32.totalorder %s15, 0
    %p100 = por %p98, %p99
    %p101 = scmp.ne.s32.totalorder %s87, %s88
    %p102 = scmp.eq.s32.totalorder %s16, 1
    %p103 = por %p101, %p102
    %p105 = scmp.ne.s32.totalorder %s88, %s104
    %p106 = scmp.eq.s32.totalorder %s16, 0
    %p107 = por %p105, %p106
    %s109 = sadd.s32 %s108, 1
    %p112 = scmp.eq.s32.totalorder %s10, 1
    %p113 = scmp.ne.s32.totalorder %s108, %s110
    %p114 = scmp.eq.s32.totalorder %s10, 0
    %p115 = por %p113, %p114
    %p116 = scmp.ne.s32.totalorder %s108, %s110
    %p117 = scmp.eq.s32.totalorder %s15, 1
    %p118 = por %p116, %p117
    %p119 = scmp.ne.s32.totalorder %s110, %s111
    %p120 = scmp.eq.s32.totalorder %s15, 0
    %p121 = por %p119, %p120
    %p122 = scmp.ne.s32.totalorder %s110, %s111
    %p123 = scmp.eq.s32.totalorder %s16, 1
    %p124 = por %p122, %p123
    %p126 = scmp.ne.s32.totalorder %s111, %s125
    %p127 = scmp.eq.s32.totalorder %s16, 0
    %p128 = por %p126, %p127
    %s129 = ssub.s32 %s17, %s29
    %s130 = ssub.s32 %s18, %s25
    %s131 = sor.u32 %s129, %s130
    %p132 = scmp.eq.s32.totalorder %s131, 0
    %s134 = sadd.s32 %s133, 1
    %s135 = scalar_select %p132, %s133, %s134
    %p138 = pneg %p132
    %p139 = scmp.eq.s32.totalorder %s10, 1
    %p140 = por %p138, %p139
    %p141 = scmp.ne.s32.totalorder %s133, %s136
    %p142 = scmp.eq.s32.totalorder %s10, 0
    %p143 = por %p141, %p142
    %p144 = scmp.ne.s32.totalorder %s133, %s136
    %p145 = scmp.eq.s32.totalorder %s15, 1
    %p146 = por %p144, %p145
    %p147 = scmp.ne.s32.totalorder %s136, %s137
    %p148 = scmp.eq.s32.totalorder %s15, 0
    %p149 = por %p147, %p148
    %p150 = scmp.ne.s32.totalorder %s136, %s137
    %p151 = scmp.eq.s32.totalorder %s16, 1
    %p152 = por %p150, %p151
    %p154 = scmp.ne.s32.totalorder %s137, %s153
    %p155 = scmp.eq.s32.totalorder %s16, 0
    %p156 = por %p154, %p155
    %p157 = scmp.le.s32.totalorder 1, %s10
    %p158 = scmp.lt.s32.totalorder %s10, 3
    %p159 = pnand %p157, %p158
    %p160 = pneg %p159
    // Predicated region
    $region9: #{rep_block_forward.2} parent=5 // pred_check
      _
    $region10: #{rep_block_forward.2} parent=5 // pred_check_branch
      %162 = sbr.rel (%p159) target = $region12
    $region11: #{rep_block_forward.2} parent=5 // pred_region
      %s163 = ssub.s32 %s10, 1
      // Predicated region
      $region13: #{rep_block_forward.2} parent=11 // pred_check
        %p164 = pneg %p74
      $region14: #{rep_block_forward.2} parent=11 // pred_check_branch
        %166 = sbr.rel (%p164) target = $region16
      $region15: #{rep_block_forward.2} parent=11 // pred_region
        %p167 = scmp.lt.s32.totalorder %s20, 0
        %s168 = scalar_select %p167, %s20, 0
        %s169 = smul.addr %s168, 4
        %s170 = scalar_lea.vmem %s1, %s169
      $region16: #{rep_block_forward.2} parent=11 // pred_fallthru
        _
      // Predicated region
      $region17: #{rep_block_forward.2} parent=11 // pred_check
        %p171 = pneg %p100
      $region18: #{rep_block_forward.2} parent=11 // pred_check_branch
        %173 = sbr.rel (%p171) target = $region20
      $region19: #{rep_block_forward.2} parent=11 // pred_region
        %p174 = scmp.lt.s32.totalorder %s20, 0
        %s175 = scalar_select %p174, %s20, 0
        %s176 = smul.addr %s175, 8
        %s177 = scalar_lea.vmem %s2, %s176
      $region20: #{rep_block_forward.2} parent=11 // pred_fallthru
        _
      // Predicated region
      $region21: #{rep_block_forward.2} parent=11 // pred_check
        %p178 = pneg %p121
      $region22: #{rep_block_forward.2} parent=11 // pred_check_branch
        %180 = sbr.rel (%p178) target = $region24
      $region23: #{rep_block_forward.2} parent=11 // pred_region
        _
      $region24: #{rep_block_forward.2} parent=11 // pred_fallthru
        _
    $region12: #{rep_block_forward.2} parent=5 // pred_fallthru
      _
    %p181 = scmp.lt.s32.totalorder %s10, 2
    // Predicated region
    $region25: #{rep_block_forward.2} parent=5 // pred_check
      %p182 = pneg %p181
    $region26: #{rep_block_forward.2} parent=5 // pred_check_branch
      %184 = sbr.rel (%p182) target = $region28
    $region27: #{rep_block_forward.2} parent=5 // pred_region
      // Predicated region
      $region29: #{rep_block_forward.2} parent=27 // pred_check
        %p185 = pneg %p42
      $region30: #{rep_block_forward.2} parent=27 // pred_check_branch
        %187 = sbr.rel (%p185) target = $region32
      $region31: #{rep_block_forward.2} parent=27 // pred_region
        %p188 = scmp.lt.s32.totalorder %s17, 1
        %s189 = scalar_select %p188, %s17, 1
        %s190 = smul.addr %s189, 4
        %s191 = smul.addr %s190, 2
        %s192 = scalar_lea.vmem %s0, %s191
      $region32: #{rep_block_forward.2} parent=27 // pred_fallthru
        _
    $region28: #{rep_block_forward.2} parent=5 // pred_fallthru
      _
    %p193 = scmp.le.s32.totalorder 1, %s10
    %p194 = scmp.lt.s32.totalorder %s10, 3
    %p195 = pnand %p193, %p194
    %p196 = pneg %p195
    // Predicated region
    $region33: #{rep_block_forward.2} parent=5 // pred_check
      _
    $region34: #{rep_block_forward.2} parent=5 // pred_check_branch
      %198 = sbr.rel (%p195) target = $region36
    $region35: #{rep_block_forward.2} parent=5 // pred_region
      %s199 = ssub.s32 %s10, 1
      %p200 = scmp.lt.s32.totalorder %s19, 1
      %s201 = scalar_select %p200, %s19, 1
      %s202 = smul.addr %s201, 4
      %s203 = smul.addr %s202, 2
      %s204 = scalar_lea.vmem %s0, %s203
      %p205 = pneg %p48
      %p206 = pneg %p45
      %p207 = scmp.lt.s32.totalorder %s20, 0
      %s208 = scalar_select %p207, %s20, 0
      %s209 = smul.addr %s208, 4
      %s210 = scalar_lea.vmem %s1, %s209
      %p211 = pneg %p74
      %p212 = pneg %p71
      %p213 = scmp.lt.s32.totalorder %s20, 0
      %s214 = scalar_select %p213, %s20, 0
      %s215 = smul.addr %s214, 8
      %s216 = scalar_lea.vmem %s2, %s215
      %p217 = pneg %p100
      %p218 = pneg %p97
      %p219 = pneg %p121
      %p220 = pneg %p118
      %p221 = pneg %p149
      %p222 = pneg %p146
      %p223 = scmp.lt.s32.totalorder %s19, 1
      %s224 = scalar_select %p223, %s19, 1
      %p225 = scmp.lt.s32.totalorder %s20, 0
      %s226 = scalar_select %p225, %s20, 0
      %s227 = smul.addr %s226, 4
      %s228 = smul.addr %s224, 4
      %s229 = sadd.s32 %s227, %s228
      %s230 = smul.addr %s229, 4
      %s231 = scalar_lea.vmem %s4, %s230
      %p232 = scmp.lt.s32.totalorder %s19, 1
      %s233 = scalar_select %p232, %s19, 1
      %s234 = smul.addr %s233, 4
      %s235 = smul.addr %s234, 2
      %s236 = scalar_lea.vmem %s0, %s235
      %p237 = scmp.lt.s32.totalorder %s20, 0
      %s238 = scalar_select %p237, %s20, 0
      %s239 = smul.addr %s238, 4
      %s240 = scalar_lea.vmem %s1, %s239
      %p241 = scmp.lt.s32.totalorder %s20, 0
      %s242 = scalar_select %p241, %s20, 0
      %s243 = smul.addr %s242, 8
      %s244 = scalar_lea.vmem %s2, %s243
      %p245 = scmp.lt.s32.totalorder %s19, 1
      %s246 = scalar_select %p245, %s19, 1
      %p247 = scmp.lt.s32.totalorder %s20, 0
      %s248 = scalar_select %p247, %s20, 0
      %s249 = smul.addr %s248, 4
      %s250 = smul.addr %s246, 4
      %s251 = sadd.s32 %s249, %s250
      %s252 = smul.addr %s251, 4
      %s253 = scalar_lea.vmem %s4, %s252
      %v255 = vld [vmem:[%s236] sm:$0x3f]
      %v256 = vld [vmem:[%s240] sm:$0xf]
      %v257 = vld [vmem:[%s236] sm:$0xff]
      %v259 = vunpack.c.l.b16 %v256
      %v260 = vpack.c.b16 %v259, %v259
      %261 = vrot.lane.b32.xlu0 %v260, 124
      %v262 = vpop.permute.xlu0 %261
      %v264 = vcombine.high %v257, %v257
      %v266 = vunpack.c.l.s4 1983009808
      %v267 = vunpack.c.0.s8 %v266
      %v268 = vlaneseq
      %v269 = vshrl.u32 %v268, 7
      %v270 = vsub.s32 %v267, %v269
      %v271 = vrot.slane %v257, %v270
      %v273 = vunpack.c.l.s4 1983009808
      %v274 = vunpack.c.0.s8 %v273
      %v275 = vlaneseq
      %v276 = vshrl.u32 %v275, 7
      %v277 = vsub.s32 %v274, %v276
      %v278 = vrot.slane %v264, %v277
      %v279 = vcombine.high %v271, %v271
      %v280 = vcombine.high %v278, %v278
      %281 = vrot.lane.b32.xlu0 %v271, 127
      %v282 = vpop.permute.xlu0 %281
      %283 = vrot.lane.b32.xlu0 %v279, 127
      %v284 = vpop.permute.xlu0 %283
      %285 = vrot.lane.b32.xlu0 %v278, 127
      %v286 = vpop.permute.xlu0 %285
      %287 = vrot.lane.b32.xlu0 %v280, 127
      %v288 = vpop.permute.xlu0 %287
      %vm289 = vcmask 1039360
      %v290 = vsel %vm289, %v282, %v284
      %v291 = vsel %vm289, %v284, %v286
      %v292 = vsel %vm289, %v286, %v288
      %vm293 = vcmask 31744
      %v295 = vsel %vm293, %v262, 0
      %vm297 = vcmask 1041408
      %v299 = vsel %vm297, %v290, 0
      %v302 = vsel %vm297, %v291, 0
      %v305 = vsel %vm297, %v292, 0
      %307 = vmatprep.subr.bf16.mxu0 0
      %308 = vmatpush1.bf16.msra.mxu0 0
      %309 = vmatprep.subr.bf16.mxu0 0
      %310 = vmatpush1.bf16.msra.mxu0 0
      %311 = vmatprep.subr.bf16.mxu0 0
      %312 = vmatpush1.bf16.msra.mxu0 0
      %313 = vmatprep.subr.bf16.mxu0 0
      %314 = vmatpush1.bf16.msra.mxu0 0
      %315 = vmatprep.subr.bf16.mxu0 0
      %316 = vmatpush1.bf16.msra.mxu0 0
      %317 = vmatprep.subr.bf16.mxu0 0
      %318 = vmatpush1.bf16.msra.mxu0 0
      %319 = vmatprep.subr.bf16.mxu0 0
      %320 = vmatpush1.bf16.msra.mxu0 0
      %321 = vmatprep.subr.bf16.mxu0 %v302
      %322 = vmatpush1.bf16.msra.mxu0 %v299
      %323 = vmatprep.subr.bf16.mxu0 0
      %324 = vmatpush2.bf16.msra.mxu0 0
      %325 = vmatprep.subr.bf16.mxu0 0
      %326 = vmatpush2.bf16.msra.mxu0 0
      %327 = vmatprep.subr.bf16.mxu0 0
      %328 = vmatpush2.bf16.msra.mxu0 0
      %329 = vmatprep.subr.bf16.mxu0 0
      %330 = vmatpush2.bf16.msra.mxu0 0
      %331 = vmatprep.subr.bf16.mxu0 0
      %332 = vmatpush2.bf16.msra.mxu0 0
      %333 = vmatprep.subr.bf16.mxu0 0
      %334 = vmatpush2.bf16.msra.mxu0 0
      %335 = vmatprep.subr.bf16.mxu0 0
      %336 = vmatpush2.bf16.msra.mxu0 0
      %337 = vmatprep.subr.bf16.mxu0 0
      %338 = vmatpush2.bf16.msra.mxu0 0
      %339 = vmatprep.mubr.bf16.mxu0 0
      %340 = vmatmul.mubr.bf16.gmra.mxu0 %v295
      %v341 = vpop.f32.mrf.mxu0
      %v342 = vadd.f32 0.0, %v341
      %v343 = vpop.f32.mrf.mxu0
      %v344 = vadd.f32 0.0, %v343
      %v345 = vpop.f32.mrf.mxu0
      %v346 = vpop.f32.mrf.mxu0
      %347 = vdwg.mxu0
      %348 = vmatprep.subr.bf16.mxu0 0
      %349 = vmatpush1.bf16.msra.mxu0 0
      %350 = vmatprep.subr.bf16.mxu0 0
      %351 = vmatpush1.bf16.msra.mxu0 0
      %352 = vmatprep.subr.bf16.mxu0 0
      %353 = vmatpush1.bf16.msra.mxu0 0
      %354 = vmatprep.subr.bf16.mxu0 0
      %355 = vmatpush1.bf16.msra.mxu0 0
      %356 = vmatprep.subr.bf16.mxu0 0
      %357 = vmatpush1.bf16.msra.mxu0 0
      %358 = vmatprep.subr.bf16.mxu0 0
      %359 = vmatpush1.bf16.msra.mxu0 0
      %360 = vmatprep.subr.bf16.mxu0 0
      %361 = vmatpush1.bf16.msra.mxu0 0
      %362 = vmatprep.subr.bf16.mxu0 0
      %363 = vmatpush1.bf16.msra.mxu0 %v305
      %364 = vmatprep.subr.bf16.mxu0 0
      %365 = vmatpush2.bf16.msra.mxu0 0
      %366 = vmatprep.subr.bf16.mxu0 0
      %367 = vmatpush2.bf16.msra.mxu0 0
      %368 = vmatprep.subr.bf16.mxu0 0
      %369 = vmatpush2.bf16.msra.mxu0 0
      %370 = vmatprep.subr.bf16.mxu0 0
      %371 = vmatpush2.bf16.msra.mxu0 0
      %372 = vmatprep.subr.bf16.mxu0 0
      %373 = vmatpush2.bf16.msra.mxu0 0
      %374 = vmatprep.subr.bf16.mxu0 0
      %375 = vmatpush2.bf16.msra.mxu0 0
      %376 = vmatprep.subr.bf16.mxu0 0
      %377 = vmatpush2.bf16.msra.mxu0 0
      %378 = vmatprep.subr.bf16.mxu0 0
      %379 = vmatpush2.bf16.msra.mxu0 0
      %380 = vmatprep.mubr.bf16.mxu0 0
      %381 = vmatmul.mubr.bf16.gmra.mxu0 %v295
      %v382 = vpop.f32.mrf.mxu0
      %v383 = vadd.f32 0.0, %v382
      %v384 = vpop.f32.mrf.mxu0
      %v385 = vpop.f32.mrf.mxu0
      %v386 = vpop.f32.mrf.mxu0
      %387 = vdwg.mxu0
      %v389 = vcombine.high %v255, %v255
      %v391 = vunpack.c.l.s4 1983009808
      %v392 = vunpack.c.0.s8 %v391
      %v393 = vlaneseq
      %v394 = vshrl.u32 %v393, 7
      %v395 = vsub.s32 %v392, %v394
      %v396 = vrot.slane %v255, %v395
      %v398 = vunpack.c.l.s4 1983009808
      %v399 = vunpack.c.0.s8 %v398
      %v400 = vlaneseq
      %v401 = vshrl.u32 %v400, 7
      %v402 = vsub.s32 %v399, %v401
      %v403 = vrot.slane %v389, %v402
      %v404 = vcombine.high %v396, %v396
      %v406 = vsel %vm293, %v256, 0
      %v409 = vsel %vm297, %v396, 0
      %v412 = vsel %vm297, %v404, 0
      %v415 = vsel %vm297, %v403, 0
      %417 = vmatprep.subr.bf16.mxu0 0
      %418 = vmatpush1.bf16.msra.mxu0 0
      %419 = vmatprep.subr.bf16.mxu0 0
      %420 = vmatpush1.bf16.msra.mxu0 0
      %421 = vmatprep.subr.bf16.mxu0 0
      %422 = vmatpush1.bf16.msra.mxu0 0
      %423 = vmatprep.subr.bf16.mxu0 0
      %424 = vmatpush1.bf16.msra.mxu0 0
      %425 = vmatprep.subr.bf16.mxu0 0
      %426 = vmatpush1.bf16.msra.mxu0 0
      %427 = vmatprep.subr.bf16.mxu0 0
      %428 = vmatpush1.bf16.msra.mxu0 0
      %429 = vmatprep.subr.bf16.mxu0 0
      %430 = vmatpush1.bf16.msra.mxu0 0
      %431 = vmatprep.subr.bf16.mxu0 %v412
      %432 = vmatpush1.bf16.msra.mxu0 %v409
      %433 = vmatprep.subr.bf16.mxu0 0
      %434 = vmatpush2.bf16.msra.mxu0 0
      %435 = vmatprep.subr.bf16.mxu0 0
      %436 = vmatpush2.bf16.msra.mxu0 0
      %437 = vmatprep.subr.bf16.mxu0 0
      %438 = vmatpush2.bf16.msra.mxu0 0
      %439 = vmatprep.subr.bf16.mxu0 0
      %440 = vmatpush2.bf16.msra.mxu0 0
      %441 = vmatprep.subr.bf16.mxu0 0
      %442 = vmatpush2.bf16.msra.mxu0 0
      %443 = vmatprep.subr.bf16.mxu0 0
      %444 = vmatpush2.bf16.msra.mxu0 0
      %445 = vmatprep.subr.bf16.mxu0 0
      %446 = vmatpush2.bf16.msra.mxu0 0
      %447 = vmatprep.subr.bf16.mxu0 0
      %448 = vmatpush2.bf16.msra.mxu0 0
      %449 = vmatprep.mubr.bf16.mxu0 0
      %450 = vmatmul.mubr.bf16.gmra.mxu0 %v406
      %v451 = vpop.f32.mrf.mxu0
      %v452 = vadd.f32 %v342, %v451
      %v453 = vpop.f32.mrf.mxu0
      %v454 = vadd.f32 %v344, %v453
      %v455 = vpop.f32.mrf.mxu0
      %v456 = vpop.f32.mrf.mxu0
      %457 = vdwg.mxu0
      %458 = vmatprep.subr.bf16.mxu0 0
      %459 = vmatpush1.bf16.msra.mxu0 0
      %460 = vmatprep.subr.bf16.mxu0 0
      %461 = vmatpush1.bf16.msra.mxu0 0
      %462 = vmatprep.subr.bf16.mxu0 0
      %463 = vmatpush1.bf16.msra.mxu0 0
      %464 = vmatprep.subr.bf16.mxu0 0
      %465 = vmatpush1.bf16.msra.mxu0 0
      %466 = vmatprep.subr.bf16.mxu0 0
      %467 = vmatpush1.bf16.msra.mxu0 0
      %468 = vmatprep.subr.bf16.mxu0 0
      %469 = vmatpush1.bf16.msra.mxu0 0
      %470 = vmatprep.subr.bf16.mxu0 0
      %471 = vmatpush1.bf16.msra.mxu0 0
      %472 = vmatprep.subr.bf16.mxu0 0
      %473 = vmatpush1.bf16.msra.mxu0 %v415
      %474 = vmatprep.subr.bf16.mxu0 0
      %475 = vmatpush2.bf16.msra.mxu0 0
      %476 = vmatprep.subr.bf16.mxu0 0
      %477 = vmatpush2.bf16.msra.mxu0 0
      %478 = vmatprep.subr.bf16.mxu0 0
      %479 = vmatpush2.bf16.msra.mxu0 0
      %480 = vmatprep.subr.bf16.mxu0 0
      %481 = vmatpush2.bf16.msra.mxu0 0
      %482 = vmatprep.subr.bf16.mxu0 0
      %483 = vmatpush2.bf16.msra.mxu0 0
      %484 = vmatprep.subr.bf16.mxu0 0
      %485 = vmatpush2.bf16.msra.mxu0 0
      %486 = vmatprep.subr.bf16.mxu0 0
      %487 = vmatpush2.bf16.msra.mxu0 0
      %488 = vmatprep.subr.bf16.mxu0 0
      %489 = vmatpush2.bf16.msra.mxu0 0
      %490 = vmatprep.mubr.bf16.mxu0 0
      %491 = vmatmul.mubr.bf16.gmra.mxu0 %v406
      %v492 = vpop.f32.mrf.mxu0
      %v493 = vadd.f32 %v383, %v492
      %v494 = vpop.f32.mrf.mxu0
      %v495 = vpop.f32.mrf.mxu0
      %v496 = vpop.f32.mrf.mxu0
      %497 = vdwg.mxu0
      %v498 = vld [vmem:[%s236] sm:$0xff]
      %v499 = vld [vmem:[%s240] sm:$0xf]
      %v501 = vunpack.c.l.b16 %v499
      %v502 = vpack.c.b16 %v501, %v501
      %503 = vrot.lane.b32.xlu0 %v502, 120
      %v504 = vpop.permute.xlu0 %503
      %v506 = vcombine.high %v498, %v498
      %v508 = vunpack.c.l.s4 1983009808
      %v509 = vunpack.c.0.s8 %v508
      %v510 = vlaneseq
      %v511 = vshrl.u32 %v510, 7
      %v512 = vsub.s32 %v509, %v511
      %v513 = vrot.slane %v498, %v512
      %v515 = vunpack.c.l.s4 1983009808
      %v516 = vunpack.c.0.s8 %v515
      %v517 = vlaneseq
      %v518 = vshrl.u32 %v517, 7
      %v519 = vsub.s32 %v516, %v518
      %v520 = vrot.slane %v506, %v519
      %v521 = vcombine.high %v513, %v513
      %v522 = vcombine.high %v520, %v520
      %523 = vrot.lane.b32.xlu0 %v513, 126
      %v524 = vpop.permute.xlu0 %523
      %525 = vrot.lane.b32.xlu0 %v521, 126
      %v526 = vpop.permute.xlu0 %525
      %527 = vrot.lane.b32.xlu0 %v520, 126
      %v528 = vpop.permute.xlu0 %527
      %529 = vrot.lane.b32.xlu0 %v522, 126
      %v530 = vpop.permute.xlu0 %529
      %vm531 = vcmask 1031168
      %v532 = vsel %vm531, %v524, %v526
      %v533 = vsel %vm531, %v526, %v528
      %v534 = vsel %vm531, %v528, %v530
      %v536 = vsel %vm293, %v504, 0
      %v539 = vsel %vm297, %v532, 0
      %v542 = vsel %vm297, %v533, 0
      %v545 = vsel %vm297, %v534, 0
      %547 = vmatprep.subr.bf16.mxu0 0
      %548 = vmatpush1.bf16.msra.mxu0 0
      %549 = vmatprep.subr.bf16.mxu0 0
      %550 = vmatpush1.bf16.msra.mxu0 0
      %551 = vmatprep.subr.bf16.mxu0 0
      %552 = vmatpush1.bf16.msra.mxu0 0
      %553 = vmatprep.subr.bf16.mxu0 0
      %554 = vmatpush1.bf16.msra.mxu0 0
      %555 = vmatprep.subr.bf16.mxu0 0
      %556 = vmatpush1.bf16.msra.mxu0 0
      %557 = vmatprep.subr.bf16.mxu0 0
      %558 = vmatpush1.bf16.msra.mxu0 0
      %559 = vmatprep.subr.bf16.mxu0 0
      %560 = vmatpush1.bf16.msra.mxu0 0
      %561 = vmatprep.subr.bf16.mxu0 %v542
      %562 = vmatpush1.bf16.msra.mxu0 %v539
      %563 = vmatprep.subr.bf16.mxu0 0
      %564 = vmatpush2.bf16.msra.mxu0 0
      %565 = vmatprep.subr.bf16.mxu0 0
      %566 = vmatpush2.bf16.msra.mxu0 0
      %567 = vmatprep.subr.bf16.mxu0 0
      %568 = vmatpush2.bf16.msra.mxu0 0
      %569 = vmatprep.subr.bf16.mxu0 0
      %570 = vmatpush2.bf16.msra.mxu0 0
      %571 = vmatprep.subr.bf16.mxu0 0
      %572 = vmatpush2.bf16.msra.mxu0 0
      %573 = vmatprep.subr.bf16.mxu0 0
      %574 = vmatpush2.bf16.msra.mxu0 0
      %575 = vmatprep.subr.bf16.mxu0 0
      %576 = vmatpush2.bf16.msra.mxu0 0
      %577 = vmatprep.subr.bf16.mxu0 0
      %578 = vmatpush2.bf16.msra.mxu0 0
      %579 = vmatprep.mubr.bf16.mxu0 0
      %580 = vmatmul.mubr.bf16.gmra.mxu0 %v536
      %v581 = vpop.f32.mrf.mxu0
      %v582 = vadd.f32 0.0, %v581
      %v583 = vpop.f32.mrf.mxu0
      %v584 = vadd.f32 0.0, %v583
      %v585 = vpop.f32.mrf.mxu0
      %v586 = vpop.f32.mrf.mxu0
      %587 = vdwg.mxu0
      %588 = vmatprep.subr.bf16.mxu0 0
      %589 = vmatpush1.bf16.msra.mxu0 0
      %590 = vmatprep.subr.bf16.mxu0 0
      %591 = vmatpush1.bf16.msra.mxu0 0
      %592 = vmatprep.subr.bf16.mxu0 0
      %593 = vmatpush1.bf16.msra.mxu0 0
      %594 = vmatprep.subr.bf16.mxu0 0
      %595 = vmatpush1.bf16.msra.mxu0 0
      %596 = vmatprep.subr.bf16.mxu0 0
      %597 = vmatpush1.bf16.msra.mxu0 0
      %598 = vmatprep.subr.bf16.mxu0 0
      %599 = vmatpush1.bf16.msra.mxu0 0
      %600 = vmatprep.subr.bf16.mxu0 0
      %601 = vmatpush1.bf16.msra.mxu0 0
      %602 = vmatprep.subr.bf16.mxu0 0
      %603 = vmatpush1.bf16.msra.mxu0 %v545
      %604 = vmatprep.subr.bf16.mxu0 0
      %605 = vmatpush2.bf16.msra.mxu0 0
      %606 = vmatprep.subr.bf16.mxu0 0
      %607 = vmatpush2.bf16.msra.mxu0 0
      %608 = vmatprep.subr.bf16.mxu0 0
      %609 = vmatpush2.bf16.msra.mxu0 0
      %610 = vmatprep.subr.bf16.mxu0 0
      %611 = vmatpush2.bf16.msra.mxu0 0
      %612 = vmatprep.subr.bf16.mxu0 0
      %613 = vmatpush2.bf16.msra.mxu0 0
      %614 = vmatprep.subr.bf16.mxu0 0
      %615 = vmatpush2.bf16.msra.mxu0 0
      %616 = vmatprep.subr.bf16.mxu0 0
      %617 = vmatpush2.bf16.msra.mxu0 0
      %618 = vmatprep.subr.bf16.mxu0 0
      %619 = vmatpush2.bf16.msra.mxu0 0
      %620 = vmatprep.mubr.bf16.mxu0 0
      %621 = vmatmul.mubr.bf16.gmra.mxu0 %v536
      %v622 = vpop.f32.mrf.mxu0
      %v623 = vadd.f32 0.0, %v622
      %v624 = vpop.f32.mrf.mxu0
      %v625 = vpop.f32.mrf.mxu0
      %v626 = vpop.f32.mrf.mxu0
      %627 = vdwg.mxu0
      %v628 = vadd.f32 %v452, %v582
      %v629 = vadd.f32 %v454, %v584
      %v630 = vadd.f32 %v493, %v623
      %v631 = vld [vmem:[%s236] sm:$0xff]
      %v632 = vld [vmem:[%s240] sm:$0xf]
      %v634 = vunpack.c.l.b16 %v632
      %v635 = vpack.c.b16 %v634, %v634
      %636 = vrot.lane.b32.xlu0 %v635, 116
      %v637 = vpop.permute.xlu0 %636
      %v639 = vcombine.high %v631, %v631
      %v641 = vunpack.c.l.s4 1983009808
      %v642 = vunpack.c.0.s8 %v641
      %v643 = vlaneseq
      %v644 = vshrl.u32 %v643, 7
      %v645 = vsub.s32 %v642, %v644
      %v646 = vrot.slane %v631, %v645
      %v648 = vunpack.c.l.s4 1983009808
      %v649 = vunpack.c.0.s8 %v648
      %v650 = vlaneseq
      %v651 = vshrl.u32 %v650, 7
      %v652 = vsub.s32 %v649, %v651
      %v653 = vrot.slane %v639, %v652
      %v654 = vcombine.high %v646, %v646
      %v655 = vcombine.high %v653, %v653
      %656 = vrot.lane.b32.xlu0 %v646, 104
      %v657 = vpop.permute.xlu0 %656
      %658 = vrot.lane.b32.xlu0 %v654, 104
      %v659 = vpop.permute.xlu0 %658
      %660 = vrot.lane.b32.xlu0 %v653, 104
      %v661 = vpop.permute.xlu0 %660
      %662 = vrot.lane.b32.xlu0 %v655, 104
      %v663 = vpop.permute.xlu0 %662
      %vm664 = vcmask 850944
      %v665 = vsel %vm664, %v657, %v659
      %v666 = vsel %vm664, %v659, %v661
      %v667 = vsel %vm664, %v661, %v663
      %v669 = vsel %vm293, %v637, 0
      %v672 = vsel %vm297, %v665, 0
      %v675 = vsel %vm297, %v666, 0
      %v678 = vsel %vm297, %v667, 0
      %680 = vmatprep.subr.bf16.mxu0 0
      %681 = vmatpush1.bf16.msra.mxu0 0
      %682 = vmatprep.subr.bf16.mxu0 0
      %683 = vmatpush1.bf16.msra.mxu0 0
      %684 = vmatprep.subr.bf16.mxu0 0
      %685 = vmatpush1.bf16.msra.mxu0 0
      %686 = vmatprep.subr.bf16.mxu0 0
      %687 = vmatpush1.bf16.msra.mxu0 0
      %688 = vmatprep.subr.bf16.mxu0 0
      %689 = vmatpush1.bf16.msra.mxu0 0
      %690 = vmatprep.subr.bf16.mxu0 0
      %691 = vmatpush1.bf16.msra.mxu0 0
      %692 = vmatprep.subr.bf16.mxu0 0
      %693 = vmatpush1.bf16.msra.mxu0 0
      %694 = vmatprep.subr.bf16.mxu0 %v675
      %695 = vmatpush1.bf16.msra.mxu0 %v672
      %696 = vmatprep.subr.bf16.mxu0 0
      %697 = vmatpush2.bf16.msra.mxu0 0
      %698 = vmatprep.subr.bf16.mxu0 0
      %699 = vmatpush2.bf16.msra.mxu0 0
      %700 = vmatprep.subr.bf16.mxu0 0
      %701 = vmatpush2.bf16.msra.mxu0 0
      %702 = vmatprep.subr.bf16.mxu0 0
      %703 = vmatpush2.bf16.msra.mxu0 0
      %704 = vmatprep.subr.bf16.mxu0 0
      %705 = vmatpush2.bf16.msra.mxu0 0
      %706 = vmatprep.subr.bf16.mxu0 0
      %707 = vmatpush2.bf16.msra.mxu0 0
      %708 = vmatprep.subr.bf16.mxu0 0
      %709 = vmatpush2.bf16.msra.mxu0 0
      %710 = vmatprep.subr.bf16.mxu0 0
      %711 = vmatpush2.bf16.msra.mxu0 0
      %712 = vmatprep.mubr.bf16.mxu0 0
      %713 = vmatmul.mubr.bf16.gmra.mxu0 %v669
      %v714 = vpop.f32.mrf.mxu0
      %v715 = vadd.f32 0.0, %v714
      %v716 = vpop.f32.mrf.mxu0
      %v717 = vadd.f32 0.0, %v716
      %v718 = vpop.f32.mrf.mxu0
      %v719 = vpop.f32.mrf.mxu0
      %720 = vdwg.mxu0
      %721 = vmatprep.subr.bf16.mxu0 0
      %722 = vmatpush1.bf16.msra.mxu0 0
      %723 = vmatprep.subr.bf16.mxu0 0
      %724 = vmatpush1.bf16.msra.mxu0 0
      %725 = vmatprep.subr.bf16.mxu0 0
      %726 = vmatpush1.bf16.msra.mxu0 0
      %727 = vmatprep.subr.bf16.mxu0 0
      %728 = vmatpush1.bf16.msra.mxu0 0
      %729 = vmatprep.subr.bf16.mxu0 0
      %730 = vmatpush1.bf16.msra.mxu0 0
      %731 = vmatprep.subr.bf16.mxu0 0
      %732 = vmatpush1.bf16.msra.mxu0 0
      %733 = vmatprep.subr.bf16.mxu0 0
      %734 = vmatpush1.bf16.msra.mxu0 0
      %735 = vmatprep.subr.bf16.mxu0 0
      %736 = vmatpush1.bf16.msra.mxu0 %v678
      %737 = vmatprep.subr.bf16.mxu0 0
      %738 = vmatpush2.bf16.msra.mxu0 0
      %739 = vmatprep.subr.bf16.mxu0 0
      %740 = vmatpush2.bf16.msra.mxu0 0
      %741 = vmatprep.subr.bf16.mxu0 0
      %742 = vmatpush2.bf16.msra.mxu0 0
      %743 = vmatprep.subr.bf16.mxu0 0
      %744 = vmatpush2.bf16.msra.mxu0 0
      %745 = vmatprep.subr.bf16.mxu0 0
      %746 = vmatpush2.bf16.msra.mxu0 0
      %747 = vmatprep.subr.bf16.mxu0 0
      %748 = vmatpush2.bf16.msra.mxu0 0
      %749 = vmatprep.subr.bf16.mxu0 0
      %750 = vmatpush2.bf16.msra.mxu0 0
      %751 = vmatprep.subr.bf16.mxu0 0
      %752 = vmatpush2.bf16.msra.mxu0 0
      %753 = vmatprep.mubr.bf16.mxu0 0
      %754 = vmatmul.mubr.bf16.gmra.mxu0 %v669
      %v755 = vpop.f32.mrf.mxu0
      %v756 = vadd.f32 0.0, %v755
      %v757 = vpop.f32.mrf.mxu0
      %v758 = vpop.f32.mrf.mxu0
      %v759 = vpop.f32.mrf.mxu0
      %760 = vdwg.mxu0
      %v761 = vadd.f32 %v628, %v715
      %v762 = vadd.f32 %v629, %v717
      %v763 = vadd.f32 %v630, %v756
      %v764 = vld [vmem:[%s236] sm:$0xff]
      %v765 = vld [vmem:[%s240] sm:$0xf]
      %v767 = vunpack.c.l.b16 %v765
      %v768 = vpack.c.b16 %v767, %v767
      %769 = vrot.lane.b32.xlu0 %v768, 112
      %v770 = vpop.permute.xlu0 %769
      %v772 = vcombine.high %v764, %v764
      %v774 = vunpack.c.l.s4 1983009808
      %v775 = vunpack.c.0.s8 %v774
      %v776 = vlaneseq
      %v777 = vshrl.u32 %v776, 7
      %v778 = vsub.s32 %v775, %v777
      %v779 = vrot.slane %v764, %v778
      %v781 = vunpack.c.l.s4 1983009808
      %v782 = vunpack.c.0.s8 %v781
      %v783 = vlaneseq
      %v784 = vshrl.u32 %v783, 7
      %v785 = vsub.s32 %v782, %v784
      %v786 = vrot.slane %v772, %v785
      %v787 = vcombine.high %v779, %v779
      %v788 = vcombine.high %v786, %v786
      %789 = vrot.lane.b32.xlu0 %v779, 103
      %v790 = vpop.permute.xlu0 %789
      %791 = vrot.lane.b32.xlu0 %v787, 103
      %v792 = vpop.permute.xlu0 %791
      %793 = vrot.lane.b32.xlu0 %v786, 103
      %v794 = vpop.permute.xlu0 %793
      %795 = vrot.lane.b32.xlu0 %v788, 103
      %v796 = vpop.permute.xlu0 %795
      %vm797 = vcmask 842752
      %v798 = vsel %vm797, %v790, %v792
      %v799 = vsel %vm797, %v792, %v794
      %v800 = vsel %vm797, %v794, %v796
      %v802 = vsel %vm293, %v770, 0
      %v805 = vsel %vm297, %v798, 0
      %v808 = vsel %vm297, %v799, 0
      %v811 = vsel %vm297, %v800, 0
      %813 = vmatprep.subr.bf16.mxu0 0
      %814 = vmatpush1.bf16.msra.mxu0 0
      %815 = vmatprep.subr.bf16.mxu0 0
      %816 = vmatpush1.bf16.msra.mxu0 0
      %817 = vmatprep.subr.bf16.mxu0 0
      %818 = vmatpush1.bf16.msra.mxu0 0
      %819 = vmatprep.subr.bf16.mxu0 0
      %820 = vmatpush1.bf16.msra.mxu0 0
      %821 = vmatprep.subr.bf16.mxu0 0
      %822 = vmatpush1.bf16.msra.mxu0 0
      %823 = vmatprep.subr.bf16.mxu0 0
      %824 = vmatpush1.bf16.msra.mxu0 0
      %825 = vmatprep.subr.bf16.mxu0 0
      %826 = vmatpush1.bf16.msra.mxu0 0
      %827 = vmatprep.subr.bf16.mxu0 %v808
      %828 = vmatpush1.bf16.msra.mxu0 %v805
      %829 = vmatprep.subr.bf16.mxu0 0
      %830 = vmatpush2.bf16.msra.mxu0 0
      %831 = vmatprep.subr.bf16.mxu0 0
      %832 = vmatpush2.bf16.msra.mxu0 0
      %833 = vmatprep.subr.bf16.mxu0 0
      %834 = vmatpush2.bf16.msra.mxu0 0
      %835 = vmatprep.subr.bf16.mxu0 0
      %836 = vmatpush2.bf16.msra.mxu0 0
      %837 = vmatprep.subr.bf16.mxu0 0
      %838 = vmatpush2.bf16.msra.mxu0 0
      %839 = vmatprep.subr.bf16.mxu0 0
      %840 = vmatpush2.bf16.msra.mxu0 0
      %841 = vmatprep.subr.bf16.mxu0 0
      %842 = vmatpush2.bf16.msra.mxu0 0
      %843 = vmatprep.subr.bf16.mxu0 0
      %844 = vmatpush2.bf16.msra.mxu0 0
      %845 = vmatprep.mubr.bf16.mxu0 0
      %846 = vmatmul.mubr.bf16.gmra.mxu0 %v802
      %v847 = vpop.f32.mrf.mxu0
      %v848 = vadd.f32 0.0, %v847
      %v849 = vpop.f32.mrf.mxu0
      %v850 = vadd.f32 0.0, %v849
      %v851 = vpop.f32.mrf.mxu0
      %v852 = vpop.f32.mrf.mxu0
      %853 = vdwg.mxu0
      %854 = vmatprep.subr.bf16.mxu0 0
      %855 = vmatpush1.bf16.msra.mxu0 0
      %856 = vmatprep.subr.bf16.mxu0 0
      %857 = vmatpush1.bf16.msra.mxu0 0
      %858 = vmatprep.subr.bf16.mxu0 0
      %859 = vmatpush1.bf16.msra.mxu0 0
      %860 = vmatprep.subr.bf16.mxu0 0
      %861 = vmatpush1.bf16.msra.mxu0 0
      %862 = vmatprep.subr.bf16.mxu0 0
      %863 = vmatpush1.bf16.msra.mxu0 0
      %864 = vmatprep.subr.bf16.mxu0 0
      %865 = vmatpush1.bf16.msra.mxu0 0
      %866 = vmatprep.subr.bf16.mxu0 0
      %867 = vmatpush1.bf16.msra.mxu0 0
      %868 = vmatprep.subr.bf16.mxu0 0
      %869 = vmatpush1.bf16.msra.mxu0 %v811
      %870 = vmatprep.subr.bf16.mxu0 0
      %871 = vmatpush2.bf16.msra.mxu0 0
      %872 = vmatprep.subr.bf16.mxu0 0
      %873 = vmatpush2.bf16.msra.mxu0 0
      %874 = vmatprep.subr.bf16.mxu0 0
      %875 = vmatpush2.bf16.msra.mxu0 0
      %876 = vmatprep.subr.bf16.mxu0 0
      %877 = vmatpush2.bf16.msra.mxu0 0
      %878 = vmatprep.subr.bf16.mxu0 0
      %879 = vmatpush2.bf16.msra.mxu0 0
      %880 = vmatprep.subr.bf16.mxu0 0
      %881 = vmatpush2.bf16.msra.mxu0 0
      %882 = vmatprep.subr.bf16.mxu0 0
      %883 = vmatpush2.bf16.msra.mxu0 0
      %884 = vmatprep.subr.bf16.mxu0 0
      %885 = vmatpush2.bf16.msra.mxu0 0
      %886 = vmatprep.mubr.bf16.mxu0 0
      %887 = vmatmul.mubr.bf16.gmra.mxu0 %v802
      %v888 = vpop.f32.mrf.mxu0
      %v889 = vadd.f32 0.0, %v888
      %v890 = vpop.f32.mrf.mxu0
      %v891 = vpop.f32.mrf.mxu0
      %v892 = vpop.f32.mrf.mxu0
      %893 = vdwg.mxu0
      %v894 = vadd.f32 %v761, %v848
      %v895 = vadd.f32 %v762, %v850
      %v896 = vadd.f32 %v763, %v889
      %v897 = vld [vmem:[%s236] sm:$0xff]
      %v898 = vld [vmem:[%s240] sm:$0xf]
      %v900 = vunpack.c.l.b16 %v898
      %v901 = vpack.c.b16 %v900, %v900
      %902 = vrot.lane.b32.xlu0 %v901, 108
      %v903 = vpop.permute.xlu0 %902
      %v905 = vcombine.high %v897, %v897
      %v907 = vunpack.c.l.s4 1983009808
      %v908 = vunpack.c.0.s8 %v907
      %v909 = vlaneseq
      %v910 = vshrl.u32 %v909, 7
      %v911 = vsub.s32 %v908, %v910
      %v912 = vrot.slane %v897, %v911
      %v914 = vunpack.c.l.s4 1983009808
      %v915 = vunpack.c.0.s8 %v914
      %v916 = vlaneseq
      %v917 = vshrl.u32 %v916, 7
      %v918 = vsub.s32 %v915, %v917
      %v919 = vrot.slane %v905, %v918
      %v920 = vcombine.high %v912, %v912
      %v921 = vcombine.high %v919, %v919
      %922 = vrot.lane.b32.xlu0 %v912, 102
      %v923 = vpop.permute.xlu0 %922
      %924 = vrot.lane.b32.xlu0 %v920, 102
      %v925 = vpop.permute.xlu0 %924
      %926 = vrot.lane.b32.xlu0 %v919, 102
      %v927 = vpop.permute.xlu0 %926
      %928 = vrot.lane.b32.xlu0 %v921, 102
      %v929 = vpop.permute.xlu0 %928
      %vm930 = vcmask 834560
      %v931 = vsel %vm930, %v923, %v925
      %v932 = vsel %vm930, %v925, %v927
      %v933 = vsel %vm930, %v927, %v929
      %v935 = vsel %vm293, %v903, 0
      %v938 = vsel %vm297, %v931, 0
      %v941 = vsel %vm297, %v932, 0
      %v944 = vsel %vm297, %v933, 0
      %946 = vmatprep.subr.bf16.mxu0 0
      %947 = vmatpush1.bf16.msra.mxu0 0
      %948 = vmatprep.subr.bf16.mxu0 0
      %949 = vmatpush1.bf16.msra.mxu0 0
      %950 = vmatprep.subr.bf16.mxu0 0
      %951 = vmatpush1.bf16.msra.mxu0 0
      %952 = vmatprep.subr.bf16.mxu0 0
      %953 = vmatpush1.bf16.msra.mxu0 0
      %954 = vmatprep.subr.bf16.mxu0 0
      %955 = vmatpush1.bf16.msra.mxu0 0
      %956 = vmatprep.subr.bf16.mxu0 0
      %957 = vmatpush1.bf16.msra.mxu0 0
      %958 = vmatprep.subr.bf16.mxu0 0
      %959 = vmatpush1.bf16.msra.mxu0 0
      %960 = vmatprep.subr.bf16.mxu0 %v941
      %961 = vmatpush1.bf16.msra.mxu0 %v938
      %962 = vmatprep.subr.bf16.mxu0 0
      %963 = vmatpush2.bf16.msra.mxu0 0
      %964 = vmatprep.subr.bf16.mxu0 0
      %965 = vmatpush2.bf16.msra.mxu0 0
      %966 = vmatprep.subr.bf16.mxu0 0
      %967 = vmatpush2.bf16.msra.mxu0 0
      %968 = vmatprep.subr.bf16.mxu0 0
      %969 = vmatpush2.bf16.msra.mxu0 0
      %970 = vmatprep.subr.bf16.mxu0 0
      %971 = vmatpush2.bf16.msra.mxu0 0
      %972 = vmatprep.subr.bf16.mxu0 0
      %973 = vmatpush2.bf16.msra.mxu0 0
      %974 = vmatprep.subr.bf16.mxu0 0
      %975 = vmatpush2.bf16.msra.mxu0 0
      %976 = vmatprep.subr.bf16.mxu0 0
      %977 = vmatpush2.bf16.msra.mxu0 0
      %978 = vmatprep.mubr.bf16.mxu0 0
      %979 = vmatmul.mubr.bf16.gmra.mxu0 %v935
      %v980 = vpop.f32.mrf.mxu0
      %v981 = vadd.f32 0.0, %v980
      %v982 = vpop.f32.mrf.mxu0
      %v983 = vadd.f32 0.0, %v982
      %v984 = vpop.f32.mrf.mxu0
      %v985 = vpop.f32.mrf.mxu0
      %986 = vdwg.mxu0
      %987 = vmatprep.subr.bf16.mxu0 0
      %988 = vmatpush1.bf16.msra.mxu0 0
      %989 = vmatprep.subr.bf16.mxu0 0
      %990 = vmatpush1.bf16.msra.mxu0 0
      %991 = vmatprep.subr.bf16.mxu0 0
      %992 = vmatpush1.bf16.msra.mxu0 0
      %993 = vmatprep.subr.bf16.mxu0 0
      %994 = vmatpush1.bf16.msra.mxu0 0
      %995 = vmatprep.subr.bf16.mxu0 0
      %996 = vmatpush1.bf16.msra.mxu0 0
      %997 = vmatprep.subr.bf16.mxu0 0
      %998 = vmatpush1.bf16.msra.mxu0 0
      %999 = vmatprep.subr.bf16.mxu0 0
      %1000 = vmatpush1.bf16.msra.mxu0 0
      %1001 = vmatprep.subr.bf16.mxu0 0
      %1002 = vmatpush1.bf16.msra.mxu0 %v944
      %1003 = vmatprep.subr.bf16.mxu0 0
      %1004 = vmatpush2.bf16.msra.mxu0 0
      %1005 = vmatprep.subr.bf16.mxu0 0
      %1006 = vmatpush2.bf16.msra.mxu0 0
      %1007 = vmatprep.subr.bf16.mxu0 0
      %1008 = vmatpush2.bf16.msra.mxu0 0
      %1009 = vmatprep.subr.bf16.mxu0 0
      %1010 = vmatpush2.bf16.msra.mxu0 0
      %1011 = vmatprep.subr.bf16.mxu0 0
      %1012 = vmatpush2.bf16.msra.mxu0 0
      %1013 = vmatprep.subr.bf16.mxu0 0
      %1014 = vmatpush2.bf16.msra.mxu0 0
      %1015 = vmatprep.subr.bf16.mxu0 0
      %1016 = vmatpush2.bf16.msra.mxu0 0
      %1017 = vmatprep.subr.bf16.mxu0 0
      %1018 = vmatpush2.bf16.msra.mxu0 0
      %1019 = vmatprep.mubr.bf16.mxu0 0
      %1020 = vmatmul.mubr.bf16.gmra.mxu0 %v935
      %v1021 = vpop.f32.mrf.mxu0
      %v1022 = vadd.f32 0.0, %v1021
      %v1023 = vpop.f32.mrf.mxu0
      %v1024 = vpop.f32.mrf.mxu0
      %v1025 = vpop.f32.mrf.mxu0
      %1026 = vdwg.mxu0
      %v1027 = vadd.f32 %v894, %v981
      %v1028 = vadd.f32 %v895, %v983
      %v1029 = vadd.f32 %v896, %v1022
      %v1030 = vld [vmem:[%s236] sm:$0xff]
      %v1031 = vld [vmem:[%s240] sm:$0xf]
      %v1033 = vunpack.c.l.b16 %v1031
      %v1034 = vpack.c.b16 %v1033, %v1033
      %1035 = vrot.lane.b32.xlu0 %v1034, 104
      %v1036 = vpop.permute.xlu0 %1035
      %v1038 = vcombine.high %v1030, %v1030
      %v1040 = vunpack.c.l.s4 1983009808
      %v1041 = vunpack.c.0.s8 %v1040
      %v1042 = vlaneseq
      %v1043 = vshrl.u32 %v1042, 7
      %v1044 = vsub.s32 %v1041, %v1043
      %v1045 = vrot.slane %v1030, %v1044
      %v1047 = vunpack.c.l.s4 1983009808
      %v1048 = vunpack.c.0.s8 %v1047
      %v1049 = vlaneseq
      %v1050 = vshrl.u32 %v1049, 7
      %v1051 = vsub.s32 %v1048, %v1050
      %v1052 = vrot.slane %v1038, %v1051
      %v1053 = vcombine.high %v1045, %v1045
      %v1054 = vcombine.high %v1052, %v1052
      %1055 = vrot.lane.b32.xlu0 %v1045, 80
      %v1056 = vpop.permute.xlu0 %1055
      %1057 = vrot.lane.b32.xlu0 %v1053, 80
      %v1058 = vpop.permute.xlu0 %1057
      %1059 = vrot.lane.b32.xlu0 %v1052, 80
      %v1060 = vpop.permute.xlu0 %1059
      %1061 = vrot.lane.b32.xlu0 %v1054, 80
      %v1062 = vpop.permute.xlu0 %1061
      %vm1063 = vcmask 654336
      %v1064 = vsel %vm1063, %v1056, %v1058
      %v1065 = vsel %vm1063, %v1058, %v1060
      %v1066 = vsel %vm1063, %v1060, %v1062
      %v1068 = vsel %vm293, %v1036, 0
      %v1071 = vsel %vm297, %v1064, 0
      %v1074 = vsel %vm297, %v1065, 0
      %v1077 = vsel %vm297, %v1066, 0
      %1079 = vmatprep.subr.bf16.mxu0 0
      %1080 = vmatpush1.bf16.msra.mxu0 0
      %1081 = vmatprep.subr.bf16.mxu0 0
      %1082 = vmatpush1.bf16.msra.mxu0 0
      %1083 = vmatprep.subr.bf16.mxu0 0
      %1084 = vmatpush1.bf16.msra.mxu0 0
      %1085 = vmatprep.subr.bf16.mxu0 0
      %1086 = vmatpush1.bf16.msra.mxu0 0
      %1087 = vmatprep.subr.bf16.mxu0 0
      %1088 = vmatpush1.bf16.msra.mxu0 0
      %1089 = vmatprep.subr.bf16.mxu0 0
      %1090 = vmatpush1.bf16.msra.mxu0 0
      %1091 = vmatprep.subr.bf16.mxu0 0
      %1092 = vmatpush1.bf16.msra.mxu0 0
      %1093 = vmatprep.subr.bf16.mxu0 %v1074
      %1094 = vmatpush1.bf16.msra.mxu0 %v1071
      %1095 = vmatprep.subr.bf16.mxu0 0
      %1096 = vmatpush2.bf16.msra.mxu0 0
      %1097 = vmatprep.subr.bf16.mxu0 0
      %1098 = vmatpush2.bf16.msra.mxu0 0
      %1099 = vmatprep.subr.bf16.mxu0 0
      %1100 = vmatpush2.bf16.msra.mxu0 0
      %1101 = vmatprep.subr.bf16.mxu0 0
      %1102 = vmatpush2.bf16.msra.mxu0 0
      %1103 = vmatprep.subr.bf16.mxu0 0
      %1104 = vmatpush2.bf16.msra.mxu0 0
      %1105 = vmatprep.subr.bf16.mxu0 0
      %1106 = vmatpush2.bf16.msra.mxu0 0
      %1107 = vmatprep.subr.bf16.mxu0 0
      %1108 = vmatpush2.bf16.msra.mxu0 0
      %1109 = vmatprep.subr.bf16.mxu0 0
      %1110 = vmatpush2.bf16.msra.mxu0 0
      %1111 = vmatprep.mubr.bf16.mxu0 0
      %1112 = vmatmul.mubr.bf16.gmra.mxu0 %v1068
      %v1113 = vpop.f32.mrf.mxu0
      %v1114 = vadd.f32 0.0, %v1113
      %v1115 = vpop.f32.mrf.mxu0
      %v1116 = vadd.f32 0.0, %v1115
      %v1117 = vpop.f32.mrf.mxu0
      %v1118 = vpop.f32.mrf.mxu0
      %1119 = vdwg.mxu0
      %1120 = vmatprep.subr.bf16.mxu0 0
      %1121 = vmatpush1.bf16.msra.mxu0 0
      %1122 = vmatprep.subr.bf16.mxu0 0
      %1123 = vmatpush1.bf16.msra.mxu0 0
      %1124 = vmatprep.subr.bf16.mxu0 0
      %1125 = vmatpush1.bf16.msra.mxu0 0
      %1126 = vmatprep.subr.bf16.mxu0 0
      %1127 = vmatpush1.bf16.msra.mxu0 0
      %1128 = vmatprep.subr.bf16.mxu0 0
      %1129 = vmatpush1.bf16.msra.mxu0 0
      %1130 = vmatprep.subr.bf16.mxu0 0
      %1131 = vmatpush1.bf16.msra.mxu0 0
      %1132 = vmatprep.subr.bf16.mxu0 0
      %1133 = vmatpush1.bf16.msra.mxu0 0
      %1134 = vmatprep.subr.bf16.mxu0 0
      %1135 = vmatpush1.bf16.msra.mxu0 %v1077
      %1136 = vmatprep.subr.bf16.mxu0 0
      %1137 = vmatpush2.bf16.msra.mxu0 0
      %1138 = vmatprep.subr.bf16.mxu0 0
      %1139 = vmatpush2.bf16.msra.mxu0 0
      %1140 = vmatprep.subr.bf16.mxu0 0
      %1141 = vmatpush2.bf16.msra.mxu0 0
      %1142 = vmatprep.subr.bf16.mxu0 0
      %1143 = vmatpush2.bf16.msra.mxu0 0
      %1144 = vmatprep.subr.bf16.mxu0 0
      %1145 = vmatpush2.bf16.msra.mxu0 0
      %1146 = vmatprep.subr.bf16.mxu0 0
      %1147 = vmatpush2.bf16.msra.mxu0 0
      %1148 = vmatprep.subr.bf16.mxu0 0
      %1149 = vmatpush2.bf16.msra.mxu0 0
      %1150 = vmatprep.subr.bf16.mxu0 0
      %1151 = vmatpush2.bf16.msra.mxu0 0
      %1152 = vmatprep.mubr.bf16.mxu0 0
      %1153 = vmatmul.mubr.bf16.gmra.mxu0 %v1068
      %v1154 = vpop.f32.mrf.mxu0
      %v1155 = vadd.f32 0.0, %v1154
      %v1156 = vpop.f32.mrf.mxu0
      %v1157 = vpop.f32.mrf.mxu0
      %v1158 = vpop.f32.mrf.mxu0
      %1159 = vdwg.mxu0
      %v1160 = vadd.f32 %v1027, %v1114
      %v1161 = vadd.f32 %v1028, %v1116
      %v1162 = vadd.f32 %v1029, %v1155
      %v1163 = vld [vmem:[%s236] sm:$0xff]
      %v1164 = vld [vmem:[%s240] sm:$0xf]
      %v1166 = vunpack.c.l.b16 %v1164
      %v1167 = vpack.c.b16 %v1166, %v1166
      %1168 = vrot.lane.b32.xlu0 %v1167, 100
      %v1169 = vpop.permute.xlu0 %1168
      %v1171 = vcombine.high %v1163, %v1163
      %v1173 = vunpack.c.l.s4 1983009808
      %v1174 = vunpack.c.0.s8 %v1173
      %v1175 = vlaneseq
      %v1176 = vshrl.u32 %v1175, 7
      %v1177 = vsub.s32 %v1174, %v1176
      %v1178 = vrot.slane %v1163, %v1177
      %v1180 = vunpack.c.l.s4 1983009808
      %v1181 = vunpack.c.0.s8 %v1180
      %v1182 = vlaneseq
      %v1183 = vshrl.u32 %v1182, 7
      %v1184 = vsub.s32 %v1181, %v1183
      %v1185 = vrot.slane %v1171, %v1184
      %v1186 = vcombine.high %v1178, %v1178
      %v1187 = vcombine.high %v1185, %v1185
      %1188 = vrot.lane.b32.xlu0 %v1178, 79
      %v1189 = vpop.permute.xlu0 %1188
      %1190 = vrot.lane.b32.xlu0 %v1186, 79
      %v1191 = vpop.permute.xlu0 %1190
      %1192 = vrot.lane.b32.xlu0 %v1185, 79
      %v1193 = vpop.permute.xlu0 %1192
      %1194 = vrot.lane.b32.xlu0 %v1187, 79
      %v1195 = vpop.permute.xlu0 %1194
      %vm1196 = vcmask 646144
      %v1197 = vsel %vm1196, %v1189, %v1191
      %v1198 = vsel %vm1196, %v1191, %v1193
      %v1199 = vsel %vm1196, %v1193, %v1195
      %v1201 = vsel %vm293, %v1169, 0
      %v1204 = vsel %vm297, %v1197, 0
      %v1207 = vsel %vm297, %v1198, 0
      %v1210 = vsel %vm297, %v1199, 0
      %1212 = vmatprep.subr.bf16.mxu0 0
      %1213 = vmatpush1.bf16.msra.mxu0 0
      %1214 = vmatprep.subr.bf16.mxu0 0
      %1215 = vmatpush1.bf16.msra.mxu0 0
      %1216 = vmatprep.subr.bf16.mxu0 0
      %1217 = vmatpush1.bf16.msra.mxu0 0
      %1218 = vmatprep.subr.bf16.mxu0 0
      %1219 = vmatpush1.bf16.msra.mxu0 0
      %1220 = vmatprep.subr.bf16.mxu0 0
      %1221 = vmatpush1.bf16.msra.mxu0 0
      %1222 = vmatprep.subr.bf16.mxu0 0
      %1223 = vmatpush1.bf16.msra.mxu0 0
      %1224 = vmatprep.subr.bf16.mxu0 0
      %1225 = vmatpush1.bf16.msra.mxu0 0
      %1226 = vmatprep.subr.bf16.mxu0 %v1207
      %1227 = vmatpush1.bf16.msra.mxu0 %v1204
      %1228 = vmatprep.subr.bf16.mxu0 0
      %1229 = vmatpush2.bf16.msra.mxu0 0
      %1230 = vmatprep.subr.bf16.mxu0 0
      %1231 = vmatpush2.bf16.msra.mxu0 0
      %1232 = vmatprep.subr.bf16.mxu0 0
      %1233 = vmatpush2.bf16.msra.mxu0 0
      %1234 = vmatprep.subr.bf16.mxu0 0
      %1235 = vmatpush2.bf16.msra.mxu0 0
      %1236 = vmatprep.subr.bf16.mxu0 0
      %1237 = vmatpush2.bf16.msra.mxu0 0
      %1238 = vmatprep.subr.bf16.mxu0 0
      %1239 = vmatpush2.bf16.msra.mxu0 0
      %1240 = vmatprep.subr.bf16.mxu0 0
      %1241 = vmatpush2.bf16.msra.mxu0 0
      %1242 = vmatprep.subr.bf16.mxu0 0
      %1243 = vmatpush2.bf16.msra.mxu0 0
      %1244 = vmatprep.mubr.bf16.mxu0 0
      %1245 = vmatmul.mubr.bf16.gmra.mxu0 %v1201
      %v1246 = vpop.f32.mrf.mxu0
      %v1247 = vadd.f32 0.0, %v1246
      %v1248 = vpop.f32.mrf.mxu0
      %v1249 = vadd.f32 0.0, %v1248
      %v1250 = vpop.f32.mrf.mxu0
      %v1251 = vpop.f32.mrf.mxu0
      %1252 = vdwg.mxu0
      %1253 = vmatprep.subr.bf16.mxu0 0
      %1254 = vmatpush1.bf16.msra.mxu0 0
      %1255 = vmatprep.subr.bf16.mxu0 0
      %1256 = vmatpush1.bf16.msra.mxu0 0
      %1257 = vmatprep.subr.bf16.mxu0 0
      %1258 = vmatpush1.bf16.msra.mxu0 0
      %1259 = vmatprep.subr.bf16.mxu0 0
      %1260 = vmatpush1.bf16.msra.mxu0 0
      %1261 = vmatprep.subr.bf16.mxu0 0
      %1262 = vmatpush1.bf16.msra.mxu0 0
      %1263 = vmatprep.subr.bf16.mxu0 0
      %1264 = vmatpush1.bf16.msra.mxu0 0
      %1265 = vmatprep.subr.bf16.mxu0 0
      %1266 = vmatpush1.bf16.msra.mxu0 0
      %1267 = vmatprep.subr.bf16.mxu0 0
      %1268 = vmatpush1.bf16.msra.mxu0 %v1210
      %1269 = vmatprep.subr.bf16.mxu0 0
      %1270 = vmatpush2.bf16.msra.mxu0 0
      %1271 = vmatprep.subr.bf16.mxu0 0
      %1272 = vmatpush2.bf16.msra.mxu0 0
      %1273 = vmatprep.subr.bf16.mxu0 0
      %1274 = vmatpush2.bf16.msra.mxu0 0
      %1275 = vmatprep.subr.bf16.mxu0 0
      %1276 = vmatpush2.bf16.msra.mxu0 0
      %1277 = vmatprep.subr.bf16.mxu0 0
      %1278 = vmatpush2.bf16.msra.mxu0 0
      %1279 = vmatprep.subr.bf16.mxu0 0
      %1280 = vmatpush2.bf16.msra.mxu0 0
      %1281 = vmatprep.subr.bf16.mxu0 0
      %1282 = vmatpush2.bf16.msra.mxu0 0
      %1283 = vmatprep.subr.bf16.mxu0 0
      %1284 = vmatpush2.bf16.msra.mxu0 0
      %1285 = vmatprep.mubr.bf16.mxu0 0
      %1286 = vmatmul.mubr.bf16.gmra.mxu0 %v1201
      %v1287 = vpop.f32.mrf.mxu0
      %v1288 = vadd.f32 0.0, %v1287
      %v1289 = vpop.f32.mrf.mxu0
      %v1290 = vpop.f32.mrf.mxu0
      %v1291 = vpop.f32.mrf.mxu0
      %1292 = vdwg.mxu0
      %v1293 = vadd.f32 %v1160, %v1247
      %v1294 = vadd.f32 %v1161, %v1249
      %v1295 = vadd.f32 %v1162, %v1288
      %v1296 = vld [vmem:[%s236] sm:$0xff]
      %v1297 = vld [vmem:[%s240] sm:$0xf]
      %v1299 = vunpack.c.l.b16 %v1297
      %v1300 = vpack.c.b16 %v1299, %v1299
      %1301 = vrot.lane.b32.xlu0 %v1300, 96
      %v1302 = vpop.permute.xlu0 %1301
      %v1304 = vcombine.high %v1296, %v1296
      %v1306 = vunpack.c.l.s4 1983009808
      %v1307 = vunpack.c.0.s8 %v1306
      %v1308 = vlaneseq
      %v1309 = vshrl.u32 %v1308, 7
      %v1310 = vsub.s32 %v1307, %v1309
      %v1311 = vrot.slane %v1296, %v1310
      %v1313 = vunpack.c.l.s4 1983009808
      %v1314 = vunpack.c.0.s8 %v1313
      %v1315 = vlaneseq
      %v1316 = vshrl.u32 %v1315, 7
      %v1317 = vsub.s32 %v1314, %v1316
      %v1318 = vrot.slane %v1304, %v1317
      %v1319 = vcombine.high %v1311, %v1311
      %v1320 = vcombine.high %v1318, %v1318
      %1321 = vrot.lane.b32.xlu0 %v1311, 78
      %v1322 = vpop.permute.xlu0 %1321
      %1323 = vrot.lane.b32.xlu0 %v1319, 78
      %v1324 = vpop.permute.xlu0 %1323
      %1325 = vrot.lane.b32.xlu0 %v1318, 78
      %v1326 = vpop.permute.xlu0 %1325
      %1327 = vrot.lane.b32.xlu0 %v1320, 78
      %v1328 = vpop.permute.xlu0 %1327
      %vm1329 = vcmask 637952
      %v1330 = vsel %vm1329, %v1322, %v1324
      %v1331 = vsel %vm1329, %v1324, %v1326
      %v1332 = vsel %vm1329, %v1326, %v1328
      %v1334 = vsel %vm293, %v1302, 0
      %v1337 = vsel %vm297, %v1330, 0
      %v1340 = vsel %vm297, %v1331, 0
      %v1343 = vsel %vm297, %v1332, 0
      %1345 = vmatprep.subr.bf16.mxu0 0
      %1346 = vmatpush1.bf16.msra.mxu0 0
      %1347 = vmatprep.subr.bf16.mxu0 0
      %1348 = vmatpush1.bf16.msra.mxu0 0
      %1349 = vmatprep.subr.bf16.mxu0 0
      %1350 = vmatpush1.bf16.msra.mxu0 0
      %1351 = vmatprep.subr.bf16.mxu0 0
      %1352 = vmatpush1.bf16.msra.mxu0 0
      %1353 = vmatprep.subr.bf16.mxu0 0
      %1354 = vmatpush1.bf16.msra.mxu0 0
      %1355 = vmatprep.subr.bf16.mxu0 0
      %1356 = vmatpush1.bf16.msra.mxu0 0
      %1357 = vmatprep.subr.bf16.mxu0 0
      %1358 = vmatpush1.bf16.msra.mxu0 0
      %1359 = vmatprep.subr.bf16.mxu0 %v1340
      %1360 = vmatpush1.bf16.msra.mxu0 %v1337
      %1361 = vmatprep.subr.bf16.mxu0 0
      %1362 = vmatpush2.bf16.msra.mxu0 0
      %1363 = vmatprep.subr.bf16.mxu0 0
      %1364 = vmatpush2.bf16.msra.mxu0 0
      %1365 = vmatprep.subr.bf16.mxu0 0
      %1366 = vmatpush2.bf16.msra.mxu0 0
      %1367 = vmatprep.subr.bf16.mxu0 0
      %1368 = vmatpush2.bf16.msra.mxu0 0
      %1369 = vmatprep.subr.bf16.mxu0 0
      %1370 = vmatpush2.bf16.msra.mxu0 0
      %1371 = vmatprep.subr.bf16.mxu0 0
      %1372 = vmatpush2.bf16.msra.mxu0 0
      %1373 = vmatprep.subr.bf16.mxu0 0
      %1374 = vmatpush2.bf16.msra.mxu0 0
      %1375 = vmatprep.subr.bf16.mxu0 0
      %1376 = vmatpush2.bf16.msra.mxu0 0
      %1377 = vmatprep.mubr.bf16.mxu0 0
      %1378 = vmatmul.mubr.bf16.gmra.mxu0 %v1334
      %v1379 = vpop.f32.mrf.mxu0
      %v1380 = vadd.f32 0.0, %v1379
      %v1381 = vpop.f32.mrf.mxu0
      %v1382 = vadd.f32 0.0, %v1381
      %v1383 = vpop.f32.mrf.mxu0
      %v1384 = vpop.f32.mrf.mxu0
      %1385 = vdwg.mxu0
      %1386 = vmatprep.subr.bf16.mxu0 0
      %1387 = vmatpush1.bf16.msra.mxu0 0
      %1388 = vmatprep.subr.bf16.mxu0 0
      %1389 = vmatpush1.bf16.msra.mxu0 0
      %1390 = vmatprep.subr.bf16.mxu0 0
      %1391 = vmatpush1.bf16.msra.mxu0 0
      %1392 = vmatprep.subr.bf16.mxu0 0
      %1393 = vmatpush1.bf16.msra.mxu0 0
      %1394 = vmatprep.subr.bf16.mxu0 0
      %1395 = vmatpush1.bf16.msra.mxu0 0
      %1396 = vmatprep.subr.bf16.mxu0 0
      %1397 = vmatpush1.bf16.msra.mxu0 0
      %1398 = vmatprep.subr.bf16.mxu0 0
      %1399 = vmatpush1.bf16.msra.mxu0 0
      %1400 = vmatprep.subr.bf16.mxu0 0
      %1401 = vmatpush1.bf16.msra.mxu0 %v1343
      %1402 = vmatprep.subr.bf16.mxu0 0
      %1403 = vmatpush2.bf16.msra.mxu0 0
      %1404 = vmatprep.subr.bf16.mxu0 0
      %1405 = vmatpush2.bf16.msra.mxu0 0
      %1406 = vmatprep.subr.bf16.mxu0 0
      %1407 = vmatpush2.bf16.msra.mxu0 0
      %1408 = vmatprep.subr.bf16.mxu0 0
      %1409 = vmatpush2.bf16.msra.mxu0 0
      %1410 = vmatprep.subr.bf16.mxu0 0
      %1411 = vmatpush2.bf16.msra.mxu0 0
      %1412 = vmatprep.subr.bf16.mxu0 0
      %1413 = vmatpush2.bf16.msra.mxu0 0
      %1414 = vmatprep.subr.bf16.mxu0 0
      %1415 = vmatpush2.bf16.msra.mxu0 0
      %1416 = vmatprep.subr.bf16.mxu0 0
      %1417 = vmatpush2.bf16.msra.mxu0 0
      %1418 = vmatprep.mubr.bf16.mxu0 0
      %1419 = vmatmul.mubr.bf16.gmra.mxu0 %v1334
      %v1420 = vpop.f32.mrf.mxu0
      %v1421 = vadd.f32 0.0, %v1420
      %v1422 = vpop.f32.mrf.mxu0
      %v1423 = vpop.f32.mrf.mxu0
      %v1424 = vpop.f32.mrf.mxu0
      %1425 = vdwg.mxu0
      %v1426 = vadd.f32 %v1293, %v1380
      %v1427 = vadd.f32 %v1294, %v1382
      %v1428 = vadd.f32 %v1295, %v1421
      %v1429 = vld [vmem:[%s244] sm:$0xff]
      %1431 = vset.pattern.permute.xlu0 0
      %1432 = vperm.xlu0 %1431, %v1429
      %v1433 = vpop.permute.xlu0 %1432
      %v1435 = vadd.f32 %v1426, %v1433
      %v1436 = vadd.f32 %v1427, %v1433
      %v1437 = vadd.f32 %v1428, %v1433
      %v1438 = vmax.f32 %v1435, 0.0
      %v1439 = vmax.f32 %v1436, 0.0
      %v1440 = vmax.f32 %v1437, 0.0
      %v1441 = vld [vmem:[%s3] sm:$0x7]
      %v1443 = vlaneseq
      %v1444 = vshrl.u32 %v1443, 7
      %v1445 = vsub.s32 0, %v1444
      %v1446 = vrot.slane %v1441, %v1445
      %v1447 = vlaneseq
      %v1448 = vshrl.u32 %v1447, 7
      %v1449 = vsub.s32 1, %v1448
      %v1450 = vrot.slane %v1441, %v1449
      %v1451 = vlaneseq
      %v1452 = vshrl.u32 %v1451, 7
      %v1453 = vsub.s32 2, %v1452
      %v1454 = vrot.slane %v1441, %v1453
      %v1458 = vmul.f32 %v1438, %v1446
      %v1459 = vmul.f32 %v1439, %v1450
      %v1460 = vmul.f32 %v1440, %v1454
      %vm1461 = vcmask 199680
      %1462 = vst.msk [vmem:[%s253] sm:$0xf] %vm1461, 0
      %v1463 = vpack.c.bf16 %v1458, %v1458
      %v1464 = vpack.c.bf16 %v1459, %v1459
      %v1465 = vpack.c.bf16 %v1460, %v1460
      %v1469 = vunpack.c.l.b16 %v1463
      %v1470 = vunpack.c.l.b16 %v1464
      %v1471 = vunpack.c.l.b16 %v1465
      %v1472 = vpack.c.b16 %v1470, %v1469
      %v1473 = vpack.c.b16 %v1471, %v1471
      %1474 = vrot.lane.b32.xlu0 %v1472, 25
      %v1475 = vpop.permute.xlu0 %1474
      %1476 = vrot.lane.b32.xlu0 %v1473, 25
      %v1477 = vpop.permute.xlu0 %1476
      %v1478 = vrot.slane %v1475, 4
      %v1479 = vrot.slane %v1477, 4
      %vm1480 = vcmask 203776
      %v1481 = vsel %vm1480, %v1478, %v1475
      %vm1482 = vcmask 1043456
      %v1483 = vsel %vm1482, %v1478, %v1479
      %v1484 = vsel %vm1480, %v1483, %v1477
      %vm1487 = vcmask 1043656
      %vm1488 = vcmask 1047556
      %vm1489 = vmor %vm1488, %vm1487
      %1490 = vst.msk [vmem:[%s253] sm:$0xff] %vm1489, %v1481
      %vm1491 = vcmask 1043456
      %vm1492 = vcmask 203780
      %vm1493 = vmor %vm1492, %vm1491
      %1494 = vst.msk [vmem:[%s253 + $0x8] sm:$0xff] %vm1493, %v1484
      %vm1495 = vcmask 584904
      %1496 = vst.msk [vmem:[%s253 + $0xc] sm:$0xf] %vm1495, 0
      %p1497 = scmp.lt.s32.totalorder %s19, 1
      %s1498 = scalar_select %p1497, %s19, 1
      %p1499 = scmp.lt.s32.totalorder %s20, 0
      %s1500 = scalar_select %p1499, %s20, 0
      %s1501 = smul.addr %s1500, 4
      %s1502 = smul.addr %s1498, 4
      %s1503 = sadd.s32 %s1501, %s1502
      %s1504 = smul.addr %s1503, 4
      %s1505 = scalar_lea.vmem %s4, %s1504
      // Predicated region
      $region37: #{rep_block_forward.2} parent=35 // pred_check
        %p1506 = pneg %p146
      $region38: #{rep_block_forward.2} parent=35 // pred_check_branch
        %1508 = sbr.rel (%p1506) target = $region40
      $region39: #{rep_block_forward.2} parent=35 // pred_region
        _
      $region40: #{rep_block_forward.2} parent=35 // pred_fallthru
        _
    $region36: #{rep_block_forward.2} parent=5 // pred_fallthru
      _
    %p1509 = scmp.le.s32.totalorder 2, %s10
    // Predicated region
    $region41: #{rep_block_forward.2} parent=5 // pred_check
      %p1510 = pneg %p1509
    $region42: #{rep_block_forward.2} parent=5 // pred_check_branch
      %1512 = sbr.rel (%p1510) target = $region44
    $region43: #{rep_block_forward.2} parent=5 // pred_region
      %s1513 = ssub.s32 %s10, 2
      // Predicated region
      $region45: #{rep_block_forward.2} parent=43 // pred_check
        %p1514 = pneg %p152
      $region46: #{rep_block_forward.2} parent=43 // pred_check_branch
        %1516 = sbr.rel (%p1514) target = $region48
      $region47: #{rep_block_forward.2} parent=43 // pred_region
        %p1517 = scmp.lt.s32.totalorder %s21, 1
        %s1518 = scalar_select %p1517, %s21, 1
        %p1519 = scmp.lt.s32.totalorder %s22, 0
        %s1520 = scalar_select %p1519, %s22, 0
        %s1521 = smul.addr %s1520, 4
        %s1522 = smul.addr %s1518, 4
        %s1523 = sadd.s32 %s1521, %s1522
        %s1524 = smul.addr %s1523, 4
        %s1525 = scalar_lea.vmem %s4, %s1524
      $region48: #{rep_block_forward.2} parent=43 // pred_fallthru
        _
    $region44: #{rep_block_forward.2} parent=5 // pred_fallthru
      _
  $region6: #{rep_block_forward.2} parent=0 // loop_footer
    %s14 = sadd.s32 1, %s10
  $region7: #{rep_block_forward.2} parent=0 // loop_footer_branch
    %9 = sbr.rel target = $region3
  $region8: #{rep_block_forward.2} parent=0 // loop_exit
    _

</llo_original>
